<compile_context>
chip_gen: v7x
topology: tpu7x:2x2x1
jax: 0.10.0
libtpu: 0.0.40
codegen_flags: <defaults>
</compile_context>

<pallas_src>
import functools

import jax
import jax.numpy as jnp
from jax.experimental import pallas as pl
from jax.experimental.pallas import tpu as pltpu

_COMPUTE_DTYPE = jnp.bfloat16
_BN_EPS = 1e-5


# ---------------------------------------------------------------------------
# Fused Pallas kernel: upconv + BN + ReLU -> concat -> conv1 -> conv2 (per image)
# ---------------------------------------------------------------------------
def _upblock_kernel(zp_ref, down_ref, wt_ref, w1a_ref, w1b_ref, w2_ref,
                    sb_ref, mask_ref, o_ref,
                    u_buf, d_buf, y1_buf,
                    *, Wp, H2, W2, G, L):
    # zp_ref  : (Cin,  Lext)  zero-inserted, frame-padded, guard-extended upconv input
    # down_ref: (Cout, H2*W2) skip features, row-major flattened
    # w*_ref  : (9, Cout, Cin_of_conv) per-tap weights, tap t = dy*3 + dx
    # sb_ref  : (Cout, 6) folded BN [scale_t, bias_t, scale_1, bias_1, scale_2, bias_2]
    # mask_ref: (1, L) 1.0 on interior frame positions, 0.0 on the 1-pixel border
    # o_ref   : (Cout, H2*W2) final output (lane-dense)
    # u_buf, d_buf, y1_buf: (Cout, Lext) VMEM frames for the intermediates
    Cout = o_ref.shape[0]

    # Guard zones and frame borders must read as zeros.  Re-zero every grid step (a few
    # KB of vector stores) so this is correct even when the batch axis is sharded across
    # TensorCores ("parallel").
    u_buf[...] = jnp.zeros_like(u_buf)
    d_buf[...] = jnp.zeros_like(d_buf)
    y1_buf[...] = jnp.zeros_like(y1_buf)

    mask = mask_ref[...]                                    # (1, L) f32

    def conv3x3(pairs, scale, bias):
        # pairs: [(activation ref (C, Lext), weight ref (9, Cout, C)), ...]
        acc = jnp.zeros((Cout, L), jnp.float32)
        for t in range(9):
            dy, dx = divmod(t, 3)
            shift = (dy - 1) * Wp + (dx - 1)                # static lane offset
            for a_ref, w_ref in pairs:
                xs = a_ref[:, pl.ds(G + shift, L)]          # (C, L) lane-dense slice
                acc = acc + jnp.dot(w_ref[t], xs,
                                    preferred_element_type=jnp.float32)
        # folded BN + ReLU once per conv; mask re-zeroes the frame border so it acts as
        # the next conv's zero padding.
        return jnp.maximum(acc * scale + bias, 0.0) * mask

    # --- stage 1: ConvTranspose2d(s=2) + BN + ReLU (conv over zero-inserted input) -----
    u = conv3x3([(zp_ref, wt_ref)], sb_ref[:, 0:1], sb_ref[:, 1:2])
    u_buf[:, pl.ds(G, L)] = u.astype(u_buf.dtype)

    # --- fused torch.cat([u, down], dim=1): place skip features in their own frame -----
    for r in range(H2):
        d_buf[:, pl.ds(G + (1 + r) * Wp + 1, W2)] = (
            down_ref[:, pl.ds(r * W2, W2)].astype(d_buf.dtype))

    # --- stage 2: Conv2d(2*out_ch -> out_ch) + BN + ReLU, two matmul halves per tap ----
    y1 = conv3x3([(u_buf, w1a_ref), (d_buf, w1b_ref)], sb_ref[:, 2:3], sb_ref[:, 3:4])
    y1_buf[:, pl.ds(G, L)] = y1.astype(y1_buf.dtype)

    # --- stage 3: Conv2d(out_ch -> out_ch) + BN + ReLU; write interior lane-dense ------
    y2 = conv3x3([(y1_buf, w2_ref)], sb_ref[:, 4:5], sb_ref[:, 5:6])
    for r in range(H2):
        src = (1 + r) * Wp + 1
        o_ref[:, pl.ds(r * W2, W2)] = y2[:, src:src + W2].astype(o_ref.dtype)


# ---------------------------------------------------------------------------
# Parameter rewrite: PyTorch layout -> tap-major kernel layout + folded BN
# ---------------------------------------------------------------------------
def prepare_kernel_params(p):
    in_ch, out_ch = p["wt"].shape[0], p["wt"].shape[1]

    def fold(conv_bias, bn):
        gamma, beta, mean, var = bn
        scale = gamma / jnp.sqrt(var + _BN_EPS)
        return scale, beta + scale * (conv_bias - mean)

    # ConvTranspose2d(k=3,s=2,p=1,out_pad=1) == 3x3 conv over the zero-inserted,
    # (1,2)/(1,2)-padded input with the spatially flipped kernel (channel axes swapped).
    wc = jnp.flip(p["wt"], axis=(2, 3))                                   # (Ci, Co, 3, 3)
    wt9 = wc.transpose(2, 3, 1, 0).reshape(9, out_ch, in_ch)              # (9, Co, Ci)

    w1a9 = p["w1"][:, :out_ch].transpose(2, 3, 0, 1).reshape(9, out_ch, out_ch)
    w1b9 = p["w1"][:, out_ch:].transpose(2, 3, 0, 1).reshape(9, out_ch, out_ch)
    w29 = p["w2"].transpose(2, 3, 0, 1).reshape(9, out_ch, out_ch)

    st, bt = fold(p["bt"], p["bn_t"])
    s1, b1 = fold(p["b1"], p["bn1"])
    s2, b2 = fold(p["b2"], p["bn2"])
    sb = jnp.stack([st, bt, s1, b1, s2, b2], axis=1).astype(jnp.float32)  # (Co, 6)
    return dict(wt9=wt9, w1a9=w1a9, w1b9=w1b9, w29=w29, sb=sb)


# ---------------------------------------------------------------------------
# Forward wrapper (NCHW, matching the PyTorch module interface)
# ---------------------------------------------------------------------------
@jax.jit
def upblock2d_forward(x, down_features, raw_params):
    """x: (N, in_ch, H, W), down_features: (N, out_ch, 2H, 2W), both NCHW."""
    N, Cin, H, W = x.shape
    Cout = down_features.shape[1]
    H2, W2 = 2 * H, 2 * W
    Hp, Wp = H2 + 2, W2 + 2
    L = Hp * Wp                  # flattened padded frame (lane axis inside the kernel)
    G = Wp + 1                   # guard so every tap shift stays in bounds
    Lext = L + 2 * G

    kp = prepare_kernel_params(raw_params)
    cdt = _COMPUTE_DTYPE

    # Zero-inserted (stride-2) + padded upconv input, flattened into the frame layout:
    # zp[2i+1, 2j+1] = x[i, j], zeros elsewhere; frame shape (Hp, Wp) = (2H+2, 2W+2).
    xe = x.astype(cdt)[:, :, :, None, :, None]                            # (N,Ci,H,1,W,1)
    z2 = jnp.pad(xe, ((0, 0), (0, 0), (0, 0), (0, 1), (0, 0), (0, 1)))
    z2 = z2.reshape(N, Cin, H2, W2)
    zp = jnp.pad(z2, ((0, 0), (0, 0), (1, 1), (1, 1)))                    # (N,Ci,Hp,Wp)
    zp_ext = jnp.pad(zp.reshape(N, Cin, L), ((0, 0), (0, 0), (G, G)))     # (N,Ci,Lext)

    down_flat = down_features.astype(cdt).reshape(N, Cout, H2 * W2)

    # 1.0 on interior frame positions, 0.0 on the 1-pixel border.
    rows_ok = (jnp.arange(Hp) >= 1) & (jnp.arange(Hp) <= H2)
    cols_ok = (jnp.arange(Wp) >= 1) & (jnp.arange(Wp) <= W2)
    mask = (rows_ok[:, None] & cols_ok[None, :]).astype(jnp.float32).reshape(1, L)

    kernel = functools.partial(_upblock_kernel, Wp=Wp, H2=H2, W2=W2, G=G, L=L)

    out_flat = pl.pallas_call(
        kernel,
        out_shape=jax.ShapeDtypeStruct((N, Cout, H2 * W2), jnp.float32),
        grid_spec=pltpu.PrefetchScalarGridSpec(
            num_scalar_prefetch=0,
            grid=(N,),
            in_specs=[
                pl.BlockSpec((None, Cin, Lext), lambda n: (n, 0, 0)),
                pl.BlockSpec((None, Cout, H2 * W2), lambda n: (n, 0, 0)),
                pl.BlockSpec((9, Cout, Cin), lambda n: (0, 0, 0)),
                pl.BlockSpec((9, Cout, Cout), lambda n: (0, 0, 0)),
                pl.BlockSpec((9, Cout, Cout), lambda n: (0, 0, 0)),
                pl.BlockSpec((9, Cout, Cout), lambda n: (0, 0, 0)),
                pl.BlockSpec((Cout, 6), lambda n: (0, 0)),
                pl.BlockSpec((1, L), lambda n: (0, 0)),
            ],
            out_specs=pl.BlockSpec((None, Cout, H2 * W2), lambda n: (n, 0, 0)),
            scratch_shapes=[pltpu.VMEM((Cout, Lext), cdt)] * 3,
        ),
        compiler_params=pltpu.CompilerParams(
            dimension_semantics=("parallel",)),   # v7x: shard batch across TensorCores
    )(zp_ext, down_flat,
      kp["wt9"].astype(cdt), kp["w1a9"].astype(cdt),
      kp["w1b9"].astype(cdt), kp["w29"].astype(cdt),
      kp["sb"], mask)

    return out_flat.reshape(N, Cout, H2, W2)


# ---------------------------------------------------------------------------
# Pure-JAX reference, implementing the PyTorch module directly (scatter-form
# ConvTranspose2d, explicit inference-mode BatchNorm, explicit concat) so it
# independently validates the transposed-conv rewrite and the BN folding.
# bf16 quantization is mirrored at the same points as the kernel.
# ---------------------------------------------------------------------------
def upblock2d_reference(x, down_features, p):
    f32 = jnp.float32
    q = lambda a: a.astype(_COMPUTE_DTYPE).astype(f32)

    def bn(t, bn_p):
        gamma, beta, mean, var = bn_p
        inv = gamma / jnp.sqrt(var + _BN_EPS)
        return ((t - mean[None, :, None, None]) * inv[None, :, None, None]
                + beta[None, :, None, None])

    def conv_transpose(xq, wq, b):
        # PyTorch ConvTranspose2d(k=3, s=2, p=1, output_padding=1), scatter form.
        n, ci, h, w = xq.shape
        co = wq.shape[1]
        ho, wo = 2 * h, 2 * w
        canvas = jnp.zeros((n, co, ho + 2, wo + 2), f32)
        for ky in range(3):
            for kx in range(3):
                contrib = jnp.einsum("nchw,cd->ndhw", xq, wq[:, :, ky, kx])
                canvas = canvas.at[:, :, ky:ky + ho:2, kx:kx + wo:2].add(contrib)
        return canvas[:, :, 1:1 + ho, 1:1 + wo] + b[None, :, None, None]

    def conv3x3_same(xq, wq, b):
        n, ci, h, w = xq.shape
        xp = jnp.pad(xq, ((0, 0), (0, 0), (1, 1), (1, 1)))
        acc = jnp.broadcast_to(b[None, :, None, None], (n, wq.shape[0], h, w))
        for ky in range(3):
            for kx in range(3):
                acc = acc + jnp.einsum("nchw,oc->nohw",
                                       xp[:, :, ky:ky + h, kx:kx + w], wq[:, :, ky, kx])
        return acc

    u = jnp.maximum(bn(conv_transpose(q(x), q(p["wt"]), p["bt"]), p["bn_t"]), 0.0)
    u = q(u)                                        # kernel stores u in bf16 VMEM
    c = jnp.concatenate([u, q(down_features)], axis=1)
    y1 = jnp.maximum(bn(conv3x3_same(c, q(p["w1"]), p["b1"]), p["bn1"]), 0.0)
    y1 = q(y1)                                      # kernel stores y1 in bf16 VMEM
    y2 = jnp.maximum(bn(conv3x3_same(y1, q(p["w2"]), p["b2"]), p["bn2"]), 0.0)
    return y2


# ---------------------------------------------------------------------------
# Deterministic raw parameters in PyTorch layout
# ---------------------------------------------------------------------------
def init_params(key, in_ch, out_ch):
    def bn_params(k, c):
        k1, k2, k3, k4 = jax.random.split(k, 4)
        gamma = 1.0 + 0.1 * jax.random.normal(k1, (c,), jnp.float32)
        beta = 0.1 * jax.random.normal(k2, (c,), jnp.float32)
        mean = 0.1 * jax.random.normal(k3, (c,), jnp.float32)
        var = jax.random.uniform(k4, (c,), jnp.float32, 0.5, 1.5)
        return (gamma, beta, mean, var)

    ks = jax.random.split(key, 9)
    wt = 0.15 * jax.random.normal(ks[0], (in_ch, out_ch, 3, 3), jnp.float32)
    bt = 0.1 * jax.random.normal(ks[1], (out_ch,), jnp.float32)
    w1 = 0.15 * jax.random.normal(ks[2], (out_ch, 2 * out_ch, 3, 3), jnp.float32)
    b1 = 0.1 * jax.random.normal(ks[3], (out_ch,), jnp.float32)
    w2 = 0.15 * jax.random.normal(ks[4], (out_ch, out_ch, 3, 3), jnp.float32)
    b2 = 0.1 * jax.random.normal(ks[5], (out_ch,), jnp.float32)
    return dict(wt=wt, bt=bt, bn_t=bn_params(ks[6], out_ch),
                w1=w1, b1=b1, bn1=bn_params(ks[7], out_ch),
                w2=w2, b2=b2, bn2=bn_params(ks[8], out_ch))


# ---------------------------------------------------------------------------
if __name__ == "__main__":
    in_ch, out_ch = 4, 8
    N, H, W = 2, 8, 8

    key = jax.random.PRNGKey(0)
    kx, kd, kp = jax.random.split(key, 3)

    # NCHW, matching PyTorch: x -> (2, 4, 8, 8), down_features -> (2, 8, 16, 16)
    x = jax.random.normal(kx, (N, in_ch, H, W), jnp.float32)
    down_features = jax.random.normal(kd, (N, out_ch, 2 * H, 2 * W), jnp.float32)
    params = init_params(kp, in_ch, out_ch)

    out = jax.block_until_ready(upblock2d_forward(x, down_features, params))
    ref = jax.block_until_ready(upblock2d_reference(x, down_features, params))

    assert out.shape == (N, out_ch, 2 * H, 2 * W), out.shape
    max_err = float(jnp.max(jnp.abs(out - ref)))
    assert jnp.allclose(out, ref, atol=5e-3, rtol=5e-3), max_err

    print("KERNEL_OK")
</pallas_src>

<mosaic_0001>
module attributes {stable_mosaic.version = 11 : i64} {
  func.func @_upblock_kernel(%arg0: i32, %arg1: memref<1x4x362xbf16, #tpu.memory_space<vmem>>, %arg2: memref<1x8x256xbf16, #tpu.memory_space<vmem>>, %arg3: memref<9x8x4xbf16, #tpu.memory_space<vmem>>, %arg4: memref<9x8x8xbf16, #tpu.memory_space<vmem>>, %arg5: memref<9x8x8xbf16, #tpu.memory_space<vmem>>, %arg6: memref<9x8x8xbf16, #tpu.memory_space<vmem>>, %arg7: memref<8x6xf32, #tpu.memory_space<vmem>>, %arg8: memref<1x324xf32, #tpu.memory_space<vmem>>, %arg9: memref<1x8x256xf32, #tpu.memory_space<vmem>>, %arg10: memref<8x362xbf16, #tpu.memory_space<vmem>>, %arg11: memref<8x362xbf16, #tpu.memory_space<vmem>>, %arg12: memref<8x362xbf16, #tpu.memory_space<vmem>>) attributes {dimension_semantics = [#tpu.dimension_semantics<parallel>], iteration_bounds = array<i64: 2>, scalar_prefetch = 0 : i64, scratch_operands = 3 : i64, tpu.core_type = #tpu.core_type<tc>, window_params = [{transform_indices = @transform_0, window_bounds = array<i64: 1, 4, 362>}, {transform_indices = @transform_1, window_bounds = array<i64: 1, 8, 256>}, {pipeline_mode = #tpu.pipeline_mode<synchronous>, transform_indices = @transform_2, window_bounds = array<i64: 9, 8, 4>}, {pipeline_mode = #tpu.pipeline_mode<synchronous>, transform_indices = @transform_3, window_bounds = array<i64: 9, 8, 8>}, {pipeline_mode = #tpu.pipeline_mode<synchronous>, transform_indices = @transform_4, window_bounds = array<i64: 9, 8, 8>}, {pipeline_mode = #tpu.pipeline_mode<synchronous>, transform_indices = @transform_5, window_bounds = array<i64: 9, 8, 8>}, {pipeline_mode = #tpu.pipeline_mode<synchronous>, transform_indices = @transform_6, window_bounds = array<i64: 8, 6>}, {pipeline_mode = #tpu.pipeline_mode<synchronous>, transform_indices = @transform_7, window_bounds = array<i64: 1, 324>}, {transform_indices = @transform_8, window_bounds = array<i64: 1, 8, 256>}]} {
    %cst = arith.constant 0.000000e+00 : bf16
    %0 = vector.broadcast %cst : bf16 to vector<8x362xbf16>
    %c0 = arith.constant 0 : index
    %c0_0 = arith.constant 0 : index
    %1 = vector.load %arg10[%c0, %c0_0] : memref<8x362xbf16, #tpu.memory_space<vmem>>, vector<8x362xbf16>
    tpu.vector_store %arg10[%c0, %c0_0], %0 {strides = array<i32>} : memref<8x362xbf16, #tpu.memory_space<vmem>>, vector<8x362xbf16>,
    %cst_1 = arith.constant 0.000000e+00 : bf16
    %2 = vector.broadcast %cst_1 : bf16 to vector<8x362xbf16>
    %c0_2 = arith.constant 0 : index
    %c0_3 = arith.constant 0 : index
    %3 = vector.load %arg11[%c0_2, %c0_3] : memref<8x362xbf16, #tpu.memory_space<vmem>>, vector<8x362xbf16>
    tpu.vector_store %arg11[%c0_2, %c0_3], %2 {strides = array<i32>} : memref<8x362xbf16, #tpu.memory_space<vmem>>, vector<8x362xbf16>,
    %cst_4 = arith.constant 0.000000e+00 : bf16
    %4 = vector.broadcast %cst_4 : bf16 to vector<8x362xbf16>
    %c0_5 = arith.constant 0 : index
    %c0_6 = arith.constant 0 : index
    %5 = vector.load %arg12[%c0_5, %c0_6] : memref<8x362xbf16, #tpu.memory_space<vmem>>, vector<8x362xbf16>
    tpu.vector_store %arg12[%c0_5, %c0_6], %4 {strides = array<i32>} : memref<8x362xbf16, #tpu.memory_space<vmem>>, vector<8x362xbf16>,
    %c0_7 = arith.constant 0 : index
    %c0_8 = arith.constant 0 : index
    %6 = vector.load %arg8[%c0_7, %c0_8] : memref<1x324xf32, #tpu.memory_space<vmem>>, vector<1x324xf32>
    %c0_9 = arith.constant 0 : index
    %c0_10 = arith.constant 0 : index
    %7 = vector.load %arg7[%c0_9, %c0_10] : memref<8x6xf32, #tpu.memory_space<vmem>>, vector<8x1xf32>
    %c0_11 = arith.constant 0 : index
    %c1 = arith.constant 1 : index
    %8 = vector.load %arg7[%c0_11, %c1] : memref<8x6xf32, #tpu.memory_space<vmem>>, vector<8x1xf32>
    %cst_12 = arith.constant 0.000000e+00 : f32
    %9 = vector.broadcast %cst_12 : f32 to vector<8x324xf32>
    %c0_13 = arith.constant 0 : index
    %c0_14 = arith.constant 0 : index
    %c0_15 = arith.constant 0 : index
    %10 = vector.load %arg1[%c0_13, %c0_14, %c0_15] : memref<1x4x362xbf16, #tpu.memory_space<vmem>>, vector<1x4x324xbf16>
    %11 = vector.shape_cast %10 : vector<1x4x324xbf16> to vector<4x324xbf16>
    %c0_16 = arith.constant 0 : index
    %c0_17 = arith.constant 0 : index
    %c0_18 = arith.constant 0 : index
    %12 = vector.load %arg3[%c0_16, %c0_17, %c0_18] : memref<9x8x4xbf16, #tpu.memory_space<vmem>>, vector<1x8x4xbf16>
    %13 = vector.shape_cast %12 : vector<1x8x4xbf16> to vector<8x4xbf16>
    %cst_19 = arith.constant dense<0.000000e+00> : vector<8x324xf32>
    %14 = tpu.matmul %13, %11, %cst_19 {dimension_numbers = #tpu.dot_dimension_numbers<[1], [0], [0], [1], [0, 0, 1, 1], [], []>} : vector<8x4xbf16>, vector<4x324xbf16>, vector<8x324xf32> -> vector<8x324xf32>
    %15 = arith.addf %9, %14 : vector<8x324xf32>
    %c0_20 = arith.constant 0 : index
    %c0_21 = arith.constant 0 : index
    %c1_22 = arith.constant 1 : index
    %16 = vector.load %arg1[%c0_20, %c0_21, %c1_22] : memref<1x4x362xbf16, #tpu.memory_space<vmem>>, vector<1x4x324xbf16>
    %17 = vector.shape_cast %16 : vector<1x4x324xbf16> to vector<4x324xbf16>
    %c1_23 = arith.constant 1 : index
    %c0_24 = arith.constant 0 : index
    %c0_25 = arith.constant 0 : index
    %18 = vector.load %arg3[%c1_23, %c0_24, %c0_25] : memref<9x8x4xbf16, #tpu.memory_space<vmem>>, vector<1x8x4xbf16>
    %19 = vector.shape_cast %18 : vector<1x8x4xbf16> to vector<8x4xbf16>
    %cst_26 = arith.constant dense<0.000000e+00> : vector<8x324xf32>
    %20 = tpu.matmul %19, %17, %cst_26 {dimension_numbers = #tpu.dot_dimension_numbers<[1], [0], [0], [1], [0, 0, 1, 1], [], []>} : vector<8x4xbf16>, vector<4x324xbf16>, vector<8x324xf32> -> vector<8x324xf32>
    %21 = arith.addf %15, %20 : vector<8x324xf32>
    %c0_27 = arith.constant 0 : index
    %c0_28 = arith.constant 0 : index
    %c2 = arith.constant 2 : index
    %22 = vector.load %arg1[%c0_27, %c0_28, %c2] : memref<1x4x362xbf16, #tpu.memory_space<vmem>>, vector<1x4x324xbf16>
    %23 = vector.shape_cast %22 : vector<1x4x324xbf16> to vector<4x324xbf16>
    %c2_29 = arith.constant 2 : index
    %c0_30 = arith.constant 0 : index
    %c0_31 = arith.constant 0 : index
    %24 = vector.load %arg3[%c2_29, %c0_30, %c0_31] : memref<9x8x4xbf16, #tpu.memory_space<vmem>>, vector<1x8x4xbf16>
    %25 = vector.shape_cast %24 : vector<1x8x4xbf16> to vector<8x4xbf16>
    %cst_32 = arith.constant dense<0.000000e+00> : vector<8x324xf32>
    %26 = tpu.matmul %25, %23, %cst_32 {dimension_numbers = #tpu.dot_dimension_numbers<[1], [0], [0], [1], [0, 0, 1, 1], [], []>} : vector<8x4xbf16>, vector<4x324xbf16>, vector<8x324xf32> -> vector<8x324xf32>
    %27 = arith.addf %21, %26 : vector<8x324xf32>
    %c0_33 = arith.constant 0 : index
    %c0_34 = arith.constant 0 : index
    %c18 = arith.constant 18 : index
    %28 = vector.load %arg1[%c0_33, %c0_34, %c18] : memref<1x4x362xbf16, #tpu.memory_space<vmem>>, vector<1x4x324xbf16>
    %29 = vector.shape_cast %28 : vector<1x4x324xbf16> to vector<4x324xbf16>
    %c3 = arith.constant 3 : index
    %c0_35 = arith.constant 0 : index
    %c0_36 = arith.constant 0 : index
    %30 = vector.load %arg3[%c3, %c0_35, %c0_36] : memref<9x8x4xbf16, #tpu.memory_space<vmem>>, vector<1x8x4xbf16>
    %31 = vector.shape_cast %30 : vector<1x8x4xbf16> to vector<8x4xbf16>
    %cst_37 = arith.constant dense<0.000000e+00> : vector<8x324xf32>
    %32 = tpu.matmul %31, %29, %cst_37 {dimension_numbers = #tpu.dot_dimension_numbers<[1], [0], [0], [1], [0, 0, 1, 1], [], []>} : vector<8x4xbf16>, vector<4x324xbf16>, vector<8x324xf32> -> vector<8x324xf32>
    %33 = arith.addf %27, %32 : vector<8x324xf32>
    %c0_38 = arith.constant 0 : index
    %c0_39 = arith.constant 0 : index
    %c19 = arith.constant 19 : index
    %34 = vector.load %arg1[%c0_38, %c0_39, %c19] : memref<1x4x362xbf16, #tpu.memory_space<vmem>>, vector<1x4x324xbf16>
    %35 = vector.shape_cast %34 : vector<1x4x324xbf16> to vector<4x324xbf16>
    %c4 = arith.constant 4 : index
    %c0_40 = arith.constant 0 : index
    %c0_41 = arith.constant 0 : index
    %36 = vector.load %arg3[%c4, %c0_40, %c0_41] : memref<9x8x4xbf16, #tpu.memory_space<vmem>>, vector<1x8x4xbf16>
    %37 = vector.shape_cast %36 : vector<1x8x4xbf16> to vector<8x4xbf16>
    %cst_42 = arith.constant dense<0.000000e+00> : vector<8x324xf32>
    %38 = tpu.matmul %37, %35, %cst_42 {dimension_numbers = #tpu.dot_dimension_numbers<[1], [0], [0], [1], [0, 0, 1, 1], [], []>} : vector<8x4xbf16>, vector<4x324xbf16>, vector<8x324xf32> -> vector<8x324xf32>
    %39 = arith.addf %33, %38 : vector<8x324xf32>
    %c0_43 = arith.constant 0 : index
    %c0_44 = arith.constant 0 : index
    %c20 = arith.constant 20 : index
    %40 = vector.load %arg1[%c0_43, %c0_44, %c20] : memref<1x4x362xbf16, #tpu.memory_space<vmem>>, vector<1x4x324xbf16>
    %41 = vector.shape_cast %40 : vector<1x4x324xbf16> to vector<4x324xbf16>
    %c5 = arith.constant 5 : index
    %c0_45 = arith.constant 0 : index
    %c0_46 = arith.constant 0 : index
    %42 = vector.load %arg3[%c5, %c0_45, %c0_46] : memref<9x8x4xbf16, #tpu.memory_space<vmem>>, vector<1x8x4xbf16>
    %43 = vector.shape_cast %42 : vector<1x8x4xbf16> to vector<8x4xbf16>
    %cst_47 = arith.constant dense<0.000000e+00> : vector<8x324xf32>
    %44 = tpu.matmul %43, %41, %cst_47 {dimension_numbers = #tpu.dot_dimension_numbers<[1], [0], [0], [1], [0, 0, 1, 1], [], []>} : vector<8x4xbf16>, vector<4x324xbf16>, vector<8x324xf32> -> vector<8x324xf32>
    %45 = arith.addf %39, %44 : vector<8x324xf32>
    %c0_48 = arith.constant 0 : index
    %c0_49 = arith.constant 0 : index
    %c36 = arith.constant 36 : index
    %46 = vector.load %arg1[%c0_48, %c0_49, %c36] : memref<1x4x362xbf16, #tpu.memory_space<vmem>>, vector<1x4x324xbf16>
    %47 = vector.shape_cast %46 : vector<1x4x324xbf16> to vector<4x324xbf16>
    %c6 = arith.constant 6 : index
    %c0_50 = arith.constant 0 : index
    %c0_51 = arith.constant 0 : index
    %48 = vector.load %arg3[%c6, %c0_50, %c0_51] : memref<9x8x4xbf16, #tpu.memory_space<vmem>>, vector<1x8x4xbf16>
    %49 = vector.shape_cast %48 : vector<1x8x4xbf16> to vector<8x4xbf16>
    %cst_52 = arith.constant dense<0.000000e+00> : vector<8x324xf32>
    %50 = tpu.matmul %49, %47, %cst_52 {dimension_numbers = #tpu.dot_dimension_numbers<[1], [0], [0], [1], [0, 0, 1, 1], [], []>} : vector<8x4xbf16>, vector<4x324xbf16>, vector<8x324xf32> -> vector<8x324xf32>
    %51 = arith.addf %45, %50 : vector<8x324xf32>
    %c0_53 = arith.constant 0 : index
    %c0_54 = arith.constant 0 : index
    %c37 = arith.constant 37 : index
    %52 = vector.load %arg1[%c0_53, %c0_54, %c37] : memref<1x4x362xbf16, #tpu.memory_space<vmem>>, vector<1x4x324xbf16>
    %53 = vector.shape_cast %52 : vector<1x4x324xbf16> to vector<4x324xbf16>
    %c7 = arith.constant 7 : index
    %c0_55 = arith.constant 0 : index
    %c0_56 = arith.constant 0 : index
    %54 = vector.load %arg3[%c7, %c0_55, %c0_56] : memref<9x8x4xbf16, #tpu.memory_space<vmem>>, vector<1x8x4xbf16>
    %55 = vector.shape_cast %54 : vector<1x8x4xbf16> to vector<8x4xbf16>
    %cst_57 = arith.constant dense<0.000000e+00> : vector<8x324xf32>
    %56 = tpu.matmul %55, %53, %cst_57 {dimension_numbers = #tpu.dot_dimension_numbers<[1], [0], [0], [1], [0, 0, 1, 1], [], []>} : vector<8x4xbf16>, vector<4x324xbf16>, vector<8x324xf32> -> vector<8x324xf32>
    %57 = arith.addf %51, %56 : vector<8x324xf32>
    %c0_58 = arith.constant 0 : index
    %c0_59 = arith.constant 0 : index
    %c38 = arith.constant 38 : index
    %58 = vector.load %arg1[%c0_58, %c0_59, %c38] : memref<1x4x362xbf16, #tpu.memory_space<vmem>>, vector<1x4x324xbf16>
    %59 = vector.shape_cast %58 : vector<1x4x324xbf16> to vector<4x324xbf16>
    %c8 = arith.constant 8 : index
    %c0_60 = arith.constant 0 : index
    %c0_61 = arith.constant 0 : index
    %60 = vector.load %arg3[%c8, %c0_60, %c0_61] : memref<9x8x4xbf16, #tpu.memory_space<vmem>>, vector<1x8x4xbf16>
    %61 = vector.shape_cast %60 : vector<1x8x4xbf16> to vector<8x4xbf16>
    %cst_62 = arith.constant dense<0.000000e+00> : vector<8x324xf32>
    %62 = tpu.matmul %61, %59, %cst_62 {dimension_numbers = #tpu.dot_dimension_numbers<[1], [0], [0], [1], [0, 0, 1, 1], [], []>} : vector<8x4xbf16>, vector<4x324xbf16>, vector<8x324xf32> -> vector<8x324xf32>
    %63 = arith.addf %57, %62 : vector<8x324xf32>
    %64 = vector.broadcast %7 : vector<8x1xf32> to vector<8x324xf32>
    %65 = arith.mulf %63, %64 : vector<8x324xf32>
    %66 = vector.broadcast %8 : vector<8x1xf32> to vector<8x324xf32>
    %67 = arith.addf %65, %66 : vector<8x324xf32>
    %cst_63 = arith.constant 0.000000e+00 : f32
    %68 = vector.broadcast %cst_63 : f32 to vector<8x324xf32>
    %69 = arith.maximumf %67, %68 : vector<8x324xf32>
    %70 = vector.broadcast %6 : vector<1x324xf32> to vector<8x324xf32>
    %71 = arith.mulf %69, %70 : vector<8x324xf32>
    %72 = arith.truncf %71 : vector<8x324xf32> to vector<8x324xbf16>
    %c0_64 = arith.constant 0 : index
    %c19_65 = arith.constant 19 : index
    %73 = vector.load %arg10[%c0_64, %c19_65] : memref<8x362xbf16, #tpu.memory_space<vmem>>, vector<8x324xbf16>
    tpu.vector_store %arg10[%c0_64, %c19_65], %72 {strides = array<i32>} : memref<8x362xbf16, #tpu.memory_space<vmem>>, vector<8x324xbf16>,
    %c0_66 = arith.constant 0 : index
    %c0_67 = arith.constant 0 : index
    %c0_68 = arith.constant 0 : index
    %74 = vector.load %arg2[%c0_66, %c0_67, %c0_68] : memref<1x8x256xbf16, #tpu.memory_space<vmem>>, vector<1x8x16xbf16>
    %75 = vector.shape_cast %74 : vector<1x8x16xbf16> to vector<8x16xbf16>
    %c0_69 = arith.constant 0 : index
    %c38_70 = arith.constant 38 : index
    %76 = vector.load %arg11[%c0_69, %c38_70] : memref<8x362xbf16, #tpu.memory_space<vmem>>, vector<8x16xbf16>
    tpu.vector_store %arg11[%c0_69, %c38_70], %75 {strides = array<i32>} : memref<8x362xbf16, #tpu.memory_space<vmem>>, vector<8x16xbf16>,
    %c0_71 = arith.constant 0 : index
    %c0_72 = arith.constant 0 : index
    %c16 = arith.constant 16 : index
    %77 = vector.load %arg2[%c0_71, %c0_72, %c16] : memref<1x8x256xbf16, #tpu.memory_space<vmem>>, vector<1x8x16xbf16>
    %78 = vector.shape_cast %77 : vector<1x8x16xbf16> to vector<8x16xbf16>
    %c0_73 = arith.constant 0 : index
    %c56 = arith.constant 56 : index
    %79 = vector.load %arg11[%c0_73, %c56] : memref<8x362xbf16, #tpu.memory_space<vmem>>, vector<8x16xbf16>
    tpu.vector_store %arg11[%c0_73, %c56], %78 {strides = array<i32>} : memref<8x362xbf16, #tpu.memory_space<vmem>>, vector<8x16xbf16>,
    %c0_74 = arith.constant 0 : index
    %c0_75 = arith.constant 0 : index
    %c32 = arith.constant 32 : index
    %80 = vector.load %arg2[%c0_74, %c0_75, %c32] : memref<1x8x256xbf16, #tpu.memory_space<vmem>>, vector<1x8x16xbf16>
    %81 = vector.shape_cast %80 : vector<1x8x16xbf16> to vector<8x16xbf16>
    %c0_76 = arith.constant 0 : index
    %c74 = arith.constant 74 : index
    %82 = vector.load %arg11[%c0_76, %c74] : memref<8x362xbf16, #tpu.memory_space<vmem>>, vector<8x16xbf16>
    tpu.vector_store %arg11[%c0_76, %c74], %81 {strides = array<i32>} : memref<8x362xbf16, #tpu.memory_space<vmem>>, vector<8x16xbf16>,
    %c0_77 = arith.constant 0 : index
    %c0_78 = arith.constant 0 : index
    %c48 = arith.constant 48 : index
    %83 = vector.load %arg2[%c0_77, %c0_78, %c48] : memref<1x8x256xbf16, #tpu.memory_space<vmem>>, vector<1x8x16xbf16>
    %84 = vector.shape_cast %83 : vector<1x8x16xbf16> to vector<8x16xbf16>
    %c0_79 = arith.constant 0 : index
    %c92 = arith.constant 92 : index
    %85 = vector.load %arg11[%c0_79, %c92] : memref<8x362xbf16, #tpu.memory_space<vmem>>, vector<8x16xbf16>
    tpu.vector_store %arg11[%c0_79, %c92], %84 {strides = array<i32>} : memref<8x362xbf16, #tpu.memory_space<vmem>>, vector<8x16xbf16>,
    %c0_80 = arith.constant 0 : index
    %c0_81 = arith.constant 0 : index
    %c64 = arith.constant 64 : index
    %86 = vector.load %arg2[%c0_80, %c0_81, %c64] : memref<1x8x256xbf16, #tpu.memory_space<vmem>>, vector<1x8x16xbf16>
    %87 = vector.shape_cast %86 : vector<1x8x16xbf16> to vector<8x16xbf16>
    %c0_82 = arith.constant 0 : index
    %c110 = arith.constant 110 : index
    %88 = vector.load %arg11[%c0_82, %c110] : memref<8x362xbf16, #tpu.memory_space<vmem>>, vector<8x16xbf16>
    tpu.vector_store %arg11[%c0_82, %c110], %87 {strides = array<i32>} : memref<8x362xbf16, #tpu.memory_space<vmem>>, vector<8x16xbf16>,
    %c0_83 = arith.constant 0 : index
    %c0_84 = arith.constant 0 : index
    %c80 = arith.constant 80 : index
    %89 = vector.load %arg2[%c0_83, %c0_84, %c80] : memref<1x8x256xbf16, #tpu.memory_space<vmem>>, vector<1x8x16xbf16>
    %90 = vector.shape_cast %89 : vector<1x8x16xbf16> to vector<8x16xbf16>
    %c0_85 = arith.constant 0 : index
    %c128 = arith.constant 128 : index
    %91 = vector.load %arg11[%c0_85, %c128] : memref<8x362xbf16, #tpu.memory_space<vmem>>, vector<8x16xbf16>
    tpu.vector_store %arg11[%c0_85, %c128], %90 {strides = array<i32>} : memref<8x362xbf16, #tpu.memory_space<vmem>>, vector<8x16xbf16>,
    %c0_86 = arith.constant 0 : index
    %c0_87 = arith.constant 0 : index
    %c96 = arith.constant 96 : index
    %92 = vector.load %arg2[%c0_86, %c0_87, %c96] : memref<1x8x256xbf16, #tpu.memory_space<vmem>>, vector<1x8x16xbf16>
    %93 = vector.shape_cast %92 : vector<1x8x16xbf16> to vector<8x16xbf16>
    %c0_88 = arith.constant 0 : index
    %c146 = arith.constant 146 : index
    %94 = vector.load %arg11[%c0_88, %c146] : memref<8x362xbf16, #tpu.memory_space<vmem>>, vector<8x16xbf16>
    tpu.vector_store %arg11[%c0_88, %c146], %93 {strides = array<i32>} : memref<8x362xbf16, #tpu.memory_space<vmem>>, vector<8x16xbf16>,
    %c0_89 = arith.constant 0 : index
    %c0_90 = arith.constant 0 : index
    %c112 = arith.constant 112 : index
    %95 = vector.load %arg2[%c0_89, %c0_90, %c112] : memref<1x8x256xbf16, #tpu.memory_space<vmem>>, vector<1x8x16xbf16>
    %96 = vector.shape_cast %95 : vector<1x8x16xbf16> to vector<8x16xbf16>
    %c0_91 = arith.constant 0 : index
    %c164 = arith.constant 164 : index
    %97 = vector.load %arg11[%c0_91, %c164] : memref<8x362xbf16, #tpu.memory_space<vmem>>, vector<8x16xbf16>
    tpu.vector_store %arg11[%c0_91, %c164], %96 {strides = array<i32>} : memref<8x362xbf16, #tpu.memory_space<vmem>>, vector<8x16xbf16>,
    %c0_92 = arith.constant 0 : index
    %c0_93 = arith.constant 0 : index
    %c128_94 = arith.constant 128 : index
    %98 = vector.load %arg2[%c0_92, %c0_93, %c128_94] : memref<1x8x256xbf16, #tpu.memory_space<vmem>>, vector<1x8x16xbf16>
    %99 = vector.shape_cast %98 : vector<1x8x16xbf16> to vector<8x16xbf16>
    %c0_95 = arith.constant 0 : index
    %c182 = arith.constant 182 : index
    %100 = vector.load %arg11[%c0_95, %c182] : memref<8x362xbf16, #tpu.memory_space<vmem>>, vector<8x16xbf16>
    tpu.vector_store %arg11[%c0_95, %c182], %99 {strides = array<i32>} : memref<8x362xbf16, #tpu.memory_space<vmem>>, vector<8x16xbf16>,
    %c0_96 = arith.constant 0 : index
    %c0_97 = arith.constant 0 : index
    %c144 = arith.constant 144 : index
    %101 = vector.load %arg2[%c0_96, %c0_97, %c144] : memref<1x8x256xbf16, #tpu.memory_space<vmem>>, vector<1x8x16xbf16>
    %102 = vector.shape_cast %101 : vector<1x8x16xbf16> to vector<8x16xbf16>
    %c0_98 = arith.constant 0 : index
    %c200 = arith.constant 200 : index
    %103 = vector.load %arg11[%c0_98, %c200] : memref<8x362xbf16, #tpu.memory_space<vmem>>, vector<8x16xbf16>
    tpu.vector_store %arg11[%c0_98, %c200], %102 {strides = array<i32>} : memref<8x362xbf16, #tpu.memory_space<vmem>>, vector<8x16xbf16>,
    %c0_99 = arith.constant 0 : index
    %c0_100 = arith.constant 0 : index
    %c160 = arith.constant 160 : index
    %104 = vector.load %arg2[%c0_99, %c0_100, %c160] : memref<1x8x256xbf16, #tpu.memory_space<vmem>>, vector<1x8x16xbf16>
    %105 = vector.shape_cast %104 : vector<1x8x16xbf16> to vector<8x16xbf16>
    %c0_101 = arith.constant 0 : index
    %c218 = arith.constant 218 : index
    %106 = vector.load %arg11[%c0_101, %c218] : memref<8x362xbf16, #tpu.memory_space<vmem>>, vector<8x16xbf16>
    tpu.vector_store %arg11[%c0_101, %c218], %105 {strides = array<i32>} : memref<8x362xbf16, #tpu.memory_space<vmem>>, vector<8x16xbf16>,
    %c0_102 = arith.constant 0 : index
    %c0_103 = arith.constant 0 : index
    %c176 = arith.constant 176 : index
    %107 = vector.load %arg2[%c0_102, %c0_103, %c176] : memref<1x8x256xbf16, #tpu.memory_space<vmem>>, vector<1x8x16xbf16>
    %108 = vector.shape_cast %107 : vector<1x8x16xbf16> to vector<8x16xbf16>
    %c0_104 = arith.constant 0 : index
    %c236 = arith.constant 236 : index
    %109 = vector.load %arg11[%c0_104, %c236] : memref<8x362xbf16, #tpu.memory_space<vmem>>, vector<8x16xbf16>
    tpu.vector_store %arg11[%c0_104, %c236], %108 {strides = array<i32>} : memref<8x362xbf16, #tpu.memory_space<vmem>>, vector<8x16xbf16>,
    %c0_105 = arith.constant 0 : index
    %c0_106 = arith.constant 0 : index
    %c192 = arith.constant 192 : index
    %110 = vector.load %arg2[%c0_105, %c0_106, %c192] : memref<1x8x256xbf16, #tpu.memory_space<vmem>>, vector<1x8x16xbf16>
    %111 = vector.shape_cast %110 : vector<1x8x16xbf16> to vector<8x16xbf16>
    %c0_107 = arith.constant 0 : index
    %c254 = arith.constant 254 : index
    %112 = vector.load %arg11[%c0_107, %c254] : memref<8x362xbf16, #tpu.memory_space<vmem>>, vector<8x16xbf16>
    tpu.vector_store %arg11[%c0_107, %c254], %111 {strides = array<i32>} : memref<8x362xbf16, #tpu.memory_space<vmem>>, vector<8x16xbf16>,
    %c0_108 = arith.constant 0 : index
    %c0_109 = arith.constant 0 : index
    %c208 = arith.constant 208 : index
    %113 = vector.load %arg2[%c0_108, %c0_109, %c208] : memref<1x8x256xbf16, #tpu.memory_space<vmem>>, vector<1x8x16xbf16>
    %114 = vector.shape_cast %113 : vector<1x8x16xbf16> to vector<8x16xbf16>
    %c0_110 = arith.constant 0 : index
    %c272 = arith.constant 272 : index
    %115 = vector.load %arg11[%c0_110, %c272] : memref<8x362xbf16, #tpu.memory_space<vmem>>, vector<8x16xbf16>
    tpu.vector_store %arg11[%c0_110, %c272], %114 {strides = array<i32>} : memref<8x362xbf16, #tpu.memory_space<vmem>>, vector<8x16xbf16>,
    %c0_111 = arith.constant 0 : index
    %c0_112 = arith.constant 0 : index
    %c224 = arith.constant 224 : index
    %116 = vector.load %arg2[%c0_111, %c0_112, %c224] : memref<1x8x256xbf16, #tpu.memory_space<vmem>>, vector<1x8x16xbf16>
    %117 = vector.shape_cast %116 : vector<1x8x16xbf16> to vector<8x16xbf16>
    %c0_113 = arith.constant 0 : index
    %c290 = arith.constant 290 : index
    %118 = vector.load %arg11[%c0_113, %c290] : memref<8x362xbf16, #tpu.memory_space<vmem>>, vector<8x16xbf16>
    tpu.vector_store %arg11[%c0_113, %c290], %117 {strides = array<i32>} : memref<8x362xbf16, #tpu.memory_space<vmem>>, vector<8x16xbf16>,
    %c0_114 = arith.constant 0 : index
    %c0_115 = arith.constant 0 : index
    %c240 = arith.constant 240 : index
    %119 = vector.load %arg2[%c0_114, %c0_115, %c240] : memref<1x8x256xbf16, #tpu.memory_space<vmem>>, vector<1x8x16xbf16>
    %120 = vector.shape_cast %119 : vector<1x8x16xbf16> to vector<8x16xbf16>
    %c0_116 = arith.constant 0 : index
    %c308 = arith.constant 308 : index
    %121 = vector.load %arg11[%c0_116, %c308] : memref<8x362xbf16, #tpu.memory_space<vmem>>, vector<8x16xbf16>
    tpu.vector_store %arg11[%c0_116, %c308], %120 {strides = array<i32>} : memref<8x362xbf16, #tpu.memory_space<vmem>>, vector<8x16xbf16>,
    %c0_117 = arith.constant 0 : index
    %c2_118 = arith.constant 2 : index
    %122 = vector.load %arg7[%c0_117, %c2_118] : memref<8x6xf32, #tpu.memory_space<vmem>>, vector<8x1xf32>
    %c0_119 = arith.constant 0 : index
    %c3_120 = arith.constant 3 : index
    %123 = vector.load %arg7[%c0_119, %c3_120] : memref<8x6xf32, #tpu.memory_space<vmem>>, vector<8x1xf32>
    %cst_121 = arith.constant 0.000000e+00 : f32
    %124 = vector.broadcast %cst_121 : f32 to vector<8x324xf32>
    %c0_122 = arith.constant 0 : index
    %c0_123 = arith.constant 0 : index
    %125 = vector.load %arg10[%c0_122, %c0_123] : memref<8x362xbf16, #tpu.memory_space<vmem>>, vector<8x324xbf16>
    %c0_124 = arith.constant 0 : index
    %c0_125 = arith.constant 0 : index
    %c0_126 = arith.constant 0 : index
    %126 = vector.load %arg4[%c0_124, %c0_125, %c0_126] : memref<9x8x8xbf16, #tpu.memory_space<vmem>>, vector<1x8x8xbf16>
    %127 = vector.shape_cast %126 : vector<1x8x8xbf16> to vector<8x8xbf16>
    %cst_127 = arith.constant dense<0.000000e+00> : vector<8x324xf32>
    %128 = tpu.matmul %127, %125, %cst_127 {dimension_numbers = #tpu.dot_dimension_numbers<[1], [0], [0], [1], [0, 0, 1, 1], [], []>} : vector<8x8xbf16>, vector<8x324xbf16>, vector<8x324xf32> -> vector<8x324xf32>
    %129 = arith.addf %124, %128 : vector<8x324xf32>
    %c0_128 = arith.constant 0 : index
    %c0_129 = arith.constant 0 : index
    %130 = vector.load %arg11[%c0_128, %c0_129] : memref<8x362xbf16, #tpu.memory_space<vmem>>, vector<8x324xbf16>
    %c0_130 = arith.constant 0 : index
    %c0_131 = arith.constant 0 : index
    %c0_132 = arith.constant 0 : index
    %131 = vector.load %arg5[%c0_130, %c0_131, %c0_132] : memref<9x8x8xbf16, #tpu.memory_space<vmem>>, vector<1x8x8xbf16>
    %132 = vector.shape_cast %131 : vector<1x8x8xbf16> to vector<8x8xbf16>
    %cst_133 = arith.constant dense<0.000000e+00> : vector<8x324xf32>
    %133 = tpu.matmul %132, %130, %cst_133 {dimension_numbers = #tpu.dot_dimension_numbers<[1], [0], [0], [1], [0, 0, 1, 1], [], []>} : vector<8x8xbf16>, vector<8x324xbf16>, vector<8x324xf32> -> vector<8x324xf32>
    %134 = arith.addf %129, %133 : vector<8x324xf32>
    %c0_134 = arith.constant 0 : index
    %c1_135 = arith.constant 1 : index
    %135 = vector.load %arg10[%c0_134, %c1_135] : memref<8x362xbf16, #tpu.memory_space<vmem>>, vector<8x324xbf16>
    %c1_136 = arith.constant 1 : index
    %c0_137 = arith.constant 0 : index
    %c0_138 = arith.constant 0 : index
    %136 = vector.load %arg4[%c1_136, %c0_137, %c0_138] : memref<9x8x8xbf16, #tpu.memory_space<vmem>>, vector<1x8x8xbf16>
    %137 = vector.shape_cast %136 : vector<1x8x8xbf16> to vector<8x8xbf16>
    %cst_139 = arith.constant dense<0.000000e+00> : vector<8x324xf32>
    %138 = tpu.matmul %137, %135, %cst_139 {dimension_numbers = #tpu.dot_dimension_numbers<[1], [0], [0], [1], [0, 0, 1, 1], [], []>} : vector<8x8xbf16>, vector<8x324xbf16>, vector<8x324xf32> -> vector<8x324xf32>
    %139 = arith.addf %134, %138 : vector<8x324xf32>
    %c0_140 = arith.constant 0 : index
    %c1_141 = arith.constant 1 : index
    %140 = vector.load %arg11[%c0_140, %c1_141] : memref<8x362xbf16, #tpu.memory_space<vmem>>, vector<8x324xbf16>
    %c1_142 = arith.constant 1 : index
    %c0_143 = arith.constant 0 : index
    %c0_144 = arith.constant 0 : index
    %141 = vector.load %arg5[%c1_142, %c0_143, %c0_144] : memref<9x8x8xbf16, #tpu.memory_space<vmem>>, vector<1x8x8xbf16>
    %142 = vector.shape_cast %141 : vector<1x8x8xbf16> to vector<8x8xbf16>
    %cst_145 = arith.constant dense<0.000000e+00> : vector<8x324xf32>
    %143 = tpu.matmul %142, %140, %cst_145 {dimension_numbers = #tpu.dot_dimension_numbers<[1], [0], [0], [1], [0, 0, 1, 1], [], []>} : vector<8x8xbf16>, vector<8x324xbf16>, vector<8x324xf32> -> vector<8x324xf32>
    %144 = arith.addf %139, %143 : vector<8x324xf32>
    %c0_146 = arith.constant 0 : index
    %c2_147 = arith.constant 2 : index
    %145 = vector.load %arg10[%c0_146, %c2_147] : memref<8x362xbf16, #tpu.memory_space<vmem>>, vector<8x324xbf16>
    %c2_148 = arith.constant 2 : index
    %c0_149 = arith.constant 0 : index
    %c0_150 = arith.constant 0 : index
    %146 = vector.load %arg4[%c2_148, %c0_149, %c0_150] : memref<9x8x8xbf16, #tpu.memory_space<vmem>>, vector<1x8x8xbf16>
    %147 = vector.shape_cast %146 : vector<1x8x8xbf16> to vector<8x8xbf16>
    %cst_151 = arith.constant dense<0.000000e+00> : vector<8x324xf32>
    %148 = tpu.matmul %147, %145, %cst_151 {dimension_numbers = #tpu.dot_dimension_numbers<[1], [0], [0], [1], [0, 0, 1, 1], [], []>} : vector<8x8xbf16>, vector<8x324xbf16>, vector<8x324xf32> -> vector<8x324xf32>
    %149 = arith.addf %144, %148 : vector<8x324xf32>
    %c0_152 = arith.constant 0 : index
    %c2_153 = arith.constant 2 : index
    %150 = vector.load %arg11[%c0_152, %c2_153] : memref<8x362xbf16, #tpu.memory_space<vmem>>, vector<8x324xbf16>
    %c2_154 = arith.constant 2 : index
    %c0_155 = arith.constant 0 : index
    %c0_156 = arith.constant 0 : index
    %151 = vector.load %arg5[%c2_154, %c0_155, %c0_156] : memref<9x8x8xbf16, #tpu.memory_space<vmem>>, vector<1x8x8xbf16>
    %152 = vector.shape_cast %151 : vector<1x8x8xbf16> to vector<8x8xbf16>
    %cst_157 = arith.constant dense<0.000000e+00> : vector<8x324xf32>
    %153 = tpu.matmul %152, %150, %cst_157 {dimension_numbers = #tpu.dot_dimension_numbers<[1], [0], [0], [1], [0, 0, 1, 1], [], []>} : vector<8x8xbf16>, vector<8x324xbf16>, vector<8x324xf32> -> vector<8x324xf32>
    %154 = arith.addf %149, %153 : vector<8x324xf32>
    %c0_158 = arith.constant 0 : index
    %c18_159 = arith.constant 18 : index
    %155 = vector.load %arg10[%c0_158, %c18_159] : memref<8x362xbf16, #tpu.memory_space<vmem>>, vector<8x324xbf16>
    %c3_160 = arith.constant 3 : index
    %c0_161 = arith.constant 0 : index
    %c0_162 = arith.constant 0 : index
    %156 = vector.load %arg4[%c3_160, %c0_161, %c0_162] : memref<9x8x8xbf16, #tpu.memory_space<vmem>>, vector<1x8x8xbf16>
    %157 = vector.shape_cast %156 : vector<1x8x8xbf16> to vector<8x8xbf16>
    %cst_163 = arith.constant dense<0.000000e+00> : vector<8x324xf32>
    %158 = tpu.matmul %157, %155, %cst_163 {dimension_numbers = #tpu.dot_dimension_numbers<[1], [0], [0], [1], [0, 0, 1, 1], [], []>} : vector<8x8xbf16>, vector<8x324xbf16>, vector<8x324xf32> -> vector<8x324xf32>
    %159 = arith.addf %154, %158 : vector<8x324xf32>
    %c0_164 = arith.constant 0 : index
    %c18_165 = arith.constant 18 : index
    %160 = vector.load %arg11[%c0_164, %c18_165] : memref<8x362xbf16, #tpu.memory_space<vmem>>, vector<8x324xbf16>
    %c3_166 = arith.constant 3 : index
    %c0_167 = arith.constant 0 : index
    %c0_168 = arith.constant 0 : index
    %161 = vector.load %arg5[%c3_166, %c0_167, %c0_168] : memref<9x8x8xbf16, #tpu.memory_space<vmem>>, vector<1x8x8xbf16>
    %162 = vector.shape_cast %161 : vector<1x8x8xbf16> to vector<8x8xbf16>
    %cst_169 = arith.constant dense<0.000000e+00> : vector<8x324xf32>
    %163 = tpu.matmul %162, %160, %cst_169 {dimension_numbers = #tpu.dot_dimension_numbers<[1], [0], [0], [1], [0, 0, 1, 1], [], []>} : vector<8x8xbf16>, vector<8x324xbf16>, vector<8x324xf32> -> vector<8x324xf32>
    %164 = arith.addf %159, %163 : vector<8x324xf32>
    %c0_170 = arith.constant 0 : index
    %c19_171 = arith.constant 19 : index
    %165 = vector.load %arg10[%c0_170, %c19_171] : memref<8x362xbf16, #tpu.memory_space<vmem>>, vector<8x324xbf16>
    %c4_172 = arith.constant 4 : index
    %c0_173 = arith.constant 0 : index
    %c0_174 = arith.constant 0 : index
    %166 = vector.load %arg4[%c4_172, %c0_173, %c0_174] : memref<9x8x8xbf16, #tpu.memory_space<vmem>>, vector<1x8x8xbf16>
    %167 = vector.shape_cast %166 : vector<1x8x8xbf16> to vector<8x8xbf16>
    %cst_175 = arith.constant dense<0.000000e+00> : vector<8x324xf32>
    %168 = tpu.matmul %167, %165, %cst_175 {dimension_numbers = #tpu.dot_dimension_numbers<[1], [0], [0], [1], [0, 0, 1, 1], [], []>} : vector<8x8xbf16>, vector<8x324xbf16>, vector<8x324xf32> -> vector<8x324xf32>
    %169 = arith.addf %164, %168 : vector<8x324xf32>
    %c0_176 = arith.constant 0 : index
    %c19_177 = arith.constant 19 : index
    %170 = vector.load %arg11[%c0_176, %c19_177] : memref<8x362xbf16, #tpu.memory_space<vmem>>, vector<8x324xbf16>
    %c4_178 = arith.constant 4 : index
    %c0_179 = arith.constant 0 : index
    %c0_180 = arith.constant 0 : index
    %171 = vector.load %arg5[%c4_178, %c0_179, %c0_180] : memref<9x8x8xbf16, #tpu.memory_space<vmem>>, vector<1x8x8xbf16>
    %172 = vector.shape_cast %171 : vector<1x8x8xbf16> to vector<8x8xbf16>
    %cst_181 = arith.constant dense<0.000000e+00> : vector<8x324xf32>
    %173 = tpu.matmul %172, %170, %cst_181 {dimension_numbers = #tpu.dot_dimension_numbers<[1], [0], [0], [1], [0, 0, 1, 1], [], []>} : vector<8x8xbf16>, vector<8x324xbf16>, vector<8x324xf32> -> vector<8x324xf32>
    %174 = arith.addf %169, %173 : vector<8x324xf32>
    %c0_182 = arith.constant 0 : index
    %c20_183 = arith.constant 20 : index
    %175 = vector.load %arg10[%c0_182, %c20_183] : memref<8x362xbf16, #tpu.memory_space<vmem>>, vector<8x324xbf16>
    %c5_184 = arith.constant 5 : index
    %c0_185 = arith.constant 0 : index
    %c0_186 = arith.constant 0 : index
    %176 = vector.load %arg4[%c5_184, %c0_185, %c0_186] : memref<9x8x8xbf16, #tpu.memory_space<vmem>>, vector<1x8x8xbf16>
    %177 = vector.shape_cast %176 : vector<1x8x8xbf16> to vector<8x8xbf16>
    %cst_187 = arith.constant dense<0.000000e+00> : vector<8x324xf32>
    %178 = tpu.matmul %177, %175, %cst_187 {dimension_numbers = #tpu.dot_dimension_numbers<[1], [0], [0], [1], [0, 0, 1, 1], [], []>} : vector<8x8xbf16>, vector<8x324xbf16>, vector<8x324xf32> -> vector<8x324xf32>
    %179 = arith.addf %174, %178 : vector<8x324xf32>
    %c0_188 = arith.constant 0 : index
    %c20_189 = arith.constant 20 : index
    %180 = vector.load %arg11[%c0_188, %c20_189] : memref<8x362xbf16, #tpu.memory_space<vmem>>, vector<8x324xbf16>
    %c5_190 = arith.constant 5 : index
    %c0_191 = arith.constant 0 : index
    %c0_192 = arith.constant 0 : index
    %181 = vector.load %arg5[%c5_190, %c0_191, %c0_192] : memref<9x8x8xbf16, #tpu.memory_space<vmem>>, vector<1x8x8xbf16>
    %182 = vector.shape_cast %181 : vector<1x8x8xbf16> to vector<8x8xbf16>
    %cst_193 = arith.constant dense<0.000000e+00> : vector<8x324xf32>
    %183 = tpu.matmul %182, %180, %cst_193 {dimension_numbers = #tpu.dot_dimension_numbers<[1], [0], [0], [1], [0, 0, 1, 1], [], []>} : vector<8x8xbf16>, vector<8x324xbf16>, vector<8x324xf32> -> vector<8x324xf32>
    %184 = arith.addf %179, %183 : vector<8x324xf32>
    %c0_194 = arith.constant 0 : index
    %c36_195 = arith.constant 36 : index
    %185 = vector.load %arg10[%c0_194, %c36_195] : memref<8x362xbf16, #tpu.memory_space<vmem>>, vector<8x324xbf16>
    %c6_196 = arith.constant 6 : index
    %c0_197 = arith.constant 0 : index
    %c0_198 = arith.constant 0 : index
    %186 = vector.load %arg4[%c6_196, %c0_197, %c0_198] : memref<9x8x8xbf16, #tpu.memory_space<vmem>>, vector<1x8x8xbf16>
    %187 = vector.shape_cast %186 : vector<1x8x8xbf16> to vector<8x8xbf16>
    %cst_199 = arith.constant dense<0.000000e+00> : vector<8x324xf32>
    %188 = tpu.matmul %187, %185, %cst_199 {dimension_numbers = #tpu.dot_dimension_numbers<[1], [0], [0], [1], [0, 0, 1, 1], [], []>} : vector<8x8xbf16>, vector<8x324xbf16>, vector<8x324xf32> -> vector<8x324xf32>
    %189 = arith.addf %184, %188 : vector<8x324xf32>
    %c0_200 = arith.constant 0 : index
    %c36_201 = arith.constant 36 : index
    %190 = vector.load %arg11[%c0_200, %c36_201] : memref<8x362xbf16, #tpu.memory_space<vmem>>, vector<8x324xbf16>
    %c6_202 = arith.constant 6 : index
    %c0_203 = arith.constant 0 : index
    %c0_204 = arith.constant 0 : index
    %191 = vector.load %arg5[%c6_202, %c0_203, %c0_204] : memref<9x8x8xbf16, #tpu.memory_space<vmem>>, vector<1x8x8xbf16>
    %192 = vector.shape_cast %191 : vector<1x8x8xbf16> to vector<8x8xbf16>
    %cst_205 = arith.constant dense<0.000000e+00> : vector<8x324xf32>
    %193 = tpu.matmul %192, %190, %cst_205 {dimension_numbers = #tpu.dot_dimension_numbers<[1], [0], [0], [1], [0, 0, 1, 1], [], []>} : vector<8x8xbf16>, vector<8x324xbf16>, vector<8x324xf32> -> vector<8x324xf32>
    %194 = arith.addf %189, %193 : vector<8x324xf32>
    %c0_206 = arith.constant 0 : index
    %c37_207 = arith.constant 37 : index
    %195 = vector.load %arg10[%c0_206, %c37_207] : memref<8x362xbf16, #tpu.memory_space<vmem>>, vector<8x324xbf16>
    %c7_208 = arith.constant 7 : index
    %c0_209 = arith.constant 0 : index
    %c0_210 = arith.constant 0 : index
    %196 = vector.load %arg4[%c7_208, %c0_209, %c0_210] : memref<9x8x8xbf16, #tpu.memory_space<vmem>>, vector<1x8x8xbf16>
    %197 = vector.shape_cast %196 : vector<1x8x8xbf16> to vector<8x8xbf16>
    %cst_211 = arith.constant dense<0.000000e+00> : vector<8x324xf32>
    %198 = tpu.matmul %197, %195, %cst_211 {dimension_numbers = #tpu.dot_dimension_numbers<[1], [0], [0], [1], [0, 0, 1, 1], [], []>} : vector<8x8xbf16>, vector<8x324xbf16>, vector<8x324xf32> -> vector<8x324xf32>
    %199 = arith.addf %194, %198 : vector<8x324xf32>
    %c0_212 = arith.constant 0 : index
    %c37_213 = arith.constant 37 : index
    %200 = vector.load %arg11[%c0_212, %c37_213] : memref<8x362xbf16, #tpu.memory_space<vmem>>, vector<8x324xbf16>
    %c7_214 = arith.constant 7 : index
    %c0_215 = arith.constant 0 : index
    %c0_216 = arith.constant 0 : index
    %201 = vector.load %arg5[%c7_214, %c0_215, %c0_216] : memref<9x8x8xbf16, #tpu.memory_space<vmem>>, vector<1x8x8xbf16>
    %202 = vector.shape_cast %201 : vector<1x8x8xbf16> to vector<8x8xbf16>
    %cst_217 = arith.constant dense<0.000000e+00> : vector<8x324xf32>
    %203 = tpu.matmul %202, %200, %cst_217 {dimension_numbers = #tpu.dot_dimension_numbers<[1], [0], [0], [1], [0, 0, 1, 1], [], []>} : vector<8x8xbf16>, vector<8x324xbf16>, vector<8x324xf32> -> vector<8x324xf32>
    %204 = arith.addf %199, %203 : vector<8x324xf32>
    %c0_218 = arith.constant 0 : index
    %c38_219 = arith.constant 38 : index
    %205 = vector.load %arg10[%c0_218, %c38_219] : memref<8x362xbf16, #tpu.memory_space<vmem>>, vector<8x324xbf16>
    %c8_220 = arith.constant 8 : index
    %c0_221 = arith.constant 0 : index
    %c0_222 = arith.constant 0 : index
    %206 = vector.load %arg4[%c8_220, %c0_221, %c0_222] : memref<9x8x8xbf16, #tpu.memory_space<vmem>>, vector<1x8x8xbf16>
    %207 = vector.shape_cast %206 : vector<1x8x8xbf16> to vector<8x8xbf16>
    %cst_223 = arith.constant dense<0.000000e+00> : vector<8x324xf32>
    %208 = tpu.matmul %207, %205, %cst_223 {dimension_numbers = #tpu.dot_dimension_numbers<[1], [0], [0], [1], [0, 0, 1, 1], [], []>} : vector<8x8xbf16>, vector<8x324xbf16>, vector<8x324xf32> -> vector<8x324xf32>
    %209 = arith.addf %204, %208 : vector<8x324xf32>
    %c0_224 = arith.constant 0 : index
    %c38_225 = arith.constant 38 : index
    %210 = vector.load %arg11[%c0_224, %c38_225] : memref<8x362xbf16, #tpu.memory_space<vmem>>, vector<8x324xbf16>
    %c8_226 = arith.constant 8 : index
    %c0_227 = arith.constant 0 : index
    %c0_228 = arith.constant 0 : index
    %211 = vector.load %arg5[%c8_226, %c0_227, %c0_228] : memref<9x8x8xbf16, #tpu.memory_space<vmem>>, vector<1x8x8xbf16>
    %212 = vector.shape_cast %211 : vector<1x8x8xbf16> to vector<8x8xbf16>
    %cst_229 = arith.constant dense<0.000000e+00> : vector<8x324xf32>
    %213 = tpu.matmul %212, %210, %cst_229 {dimension_numbers = #tpu.dot_dimension_numbers<[1], [0], [0], [1], [0, 0, 1, 1], [], []>} : vector<8x8xbf16>, vector<8x324xbf16>, vector<8x324xf32> -> vector<8x324xf32>
    %214 = arith.addf %209, %213 : vector<8x324xf32>
    %215 = vector.broadcast %122 : vector<8x1xf32> to vector<8x324xf32>
    %216 = arith.mulf %214, %215 : vector<8x324xf32>
    %217 = vector.broadcast %123 : vector<8x1xf32> to vector<8x324xf32>
    %218 = arith.addf %216, %217 : vector<8x324xf32>
    %cst_230 = arith.constant 0.000000e+00 : f32
    %219 = vector.broadcast %cst_230 : f32 to vector<8x324xf32>
    %220 = arith.maximumf %218, %219 : vector<8x324xf32>
    %221 = vector.broadcast %6 : vector<1x324xf32> to vector<8x324xf32>
    %222 = arith.mulf %220, %221 : vector<8x324xf32>
    %223 = arith.truncf %222 : vector<8x324xf32> to vector<8x324xbf16>
    %c0_231 = arith.constant 0 : index
    %c19_232 = arith.constant 19 : index
    %224 = vector.load %arg12[%c0_231, %c19_232] : memref<8x362xbf16, #tpu.memory_space<vmem>>, vector<8x324xbf16>
    tpu.vector_store %arg12[%c0_231, %c19_232], %223 {strides = array<i32>} : memref<8x362xbf16, #tpu.memory_space<vmem>>, vector<8x324xbf16>,
    %c0_233 = arith.constant 0 : index
    %c4_234 = arith.constant 4 : index
    %225 = vector.load %arg7[%c0_233, %c4_234] : memref<8x6xf32, #tpu.memory_space<vmem>>, vector<8x1xf32>
    %c0_235 = arith.constant 0 : index
    %c5_236 = arith.constant 5 : index
    %226 = vector.load %arg7[%c0_235, %c5_236] : memref<8x6xf32, #tpu.memory_space<vmem>>, vector<8x1xf32>
    %cst_237 = arith.constant 0.000000e+00 : f32
    %227 = vector.broadcast %cst_237 : f32 to vector<8x324xf32>
    %c0_238 = arith.constant 0 : index
    %c0_239 = arith.constant 0 : index
    %228 = vector.load %arg12[%c0_238, %c0_239] : memref<8x362xbf16, #tpu.memory_space<vmem>>, vector<8x324xbf16>
    %c0_240 = arith.constant 0 : index
    %c0_241 = arith.constant 0 : index
    %c0_242 = arith.constant 0 : index
    %229 = vector.load %arg6[%c0_240, %c0_241, %c0_242] : memref<9x8x8xbf16, #tpu.memory_space<vmem>>, vector<1x8x8xbf16>
    %230 = vector.shape_cast %229 : vector<1x8x8xbf16> to vector<8x8xbf16>
    %cst_243 = arith.constant dense<0.000000e+00> : vector<8x324xf32>
    %231 = tpu.matmul %230, %228, %cst_243 {dimension_numbers = #tpu.dot_dimension_numbers<[1], [0], [0], [1], [0, 0, 1, 1], [], []>} : vector<8x8xbf16>, vector<8x324xbf16>, vector<8x324xf32> -> vector<8x324xf32>
    %232 = arith.addf %227, %231 : vector<8x324xf32>
    %c0_244 = arith.constant 0 : index
    %c1_245 = arith.constant 1 : index
    %233 = vector.load %arg12[%c0_244, %c1_245] : memref<8x362xbf16, #tpu.memory_space<vmem>>, vector<8x324xbf16>
    %c1_246 = arith.constant 1 : index
    %c0_247 = arith.constant 0 : index
    %c0_248 = arith.constant 0 : index
    %234 = vector.load %arg6[%c1_246, %c0_247, %c0_248] : memref<9x8x8xbf16, #tpu.memory_space<vmem>>, vector<1x8x8xbf16>
    %235 = vector.shape_cast %234 : vector<1x8x8xbf16> to vector<8x8xbf16>
    %cst_249 = arith.constant dense<0.000000e+00> : vector<8x324xf32>
    %236 = tpu.matmul %235, %233, %cst_249 {dimension_numbers = #tpu.dot_dimension_numbers<[1], [0], [0], [1], [0, 0, 1, 1], [], []>} : vector<8x8xbf16>, vector<8x324xbf16>, vector<8x324xf32> -> vector<8x324xf32>
    %237 = arith.addf %232, %236 : vector<8x324xf32>
    %c0_250 = arith.constant 0 : index
    %c2_251 = arith.constant 2 : index
    %238 = vector.load %arg12[%c0_250, %c2_251] : memref<8x362xbf16, #tpu.memory_space<vmem>>, vector<8x324xbf16>
    %c2_252 = arith.constant 2 : index
    %c0_253 = arith.constant 0 : index
    %c0_254 = arith.constant 0 : index
    %239 = vector.load %arg6[%c2_252, %c0_253, %c0_254] : memref<9x8x8xbf16, #tpu.memory_space<vmem>>, vector<1x8x8xbf16>
    %240 = vector.shape_cast %239 : vector<1x8x8xbf16> to vector<8x8xbf16>
    %cst_255 = arith.constant dense<0.000000e+00> : vector<8x324xf32>
    %241 = tpu.matmul %240, %238, %cst_255 {dimension_numbers = #tpu.dot_dimension_numbers<[1], [0], [0], [1], [0, 0, 1, 1], [], []>} : vector<8x8xbf16>, vector<8x324xbf16>, vector<8x324xf32> -> vector<8x324xf32>
    %242 = arith.addf %237, %241 : vector<8x324xf32>
    %c0_256 = arith.constant 0 : index
    %c18_257 = arith.constant 18 : index
    %243 = vector.load %arg12[%c0_256, %c18_257] : memref<8x362xbf16, #tpu.memory_space<vmem>>, vector<8x324xbf16>
    %c3_258 = arith.constant 3 : index
    %c0_259 = arith.constant 0 : index
    %c0_260 = arith.constant 0 : index
    %244 = vector.load %arg6[%c3_258, %c0_259, %c0_260] : memref<9x8x8xbf16, #tpu.memory_space<vmem>>, vector<1x8x8xbf16>
    %245 = vector.shape_cast %244 : vector<1x8x8xbf16> to vector<8x8xbf16>
    %cst_261 = arith.constant dense<0.000000e+00> : vector<8x324xf32>
    %246 = tpu.matmul %245, %243, %cst_261 {dimension_numbers = #tpu.dot_dimension_numbers<[1], [0], [0], [1], [0, 0, 1, 1], [], []>} : vector<8x8xbf16>, vector<8x324xbf16>, vector<8x324xf32> -> vector<8x324xf32>
    %247 = arith.addf %242, %246 : vector<8x324xf32>
    %c0_262 = arith.constant 0 : index
    %c19_263 = arith.constant 19 : index
    %248 = vector.load %arg12[%c0_262, %c19_263] : memref<8x362xbf16, #tpu.memory_space<vmem>>, vector<8x324xbf16>
    %c4_264 = arith.constant 4 : index
    %c0_265 = arith.constant 0 : index
    %c0_266 = arith.constant 0 : index
    %249 = vector.load %arg6[%c4_264, %c0_265, %c0_266] : memref<9x8x8xbf16, #tpu.memory_space<vmem>>, vector<1x8x8xbf16>
    %250 = vector.shape_cast %249 : vector<1x8x8xbf16> to vector<8x8xbf16>
    %cst_267 = arith.constant dense<0.000000e+00> : vector<8x324xf32>
    %251 = tpu.matmul %250, %248, %cst_267 {dimension_numbers = #tpu.dot_dimension_numbers<[1], [0], [0], [1], [0, 0, 1, 1], [], []>} : vector<8x8xbf16>, vector<8x324xbf16>, vector<8x324xf32> -> vector<8x324xf32>
    %252 = arith.addf %247, %251 : vector<8x324xf32>
    %c0_268 = arith.constant 0 : index
    %c20_269 = arith.constant 20 : index
    %253 = vector.load %arg12[%c0_268, %c20_269] : memref<8x362xbf16, #tpu.memory_space<vmem>>, vector<8x324xbf16>
    %c5_270 = arith.constant 5 : index
    %c0_271 = arith.constant 0 : index
    %c0_272 = arith.constant 0 : index
    %254 = vector.load %arg6[%c5_270, %c0_271, %c0_272] : memref<9x8x8xbf16, #tpu.memory_space<vmem>>, vector<1x8x8xbf16>
    %255 = vector.shape_cast %254 : vector<1x8x8xbf16> to vector<8x8xbf16>
    %cst_273 = arith.constant dense<0.000000e+00> : vector<8x324xf32>
    %256 = tpu.matmul %255, %253, %cst_273 {dimension_numbers = #tpu.dot_dimension_numbers<[1], [0], [0], [1], [0, 0, 1, 1], [], []>} : vector<8x8xbf16>, vector<8x324xbf16>, vector<8x324xf32> -> vector<8x324xf32>
    %257 = arith.addf %252, %256 : vector<8x324xf32>
    %c0_274 = arith.constant 0 : index
    %c36_275 = arith.constant 36 : index
    %258 = vector.load %arg12[%c0_274, %c36_275] : memref<8x362xbf16, #tpu.memory_space<vmem>>, vector<8x324xbf16>
    %c6_276 = arith.constant 6 : index
    %c0_277 = arith.constant 0 : index
    %c0_278 = arith.constant 0 : index
    %259 = vector.load %arg6[%c6_276, %c0_277, %c0_278] : memref<9x8x8xbf16, #tpu.memory_space<vmem>>, vector<1x8x8xbf16>
    %260 = vector.shape_cast %259 : vector<1x8x8xbf16> to vector<8x8xbf16>
    %cst_279 = arith.constant dense<0.000000e+00> : vector<8x324xf32>
    %261 = tpu.matmul %260, %258, %cst_279 {dimension_numbers = #tpu.dot_dimension_numbers<[1], [0], [0], [1], [0, 0, 1, 1], [], []>} : vector<8x8xbf16>, vector<8x324xbf16>, vector<8x324xf32> -> vector<8x324xf32>
    %262 = arith.addf %257, %261 : vector<8x324xf32>
    %c0_280 = arith.constant 0 : index
    %c37_281 = arith.constant 37 : index
    %263 = vector.load %arg12[%c0_280, %c37_281] : memref<8x362xbf16, #tpu.memory_space<vmem>>, vector<8x324xbf16>
    %c7_282 = arith.constant 7 : index
    %c0_283 = arith.constant 0 : index
    %c0_284 = arith.constant 0 : index
    %264 = vector.load %arg6[%c7_282, %c0_283, %c0_284] : memref<9x8x8xbf16, #tpu.memory_space<vmem>>, vector<1x8x8xbf16>
    %265 = vector.shape_cast %264 : vector<1x8x8xbf16> to vector<8x8xbf16>
    %cst_285 = arith.constant dense<0.000000e+00> : vector<8x324xf32>
    %266 = tpu.matmul %265, %263, %cst_285 {dimension_numbers = #tpu.dot_dimension_numbers<[1], [0], [0], [1], [0, 0, 1, 1], [], []>} : vector<8x8xbf16>, vector<8x324xbf16>, vector<8x324xf32> -> vector<8x324xf32>
    %267 = arith.addf %262, %266 : vector<8x324xf32>
    %c0_286 = arith.constant 0 : index
    %c38_287 = arith.constant 38 : index
    %268 = vector.load %arg12[%c0_286, %c38_287] : memref<8x362xbf16, #tpu.memory_space<vmem>>, vector<8x324xbf16>
    %c8_288 = arith.constant 8 : index
    %c0_289 = arith.constant 0 : index
    %c0_290 = arith.constant 0 : index
    %269 = vector.load %arg6[%c8_288, %c0_289, %c0_290] : memref<9x8x8xbf16, #tpu.memory_space<vmem>>, vector<1x8x8xbf16>
    %270 = vector.shape_cast %269 : vector<1x8x8xbf16> to vector<8x8xbf16>
    %cst_291 = arith.constant dense<0.000000e+00> : vector<8x324xf32>
    %271 = tpu.matmul %270, %268, %cst_291 {dimension_numbers = #tpu.dot_dimension_numbers<[1], [0], [0], [1], [0, 0, 1, 1], [], []>} : vector<8x8xbf16>, vector<8x324xbf16>, vector<8x324xf32> -> vector<8x324xf32>
    %272 = arith.addf %267, %271 : vector<8x324xf32>
    %273 = vector.broadcast %225 : vector<8x1xf32> to vector<8x324xf32>
    %274 = arith.mulf %272, %273 : vector<8x324xf32>
    %275 = vector.broadcast %226 : vector<8x1xf32> to vector<8x324xf32>
    %276 = arith.addf %274, %275 : vector<8x324xf32>
    %cst_292 = arith.constant 0.000000e+00 : f32
    %277 = vector.broadcast %cst_292 : f32 to vector<8x324xf32>
    %278 = arith.maximumf %276, %277 : vector<8x324xf32>
    %279 = vector.broadcast %6 : vector<1x324xf32> to vector<8x324xf32>
    %280 = arith.mulf %278, %279 : vector<8x324xf32>
    %281 = vector.extract_strided_slice %280 {offsets = [0, 19], sizes = [8, 16], strides = [1, 1]} : vector<8x324xf32> to vector<8x16xf32>
    %c0_293 = arith.constant 0 : index
    %c0_294 = arith.constant 0 : index
    %c0_295 = arith.constant 0 : index
    %282 = vector.load %arg9[%c0_293, %c0_294, %c0_295] : memref<1x8x256xf32, #tpu.memory_space<vmem>>, vector<1x8x16xf32>
    %283 = vector.shape_cast %282 : vector<1x8x16xf32> to vector<8x16xf32>
    %284 = vector.shape_cast %281 : vector<8x16xf32> to vector<1x8x16xf32>
    tpu.vector_store %arg9[%c0_293, %c0_294, %c0_295], %284 {strides = array<i32>} : memref<1x8x256xf32, #tpu.memory_space<vmem>>, vector<1x8x16xf32>,
    %285 = vector.extract_strided_slice %280 {offsets = [0, 37], sizes = [8, 16], strides = [1, 1]} : vector<8x324xf32> to vector<8x16xf32>
    %c0_296 = arith.constant 0 : index
    %c0_297 = arith.constant 0 : index
    %c16_298 = arith.constant 16 : index
    %286 = vector.load %arg9[%c0_296, %c0_297, %c16_298] : memref<1x8x256xf32, #tpu.memory_space<vmem>>, vector<1x8x16xf32>
    %287 = vector.shape_cast %286 : vector<1x8x16xf32> to vector<8x16xf32>
    %288 = vector.shape_cast %285 : vector<8x16xf32> to vector<1x8x16xf32>
    tpu.vector_store %arg9[%c0_296, %c0_297, %c16_298], %288 {strides = array<i32>} : memref<1x8x256xf32, #tpu.memory_space<vmem>>, vector<1x8x16xf32>,
    %289 = vector.extract_strided_slice %280 {offsets = [0, 55], sizes = [8, 16], strides = [1, 1]} : vector<8x324xf32> to vector<8x16xf32>
    %c0_299 = arith.constant 0 : index
    %c0_300 = arith.constant 0 : index
    %c32_301 = arith.constant 32 : index
    %290 = vector.load %arg9[%c0_299, %c0_300, %c32_301] : memref<1x8x256xf32, #tpu.memory_space<vmem>>, vector<1x8x16xf32>
    %291 = vector.shape_cast %290 : vector<1x8x16xf32> to vector<8x16xf32>
    %292 = vector.shape_cast %289 : vector<8x16xf32> to vector<1x8x16xf32>
    tpu.vector_store %arg9[%c0_299, %c0_300, %c32_301], %292 {strides = array<i32>} : memref<1x8x256xf32, #tpu.memory_space<vmem>>, vector<1x8x16xf32>,
    %293 = vector.extract_strided_slice %280 {offsets = [0, 73], sizes = [8, 16], strides = [1, 1]} : vector<8x324xf32> to vector<8x16xf32>
    %c0_302 = arith.constant 0 : index
    %c0_303 = arith.constant 0 : index
    %c48_304 = arith.constant 48 : index
    %294 = vector.load %arg9[%c0_302, %c0_303, %c48_304] : memref<1x8x256xf32, #tpu.memory_space<vmem>>, vector<1x8x16xf32>
    %295 = vector.shape_cast %294 : vector<1x8x16xf32> to vector<8x16xf32>
    %296 = vector.shape_cast %293 : vector<8x16xf32> to vector<1x8x16xf32>
    tpu.vector_store %arg9[%c0_302, %c0_303, %c48_304], %296 {strides = array<i32>} : memref<1x8x256xf32, #tpu.memory_space<vmem>>, vector<1x8x16xf32>,
    %297 = vector.extract_strided_slice %280 {offsets = [0, 91], sizes = [8, 16], strides = [1, 1]} : vector<8x324xf32> to vector<8x16xf32>
    %c0_305 = arith.constant 0 : index
    %c0_306 = arith.constant 0 : index
    %c64_307 = arith.constant 64 : index
    %298 = vector.load %arg9[%c0_305, %c0_306, %c64_307] : memref<1x8x256xf32, #tpu.memory_space<vmem>>, vector<1x8x16xf32>
    %299 = vector.shape_cast %298 : vector<1x8x16xf32> to vector<8x16xf32>
    %300 = vector.shape_cast %297 : vector<8x16xf32> to vector<1x8x16xf32>
    tpu.vector_store %arg9[%c0_305, %c0_306, %c64_307], %300 {strides = array<i32>} : memref<1x8x256xf32, #tpu.memory_space<vmem>>, vector<1x8x16xf32>,
    %301 = vector.extract_strided_slice %280 {offsets = [0, 109], sizes = [8, 16], strides = [1, 1]} : vector<8x324xf32> to vector<8x16xf32>
    %c0_308 = arith.constant 0 : index
    %c0_309 = arith.constant 0 : index
    %c80_310 = arith.constant 80 : index
    %302 = vector.load %arg9[%c0_308, %c0_309, %c80_310] : memref<1x8x256xf32, #tpu.memory_space<vmem>>, vector<1x8x16xf32>
    %303 = vector.shape_cast %302 : vector<1x8x16xf32> to vector<8x16xf32>
    %304 = vector.shape_cast %301 : vector<8x16xf32> to vector<1x8x16xf32>
    tpu.vector_store %arg9[%c0_308, %c0_309, %c80_310], %304 {strides = array<i32>} : memref<1x8x256xf32, #tpu.memory_space<vmem>>, vector<1x8x16xf32>,
    %305 = vector.extract_strided_slice %280 {offsets = [0, 127], sizes = [8, 16], strides = [1, 1]} : vector<8x324xf32> to vector<8x16xf32>
    %c0_311 = arith.constant 0 : index
    %c0_312 = arith.constant 0 : index
    %c96_313 = arith.constant 96 : index
    %306 = vector.load %arg9[%c0_311, %c0_312, %c96_313] : memref<1x8x256xf32, #tpu.memory_space<vmem>>, vector<1x8x16xf32>
    %307 = vector.shape_cast %306 : vector<1x8x16xf32> to vector<8x16xf32>
    %308 = vector.shape_cast %305 : vector<8x16xf32> to vector<1x8x16xf32>
    tpu.vector_store %arg9[%c0_311, %c0_312, %c96_313], %308 {strides = array<i32>} : memref<1x8x256xf32, #tpu.memory_space<vmem>>, vector<1x8x16xf32>,
    %309 = vector.extract_strided_slice %280 {offsets = [0, 145], sizes = [8, 16], strides = [1, 1]} : vector<8x324xf32> to vector<8x16xf32>
    %c0_314 = arith.constant 0 : index
    %c0_315 = arith.constant 0 : index
    %c112_316 = arith.constant 112 : index
    %310 = vector.load %arg9[%c0_314, %c0_315, %c112_316] : memref<1x8x256xf32, #tpu.memory_space<vmem>>, vector<1x8x16xf32>
    %311 = vector.shape_cast %310 : vector<1x8x16xf32> to vector<8x16xf32>
    %312 = vector.shape_cast %309 : vector<8x16xf32> to vector<1x8x16xf32>
    tpu.vector_store %arg9[%c0_314, %c0_315, %c112_316], %312 {strides = array<i32>} : memref<1x8x256xf32, #tpu.memory_space<vmem>>, vector<1x8x16xf32>,
    %313 = vector.extract_strided_slice %280 {offsets = [0, 163], sizes = [8, 16], strides = [1, 1]} : vector<8x324xf32> to vector<8x16xf32>
    %c0_317 = arith.constant 0 : index
    %c0_318 = arith.constant 0 : index
    %c128_319 = arith.constant 128 : index
    %314 = vector.load %arg9[%c0_317, %c0_318, %c128_319] : memref<1x8x256xf32, #tpu.memory_space<vmem>>, vector<1x8x16xf32>
    %315 = vector.shape_cast %314 : vector<1x8x16xf32> to vector<8x16xf32>
    %316 = vector.shape_cast %313 : vector<8x16xf32> to vector<1x8x16xf32>
    tpu.vector_store %arg9[%c0_317, %c0_318, %c128_319], %316 {strides = array<i32>} : memref<1x8x256xf32, #tpu.memory_space<vmem>>, vector<1x8x16xf32>,
    %317 = vector.extract_strided_slice %280 {offsets = [0, 181], sizes = [8, 16], strides = [1, 1]} : vector<8x324xf32> to vector<8x16xf32>
    %c0_320 = arith.constant 0 : index
    %c0_321 = arith.constant 0 : index
    %c144_322 = arith.constant 144 : index
    %318 = vector.load %arg9[%c0_320, %c0_321, %c144_322] : memref<1x8x256xf32, #tpu.memory_space<vmem>>, vector<1x8x16xf32>
    %319 = vector.shape_cast %318 : vector<1x8x16xf32> to vector<8x16xf32>
    %320 = vector.shape_cast %317 : vector<8x16xf32> to vector<1x8x16xf32>
    tpu.vector_store %arg9[%c0_320, %c0_321, %c144_322], %320 {strides = array<i32>} : memref<1x8x256xf32, #tpu.memory_space<vmem>>, vector<1x8x16xf32>,
    %321 = vector.extract_strided_slice %280 {offsets = [0, 199], sizes = [8, 16], strides = [1, 1]} : vector<8x324xf32> to vector<8x16xf32>
    %c0_323 = arith.constant 0 : index
    %c0_324 = arith.constant 0 : index
    %c160_325 = arith.constant 160 : index
    %322 = vector.load %arg9[%c0_323, %c0_324, %c160_325] : memref<1x8x256xf32, #tpu.memory_space<vmem>>, vector<1x8x16xf32>
    %323 = vector.shape_cast %322 : vector<1x8x16xf32> to vector<8x16xf32>
    %324 = vector.shape_cast %321 : vector<8x16xf32> to vector<1x8x16xf32>
    tpu.vector_store %arg9[%c0_323, %c0_324, %c160_325], %324 {strides = array<i32>} : memref<1x8x256xf32, #tpu.memory_space<vmem>>, vector<1x8x16xf32>,
    %325 = vector.extract_strided_slice %280 {offsets = [0, 217], sizes = [8, 16], strides = [1, 1]} : vector<8x324xf32> to vector<8x16xf32>
    %c0_326 = arith.constant 0 : index
    %c0_327 = arith.constant 0 : index
    %c176_328 = arith.constant 176 : index
    %326 = vector.load %arg9[%c0_326, %c0_327, %c176_328] : memref<1x8x256xf32, #tpu.memory_space<vmem>>, vector<1x8x16xf32>
    %327 = vector.shape_cast %326 : vector<1x8x16xf32> to vector<8x16xf32>
    %328 = vector.shape_cast %325 : vector<8x16xf32> to vector<1x8x16xf32>
    tpu.vector_store %arg9[%c0_326, %c0_327, %c176_328], %328 {strides = array<i32>} : memref<1x8x256xf32, #tpu.memory_space<vmem>>, vector<1x8x16xf32>,
    %329 = vector.extract_strided_slice %280 {offsets = [0, 235], sizes = [8, 16], strides = [1, 1]} : vector<8x324xf32> to vector<8x16xf32>
    %c0_329 = arith.constant 0 : index
    %c0_330 = arith.constant 0 : index
    %c192_331 = arith.constant 192 : index
    %330 = vector.load %arg9[%c0_329, %c0_330, %c192_331] : memref<1x8x256xf32, #tpu.memory_space<vmem>>, vector<1x8x16xf32>
    %331 = vector.shape_cast %330 : vector<1x8x16xf32> to vector<8x16xf32>
    %332 = vector.shape_cast %329 : vector<8x16xf32> to vector<1x8x16xf32>
    tpu.vector_store %arg9[%c0_329, %c0_330, %c192_331], %332 {strides = array<i32>} : memref<1x8x256xf32, #tpu.memory_space<vmem>>, vector<1x8x16xf32>,
    %333 = vector.extract_strided_slice %280 {offsets = [0, 253], sizes = [8, 16], strides = [1, 1]} : vector<8x324xf32> to vector<8x16xf32>
    %c0_332 = arith.constant 0 : index
    %c0_333 = arith.constant 0 : index
    %c208_334 = arith.constant 208 : index
    %334 = vector.load %arg9[%c0_332, %c0_333, %c208_334] : memref<1x8x256xf32, #tpu.memory_space<vmem>>, vector<1x8x16xf32>
    %335 = vector.shape_cast %334 : vector<1x8x16xf32> to vector<8x16xf32>
    %336 = vector.shape_cast %333 : vector<8x16xf32> to vector<1x8x16xf32>
    tpu.vector_store %arg9[%c0_332, %c0_333, %c208_334], %336 {strides = array<i32>} : memref<1x8x256xf32, #tpu.memory_space<vmem>>, vector<1x8x16xf32>,
    %337 = vector.extract_strided_slice %280 {offsets = [0, 271], sizes = [8, 16], strides = [1, 1]} : vector<8x324xf32> to vector<8x16xf32>
    %c0_335 = arith.constant 0 : index
    %c0_336 = arith.constant 0 : index
    %c224_337 = arith.constant 224 : index
    %338 = vector.load %arg9[%c0_335, %c0_336, %c224_337] : memref<1x8x256xf32, #tpu.memory_space<vmem>>, vector<1x8x16xf32>
    %339 = vector.shape_cast %338 : vector<1x8x16xf32> to vector<8x16xf32>
    %340 = vector.shape_cast %337 : vector<8x16xf32> to vector<1x8x16xf32>
    tpu.vector_store %arg9[%c0_335, %c0_336, %c224_337], %340 {strides = array<i32>} : memref<1x8x256xf32, #tpu.memory_space<vmem>>, vector<1x8x16xf32>,
    %341 = vector.extract_strided_slice %280 {offsets = [0, 289], sizes = [8, 16], strides = [1, 1]} : vector<8x324xf32> to vector<8x16xf32>
    %c0_338 = arith.constant 0 : index
    %c0_339 = arith.constant 0 : index
    %c240_340 = arith.constant 240 : index
    %342 = vector.load %arg9[%c0_338, %c0_339, %c240_340] : memref<1x8x256xf32, #tpu.memory_space<vmem>>, vector<1x8x16xf32>
    %343 = vector.shape_cast %342 : vector<1x8x16xf32> to vector<8x16xf32>
    %344 = vector.shape_cast %341 : vector<8x16xf32> to vector<1x8x16xf32>
    tpu.vector_store %arg9[%c0_338, %c0_339, %c240_340], %344 {strides = array<i32>} : memref<1x8x256xf32, #tpu.memory_space<vmem>>, vector<1x8x16xf32>,
    return
  }
  func.func @transform_0(%arg0: i32) -> (i32, i32, i32) {
    %c0_i32 = arith.constant 0 : i32
    %c0_i32_0 = arith.constant 0 : i32
    %c0_i32_1 = arith.constant 0 : i32
    return %arg0, %c0_i32, %c0_i32_0 : i32, i32, i32
  }
  func.func @transform_1(%arg0: i32) -> (i32, i32, i32) {
    %c0_i32 = arith.constant 0 : i32
    %c0_i32_0 = arith.constant 0 : i32
    %c0_i32_1 = arith.constant 0 : i32
    return %arg0, %c0_i32, %c0_i32_0 : i32, i32, i32
  }
  func.func @transform_2(%arg0: i32) -> (i32, i32, i32) {
    %c0_i32 = arith.constant 0 : i32
    %c0_i32_0 = arith.constant 0 : i32
    %c0_i32_1 = arith.constant 0 : i32
    %c0_i32_2 = arith.constant 0 : i32
    return %c0_i32, %c0_i32_0, %c0_i32_1 : i32, i32, i32
  }
  func.func @transform_3(%arg0: i32) -> (i32, i32, i32) {
    %c0_i32 = arith.constant 0 : i32
    %c0_i32_0 = arith.constant 0 : i32
    %c0_i32_1 = arith.constant 0 : i32
    %c0_i32_2 = arith.constant 0 : i32
    return %c0_i32, %c0_i32_0, %c0_i32_1 : i32, i32, i32
  }
  func.func @transform_4(%arg0: i32) -> (i32, i32, i32) {
    %c0_i32 = arith.constant 0 : i32
    %c0_i32_0 = arith.constant 0 : i32
    %c0_i32_1 = arith.constant 0 : i32
    %c0_i32_2 = arith.constant 0 : i32
    return %c0_i32, %c0_i32_0, %c0_i32_1 : i32, i32, i32
  }
  func.func @transform_5(%arg0: i32) -> (i32, i32, i32) {
    %c0_i32 = arith.constant 0 : i32
    %c0_i32_0 = arith.constant 0 : i32
    %c0_i32_1 = arith.constant 0 : i32
    %c0_i32_2 = arith.constant 0 : i32
    return %c0_i32, %c0_i32_0, %c0_i32_1 : i32, i32, i32
  }
  func.func @transform_6(%arg0: i32) -> (i32, i32) {
    %c0_i32 = arith.constant 0 : i32
    %c0_i32_0 = arith.constant 0 : i32
    %c0_i32_1 = arith.constant 0 : i32
    return %c0_i32, %c0_i32_0 : i32, i32
  }
  func.func @transform_7(%arg0: i32) -> (i32, i32) {
    %c0_i32 = arith.constant 0 : i32
    %c0_i32_0 = arith.constant 0 : i32
    %c0_i32_1 = arith.constant 0 : i32
    return %c0_i32, %c0_i32_0 : i32, i32
  }
  func.func @transform_8(%arg0: i32) -> (i32, i32, i32) {
    %c0_i32 = arith.constant 0 : i32
    %c0_i32_0 = arith.constant 0 : i32
    %c0_i32_1 = arith.constant 0 : i32
    return %arg0, %c0_i32, %c0_i32_0 : i32, i32, i32
  }
}

</mosaic_0001>

<llo_original>
// kernel: upblock2d_forward.1
$region0: #{upblock2d_forward.1}
  #allocation0 [shape = 'u32[]', space=smem, size = 0x4, offset = 0x4, fixed_abs, tag = 'smem constant byte address 0x4 - core index']
  #allocation1 [shape = 'u32[144,128]{1,0:T(1,128)}', space=vmem, size = 0x12000, scoped, tag = 'internal scratch']
  #allocation2 [shape = 'bf16[8,362]{1,0:T(8,128)(2,1)}', space=vmem, size = 0x1800, scoped, tag = 'scratch operand']
  #allocation3 [shape = 'bf16[8,362]{1,0:T(8,128)(2,1)}', space=vmem, size = 0x1800, scoped, tag = 'scratch operand']
  #allocation4 [shape = 'bf16[8,362]{1,0:T(8,128)(2,1)}', space=vmem, size = 0x1800, scoped, tag = 'scratch operand']
  %s0 = inlined_call_operand.vmem [shape: bf16[2,4,362], index: 0, kind: input, shape index: {}]
  %s1 = inlined_call_operand.vmem [shape: bf16[2,8,256], index: 1, kind: input, shape index: {}]
  %s2 = inlined_call_operand.vmem [shape: bf16[9,8,4], index: 2, kind: input, shape index: {}]
  %s3 = inlined_call_operand.vmem [shape: bf16[9,8,8], index: 3, kind: input, shape index: {}]
  %s4 = inlined_call_operand.vmem [shape: bf16[9,8,8], index: 4, kind: input, shape index: {}]
  %s5 = inlined_call_operand.vmem [shape: bf16[9,8,8], index: 5, kind: input, shape index: {}]
  %s6 = inlined_call_operand.vmem [shape: f32[8,6], index: 6, kind: input, shape index: {}]
  %s7 = inlined_call_operand.vmem [shape: f32[1,324], index: 7, kind: input, shape index: {}]
  %s8 = inlined_call_operand.vmem [shape: f32[2,8,256], index: 8, kind: output, shape index: {}]
  %s9 = sld [smem:[#allocation0]]
  $region65: #{upblock2d_forward.1} parent=0
    _
  %s11 = ssub.s32 1, %s9
  %s12 = scalar_select 0, %s11, %s9
  loop: start=0, step=1, limit=4
  $region2: #{upblock2d_forward.1} parent=0 // loop_pre_header
    _
  $region3: #{upblock2d_forward.1} parent=0 // loop_header
    %s14 = sphi 0, %s18
    %p15 = scmp.ge.s32.totalorder %s14, 4
    %s24 = sphi 0, %s26
    %s27 = sphi 0, %s24
    %s28 = sphi 0, %s27
    %s44 = sphi 0, %s28
    %s50 = sphi 0, %s52
    %s53 = sphi 0, %s50
    %s54 = sphi 0, %s53
    %s70 = sphi 0, %s54
    %s74 = sphi 0, %s74
    %s76 = sphi 0, %s74
    %s77 = sphi 0, %s76
    %s91 = sphi 0, %s77
    %s95 = sphi 0, %s95
    %s97 = sphi 0, %s95
    %s98 = sphi 0, %s97
    %s112 = sphi 0, %s98
    %s116 = sphi 0, %s116
    %s118 = sphi 0, %s116
    %s119 = sphi 0, %s118
    %s133 = sphi 0, %s119
    %s137 = sphi 0, %s137
    %s139 = sphi 0, %s137
    %s140 = sphi 0, %s139
    %s154 = sphi 0, %s140
    %s158 = sphi 0, %s158
    %s160 = sphi 0, %s158
    %s161 = sphi 0, %s160
    %s175 = sphi 0, %s161
    %s179 = sphi 0, %s179
    %s181 = sphi 0, %s179
    %s182 = sphi 0, %s181
    %s196 = sphi 0, %s182
    %s202 = sphi 0, %s204
    %s205 = sphi 0, %s202
    %s206 = sphi 0, %s205
    %s222 = sphi 0, %s206
  $region4: #{upblock2d_forward.1} parent=0 // loop_header_branch
    %17 = sbr.rel (%p15) target = $region8
  $region5: #{upblock2d_forward.1} parent=0 // loop_body
    %s19 = ssub.s32 %s14, 1
    %s20 = ssub.s32 %s14, 2
    %s21 = sadd.s32 %s14, 1
    %s22 = ssub.s32 %s14, %s21
    %p23 = scmp.eq.s32.totalorder %s22, 0
    %s25 = sadd.s32 %s24, 1
    %s26 = scalar_select %p23, %s24, %s25
    %p29 = pneg %p23
    %p30 = scmp.eq.s32.totalorder %s14, 1
    %p31 = por %p29, %p30
    %p32 = scmp.ne.s32.totalorder %s24, %s27
    %p33 = scmp.eq.s32.totalorder %s14, 0
    %p34 = por %p32, %p33
    %p35 = scmp.ne.s32.totalorder %s24, %s27
    %p36 = scmp.eq.s32.totalorder %s19, 1
    %p37 = por %p35, %p36
    %p38 = scmp.ne.s32.totalorder %s27, %s28
    %p39 = scmp.eq.s32.totalorder %s19, 0
    %p40 = por %p38, %p39
    %p41 = scmp.ne.s32.totalorder %s27, %s28
    %p42 = scmp.eq.s32.totalorder %s20, 1
    %p43 = por %p41, %p42
    %p45 = scmp.ne.s32.totalorder %s28, %s44
    %p46 = scmp.eq.s32.totalorder %s20, 0
    %p47 = por %p45, %p46
    %s48 = ssub.s32 %s14, %s21
    %p49 = scmp.eq.s32.totalorder %s48, 0
    %s51 = sadd.s32 %s50, 1
    %s52 = scalar_select %p49, %s50, %s51
    %p55 = pneg %p49
    %p56 = scmp.eq.s32.totalorder %s14, 1
    %p57 = por %p55, %p56
    %p58 = scmp.ne.s32.totalorder %s50, %s53
    %p59 = scmp.eq.s32.totalorder %s14, 0
    %p60 = por %p58, %p59
    %p61 = scmp.ne.s32.totalorder %s50, %s53
    %p62 = scmp.eq.s32.totalorder %s19, 1
    %p63 = por %p61, %p62
    %p64 = scmp.ne.s32.totalorder %s53, %s54
    %p65 = scmp.eq.s32.totalorder %s19, 0
    %p66 = por %p64, %p65
    %p67 = scmp.ne.s32.totalorder %s53, %s54
    %p68 = scmp.eq.s32.totalorder %s20, 1
    %p69 = por %p67, %p68
    %p71 = scmp.ne.s32.totalorder %s54, %s70
    %p72 = scmp.eq.s32.totalorder %s20, 0
    %p73 = por %p71, %p72
    %s75 = sadd.s32 %s74, 1
    %p78 = scmp.eq.s32.totalorder %s14, 1
    %p79 = scmp.ne.s32.totalorder %s74, %s76
    %p80 = scmp.eq.s32.totalorder %s14, 0
    %p81 = por %p79, %p80
    %p82 = scmp.ne.s32.totalorder %s74, %s76
    %p83 = scmp.eq.s32.totalorder %s19, 1
    %p84 = por %p82, %p83
    %p85 = scmp.ne.s32.totalorder %s76, %s77
    %p86 = scmp.eq.s32.totalorder %s19, 0
    %p87 = por %p85, %p86
    %p88 = scmp.ne.s32.totalorder %s76, %s77
    %p89 = scmp.eq.s32.totalorder %s20, 1
    %p90 = por %p88, %p89
    %p92 = scmp.ne.s32.totalorder %s77, %s91
    %p93 = scmp.eq.s32.totalorder %s20, 0
    %p94 = por %p92, %p93
    %s96 = sadd.s32 %s95, 1
    %p99 = scmp.eq.s32.totalorder %s14, 1
    %p100 = scmp.ne.s32.totalorder %s95, %s97
    %p101 = scmp.eq.s32.totalorder %s14, 0
    %p102 = por %p100, %p101
    %p103 = scmp.ne.s32.totalorder %s95, %s97
    %p104 = scmp.eq.s32.totalorder %s19, 1
    %p105 = por %p103, %p104
    %p106 = scmp.ne.s32.totalorder %s97, %s98
    %p107 = scmp.eq.s32.totalorder %s19, 0
    %p108 = por %p106, %p107
    %p109 = scmp.ne.s32.totalorder %s97, %s98
    %p110 = scmp.eq.s32.totalorder %s20, 1
    %p111 = por %p109, %p110
    %p113 = scmp.ne.s32.totalorder %s98, %s112
    %p114 = scmp.eq.s32.totalorder %s20, 0
    %p115 = por %p113, %p114
    %s117 = sadd.s32 %s116, 1
    %p120 = scmp.eq.s32.totalorder %s14, 1
    %p121 = scmp.ne.s32.totalorder %s116, %s118
    %p122 = scmp.eq.s32.totalorder %s14, 0
    %p123 = por %p121, %p122
    %p124 = scmp.ne.s32.totalorder %s116, %s118
    %p125 = scmp.eq.s32.totalorder %s19, 1
    %p126 = por %p124, %p125
    %p127 = scmp.ne.s32.totalorder %s118, %s119
    %p128 = scmp.eq.s32.totalorder %s19, 0
    %p129 = por %p127, %p128
    %p130 = scmp.ne.s32.totalorder %s118, %s119
    %p131 = scmp.eq.s32.totalorder %s20, 1
    %p132 = por %p130, %p131
    %p134 = scmp.ne.s32.totalorder %s119, %s133
    %p135 = scmp.eq.s32.totalorder %s20, 0
    %p136 = por %p134, %p135
    %s138 = sadd.s32 %s137, 1
    %p141 = scmp.eq.s32.totalorder %s14, 1
    %p142 = scmp.ne.s32.totalorder %s137, %s139
    %p143 = scmp.eq.s32.totalorder %s14, 0
    %p144 = por %p142, %p143
    %p145 = scmp.ne.s32.totalorder %s137, %s139
    %p146 = scmp.eq.s32.totalorder %s19, 1
    %p147 = por %p145, %p146
    %p148 = scmp.ne.s32.totalorder %s139, %s140
    %p149 = scmp.eq.s32.totalorder %s19, 0
    %p150 = por %p148, %p149
    %p151 = scmp.ne.s32.totalorder %s139, %s140
    %p152 = scmp.eq.s32.totalorder %s20, 1
    %p153 = por %p151, %p152
    %p155 = scmp.ne.s32.totalorder %s140, %s154
    %p156 = scmp.eq.s32.totalorder %s20, 0
    %p157 = por %p155, %p156
    %s159 = sadd.s32 %s158, 1
    %p162 = scmp.eq.s32.totalorder %s14, 1
    %p163 = scmp.ne.s32.totalorder %s158, %s160
    %p164 = scmp.eq.s32.totalorder %s14, 0
    %p165 = por %p163, %p164
    %p166 = scmp.ne.s32.totalorder %s158, %s160
    %p167 = scmp.eq.s32.totalorder %s19, 1
    %p168 = por %p166, %p167
    %p169 = scmp.ne.s32.totalorder %s160, %s161
    %p170 = scmp.eq.s32.totalorder %s19, 0
    %p171 = por %p169, %p170
    %p172 = scmp.ne.s32.totalorder %s160, %s161
    %p173 = scmp.eq.s32.totalorder %s20, 1
    %p174 = por %p172, %p173
    %p176 = scmp.ne.s32.totalorder %s161, %s175
    %p177 = scmp.eq.s32.totalorder %s20, 0
    %p178 = por %p176, %p177
    %s180 = sadd.s32 %s179, 1
    %p183 = scmp.eq.s32.totalorder %s14, 1
    %p184 = scmp.ne.s32.totalorder %s179, %s181
    %p185 = scmp.eq.s32.totalorder %s14, 0
    %p186 = por %p184, %p185
    %p187 = scmp.ne.s32.totalorder %s179, %s181
    %p188 = scmp.eq.s32.totalorder %s19, 1
    %p189 = por %p187, %p188
    %p190 = scmp.ne.s32.totalorder %s181, %s182
    %p191 = scmp.eq.s32.totalorder %s19, 0
    %p192 = por %p190, %p191
    %p193 = scmp.ne.s32.totalorder %s181, %s182
    %p194 = scmp.eq.s32.totalorder %s20, 1
    %p195 = por %p193, %p194
    %p197 = scmp.ne.s32.totalorder %s182, %s196
    %p198 = scmp.eq.s32.totalorder %s20, 0
    %p199 = por %p197, %p198
    %s200 = ssub.s32 %s14, %s21
    %p201 = scmp.eq.s32.totalorder %s200, 0
    %s203 = sadd.s32 %s202, 1
    %s204 = scalar_select %p201, %s202, %s203
    %p207 = pneg %p201
    %p208 = scmp.eq.s32.totalorder %s14, 1
    %p209 = por %p207, %p208
    %p210 = scmp.ne.s32.totalorder %s202, %s205
    %p211 = scmp.eq.s32.totalorder %s14, 0
    %p212 = por %p210, %p211
    %p213 = scmp.ne.s32.totalorder %s202, %s205
    %p214 = scmp.eq.s32.totalorder %s19, 1
    %p215 = por %p213, %p214
    %p216 = scmp.ne.s32.totalorder %s205, %s206
    %p217 = scmp.eq.s32.totalorder %s19, 0
    %p218 = por %p216, %p217
    %p219 = scmp.ne.s32.totalorder %s205, %s206
    %p220 = scmp.eq.s32.totalorder %s20, 1
    %p221 = por %p219, %p220
    %p223 = scmp.ne.s32.totalorder %s206, %s222
    %p224 = scmp.eq.s32.totalorder %s20, 0
    %p225 = por %p223, %p224
    %p226 = scmp.le.s32.totalorder 1, %s14
    %p227 = scmp.lt.s32.totalorder %s14, 3
    %p228 = pnand %p226, %p227
    %p229 = pneg %p228
    // Predicated region
    $region9: #{upblock2d_forward.1} parent=5 // pred_check
      _
    $region10: #{upblock2d_forward.1} parent=5 // pred_check_branch
      %231 = sbr.rel (%p228) target = $region12
    $region11: #{upblock2d_forward.1} parent=5 // pred_region
      %s232 = ssub.s32 %s14, 1
      // Predicated region
      $region13: #{upblock2d_forward.1} parent=11 // pred_check
        %p233 = pneg %p87
      $region14: #{upblock2d_forward.1} parent=11 // pred_check_branch
        %235 = sbr.rel (%p233) target = $region16
      $region15: #{upblock2d_forward.1} parent=11 // pred_region
        _
      $region16: #{upblock2d_forward.1} parent=11 // pred_fallthru
        _
      // Predicated region
      $region17: #{upblock2d_forward.1} parent=11 // pred_check
        %p236 = pneg %p108
      $region18: #{upblock2d_forward.1} parent=11 // pred_check_branch
        %238 = sbr.rel (%p236) target = $region20
      $region19: #{upblock2d_forward.1} parent=11 // pred_region
        _
      $region20: #{upblock2d_forward.1} parent=11 // pred_fallthru
        _
      // Predicated region
      $region21: #{upblock2d_forward.1} parent=11 // pred_check
        %p239 = pneg %p129
      $region22: #{upblock2d_forward.1} parent=11 // pred_check_branch
        %241 = sbr.rel (%p239) target = $region24
      $region23: #{upblock2d_forward.1} parent=11 // pred_region
        _
      $region24: #{upblock2d_forward.1} parent=11 // pred_fallthru
        _
      // Predicated region
      $region25: #{upblock2d_forward.1} parent=11 // pred_check
        %p242 = pneg %p150
      $region26: #{upblock2d_forward.1} parent=11 // pred_check_branch
        %244 = sbr.rel (%p242) target = $region28
      $region27: #{upblock2d_forward.1} parent=11 // pred_region
        _
      $region28: #{upblock2d_forward.1} parent=11 // pred_fallthru
        _
      // Predicated region
      $region29: #{upblock2d_forward.1} parent=11 // pred_check
        %p245 = pneg %p171
      $region30: #{upblock2d_forward.1} parent=11 // pred_check_branch
        %247 = sbr.rel (%p245) target = $region32
      $region31: #{upblock2d_forward.1} parent=11 // pred_region
        _
      $region32: #{upblock2d_forward.1} parent=11 // pred_fallthru
        _
      // Predicated region
      $region33: #{upblock2d_forward.1} parent=11 // pred_check
        %p248 = pneg %p192
      $region34: #{upblock2d_forward.1} parent=11 // pred_check_branch
        %250 = sbr.rel (%p248) target = $region36
      $region35: #{upblock2d_forward.1} parent=11 // pred_region
        _
      $region36: #{upblock2d_forward.1} parent=11 // pred_fallthru
        _
    $region12: #{upblock2d_forward.1} parent=5 // pred_fallthru
      _
    %p251 = scmp.lt.s32.totalorder %s14, 2
    // Predicated region
    $region37: #{upblock2d_forward.1} parent=5 // pred_check
      %p252 = pneg %p251
    $region38: #{upblock2d_forward.1} parent=5 // pred_check_branch
      %254 = sbr.rel (%p252) target = $region40
    $region39: #{upblock2d_forward.1} parent=5 // pred_region
      // Predicated region
      $region41: #{upblock2d_forward.1} parent=39 // pred_check
        %p255 = pneg %p34
      $region42: #{upblock2d_forward.1} parent=39 // pred_check_branch
        %257 = sbr.rel (%p255) target = $region44
      $region43: #{upblock2d_forward.1} parent=39 // pred_region
        %p258 = scmp.lt.s32.totalorder %s14, 1
        %s259 = scalar_select %p258, %s14, 1
        %s260 = smul.addr %s259, 3
        %s261 = smul.addr %s260, 2
        %s262 = scalar_lea.vmem %s0, %s261
      $region44: #{upblock2d_forward.1} parent=39 // pred_fallthru
        _
      // Predicated region
      $region45: #{upblock2d_forward.1} parent=39 // pred_check
        %p263 = pneg %p60
      $region46: #{upblock2d_forward.1} parent=39 // pred_check_branch
        %265 = sbr.rel (%p263) target = $region48
      $region47: #{upblock2d_forward.1} parent=39 // pred_region
        %p266 = scmp.lt.s32.totalorder %s14, 1
        %s267 = scalar_select %p266, %s14, 1
        %s268 = smul.addr %s267, 2
        %s269 = smul.addr %s268, 4
        %s270 = scalar_lea.vmem %s1, %s269
      $region48: #{upblock2d_forward.1} parent=39 // pred_fallthru
        _
    $region40: #{upblock2d_forward.1} parent=5 // pred_fallthru
      _
    %p271 = scmp.le.s32.totalorder 1, %s14
    %p272 = scmp.lt.s32.totalorder %s14, 3
    %p273 = pnand %p271, %p272
    %p274 = pneg %p273
    // Predicated region
    $region49: #{upblock2d_forward.1} parent=5 // pred_check
      _
    $region50: #{upblock2d_forward.1} parent=5 // pred_check_branch
      %276 = sbr.rel (%p273) target = $region52
    $region51: #{upblock2d_forward.1} parent=5 // pred_region
      %s277 = ssub.s32 %s14, 1
      %p278 = scmp.lt.s32.totalorder %s19, 1
      %s279 = scalar_select %p278, %s19, 1
      %s280 = smul.addr %s279, 3
      %s281 = smul.addr %s280, 2
      %s282 = scalar_lea.vmem %s0, %s281
      %p283 = pneg %p40
      %p284 = pneg %p37
      %p285 = scmp.lt.s32.totalorder %s19, 1
      %s286 = scalar_select %p285, %s19, 1
      %s287 = smul.addr %s286, 2
      %s288 = smul.addr %s287, 4
      %s289 = scalar_lea.vmem %s1, %s288
      %p290 = pneg %p66
      %p291 = pneg %p63
      %p292 = pneg %p87
      %p293 = pneg %p84
      %p294 = pneg %p108
      %p295 = pneg %p105
      %p296 = pneg %p129
      %p297 = pneg %p126
      %p298 = pneg %p150
      %p299 = pneg %p147
      %p300 = pneg %p171
      %p301 = pneg %p168
      %p302 = pneg %p192
      %p303 = pneg %p189
      %p304 = pneg %p218
      %p305 = pneg %p215
      %p306 = scmp.lt.s32.totalorder %s19, 1
      %s307 = scalar_select %p306, %s19, 1
      %s308 = smul.addr %s307, 2
      %s309 = smul.addr %s308, 8
      %s310 = scalar_lea.vmem %s8, %s309
      %p311 = scmp.lt.s32.totalorder %s19, 1
      %s312 = scalar_select %p311, %s19, 1
      %s313 = smul.addr %s312, 3
      %s314 = smul.addr %s313, 2
      %s315 = scalar_lea.vmem %s0, %s314
      %p316 = scmp.lt.s32.totalorder %s19, 1
      %s317 = scalar_select %p316, %s19, 1
      %s318 = smul.addr %s317, 2
      %s319 = smul.addr %s318, 4
      %s320 = scalar_lea.vmem %s1, %s319
      %p321 = scmp.lt.s32.totalorder %s19, 1
      %s322 = scalar_select %p321, %s19, 1
      %s323 = smul.addr %s322, 2
      %s324 = smul.addr %s323, 8
      %s325 = scalar_lea.vmem %s8, %s324
      %327 = vst [vmem:[#allocation2] sm:$0xff] 0
      %vm328 = vcmask 863232
      %329 = vst.msk [vmem:[#allocation2 + $0x8] sm:$0xf] %vm328, 0
      %330 = vst [vmem:[#allocation3] sm:$0xff] 0
      %331 = vst.msk [vmem:[#allocation3 + $0x8] sm:$0xf] %vm328, 0
      %332 = vst [vmem:[#allocation4] sm:$0xff] 0
      %333 = vst.msk [vmem:[#allocation4 + $0x8] sm:$0xf] %vm328, 0
      %v334 = vld [vmem:[%s7] sm:$0x7]
      %v335 = vld [vmem:[%s6] sm:$0xff]
      %v336 = vld [vmem:[%s315] sm:$0x3f]
      %v337 = vld [vmem:[%s2] sm:$0xf]
      %s338 = scalar_lea.vmem %s2, 4
      %v339 = vld [vmem:[%s338] sm:$0xf]
      %v341 = vcombine.high %v336, %v336
      %v343 = vunpack.c.l.s4 1983009808
      %v344 = vunpack.c.0.s8 %v343
      %v345 = vlaneseq
      %v346 = vshrl.u32 %v345, 7
      %v347 = vsub.s32 %v344, %v346
      %v348 = vrot.slane %v336, %v347
      %v350 = vunpack.c.l.s4 1983009808
      %v351 = vunpack.c.0.s8 %v350
      %v352 = vlaneseq
      %v353 = vshrl.u32 %v352, 7
      %v354 = vsub.s32 %v351, %v353
      %v355 = vrot.slane %v341, %v354
      %v356 = vcombine.high %v348, %v348
      %357 = vrot.lane.b32.xlu0 %v348, 127
      %v358 = vpop.permute.xlu0 %357
      %359 = vrot.lane.b32.xlu0 %v356, 127
      %v360 = vpop.permute.xlu0 %359
      %361 = vrot.lane.b32.xlu0 %v355, 127
      %v362 = vpop.permute.xlu0 %361
      %vm363 = vcmask 1039360
      %v364 = vsel %vm363, %v358, %v360
      %v365 = vsel %vm363, %v360, %v362
      %vm366 = vcmask 31744
      %v368 = vsel %vm366, %v339, 0
      %vm370 = vcmask 1041408
      %v372 = vsel %vm370, %v364, 0
      %v375 = vsel %vm370, %v365, 0
      %v378 = vsel %vm370, %v362, 0
      %380 = vmatprep.subr.bf16.mxu0 %v375
      %381 = vmatpush1.bf16.msra.mxu0 %v372
      %382 = vmatprep.subr.bf16.mxu0 0
      %383 = vmatpush1.bf16.msra.mxu0 0
      %384 = vmatprep.subr.bf16.mxu0 0
      %385 = vmatpush1.bf16.msra.mxu0 0
      %386 = vmatprep.subr.bf16.mxu0 0
      %387 = vmatpush1.bf16.msra.mxu0 0
      %388 = vmatprep.subr.bf16.mxu0 0
      %389 = vmatpush1.bf16.msra.mxu0 0
      %390 = vmatprep.subr.bf16.mxu0 0
      %391 = vmatpush1.bf16.msra.mxu0 0
      %392 = vmatprep.subr.bf16.mxu0 0
      %393 = vmatpush1.bf16.msra.mxu0 0
      %394 = vmatprep.subr.bf16.mxu0 0
      %395 = vmatpush1.bf16.msra.mxu0 0
      %396 = vmatprep.subr.bf16.mxu0 0
      %397 = vmatpush1.bf16.msra.mxu0 0
      %398 = vmatprep.subr.bf16.mxu0 0
      %399 = vmatpush1.bf16.msra.mxu0 0
      %400 = vmatprep.subr.bf16.mxu0 0
      %401 = vmatpush1.bf16.msra.mxu0 0
      %402 = vmatprep.subr.bf16.mxu0 0
      %403 = vmatpush1.bf16.msra.mxu0 0
      %404 = vmatprep.subr.bf16.mxu0 0
      %405 = vmatpush1.bf16.msra.mxu0 0
      %406 = vmatprep.subr.bf16.mxu0 0
      %407 = vmatpush1.bf16.msra.mxu0 0
      %408 = vmatprep.subr.bf16.mxu0 0
      %409 = vmatpush1.bf16.msra.mxu0 0
      %410 = vmatprep.subr.bf16.mxu0 0
      %411 = vmatpush1.bf16.msra.mxu0 0
      %412 = vmatprep.mubr.bf16.mxu0 0
      %413 = vmatmul.mubr.bf16.gmra.mrb[0].mxu0 %v368
      %v414 = vpop.f32.mrb[0].mxu0
      %v415 = vadd.f32 0.0, %v414
      %v416 = vpop.f32.mrb[0].mxu0
      %v417 = vadd.f32 0.0, %v416
      %v418 = vpop.f32.mrb[0].mxu0
      %v419 = vpop.f32.mrb[0].mxu0
      %420 = vdwg.mxu0
      %421 = vmatprep.subr.bf16.mxu0 0
      %422 = vmatpush1.bf16.msra.mxu0 %v378
      %423 = vmatprep.subr.bf16.mxu0 0
      %424 = vmatpush1.bf16.msra.mxu0 0
      %425 = vmatprep.subr.bf16.mxu0 0
      %426 = vmatpush1.bf16.msra.mxu0 0
      %427 = vmatprep.subr.bf16.mxu0 0
      %428 = vmatpush1.bf16.msra.mxu0 0
      %429 = vmatprep.subr.bf16.mxu0 0
      %430 = vmatpush1.bf16.msra.mxu0 0
      %431 = vmatprep.subr.bf16.mxu0 0
      %432 = vmatpush1.bf16.msra.mxu0 0
      %433 = vmatprep.subr.bf16.mxu0 0
      %434 = vmatpush1.bf16.msra.mxu0 0
      %435 = vmatprep.subr.bf16.mxu0 0
      %436 = vmatpush1.bf16.msra.mxu0 0
      %437 = vmatprep.subr.bf16.mxu0 0
      %438 = vmatpush1.bf16.msra.mxu0 0
      %439 = vmatprep.subr.bf16.mxu0 0
      %440 = vmatpush1.bf16.msra.mxu0 0
      %441 = vmatprep.subr.bf16.mxu0 0
      %442 = vmatpush1.bf16.msra.mxu0 0
      %443 = vmatprep.subr.bf16.mxu0 0
      %444 = vmatpush1.bf16.msra.mxu0 0
      %445 = vmatprep.subr.bf16.mxu0 0
      %446 = vmatpush1.bf16.msra.mxu0 0
      %447 = vmatprep.subr.bf16.mxu0 0
      %448 = vmatpush1.bf16.msra.mxu0 0
      %449 = vmatprep.subr.bf16.mxu0 0
      %450 = vmatpush1.bf16.msra.mxu0 0
      %451 = vmatprep.subr.bf16.mxu0 0
      %452 = vmatpush1.bf16.msra.mxu0 0
      %453 = vmatprep.mubr.bf16.mxu0 0
      %454 = vmatmul.mubr.bf16.gmra.mrb[0].mxu0 %v368
      %v455 = vpop.f32.mrb[0].mxu0
      %v456 = vadd.f32 0.0, %v455
      %v457 = vpop.f32.mrb[0].mxu0
      %v458 = vpop.f32.mrb[0].mxu0
      %v459 = vpop.f32.mrb[0].mxu0
      %460 = vdwg.mxu0
      %v462 = vsel %vm366, %v337, 0
      %v465 = vsel %vm370, %v348, 0
      %v468 = vsel %vm370, %v356, 0
      %v471 = vsel %vm370, %v355, 0
      %473 = vmatprep.subr.bf16.mxu0 %v468
      %474 = vmatpush1.bf16.msra.mxu0 %v465
      %475 = vmatprep.subr.bf16.mxu0 0
      %476 = vmatpush1.bf16.msra.mxu0 0
      %477 = vmatprep.subr.bf16.mxu0 0
      %478 = vmatpush1.bf16.msra.mxu0 0
      %479 = vmatprep.subr.bf16.mxu0 0
      %480 = vmatpush1.bf16.msra.mxu0 0
      %481 = vmatprep.subr.bf16.mxu0 0
      %482 = vmatpush1.bf16.msra.mxu0 0
      %483 = vmatprep.subr.bf16.mxu0 0
      %484 = vmatpush1.bf16.msra.mxu0 0
      %485 = vmatprep.subr.bf16.mxu0 0
      %486 = vmatpush1.bf16.msra.mxu0 0
      %487 = vmatprep.subr.bf16.mxu0 0
      %488 = vmatpush1.bf16.msra.mxu0 0
      %489 = vmatprep.subr.bf16.mxu0 0
      %490 = vmatpush1.bf16.msra.mxu0 0
      %491 = vmatprep.subr.bf16.mxu0 0
      %492 = vmatpush1.bf16.msra.mxu0 0
      %493 = vmatprep.subr.bf16.mxu0 0
      %494 = vmatpush1.bf16.msra.mxu0 0
      %495 = vmatprep.subr.bf16.mxu0 0
      %496 = vmatpush1.bf16.msra.mxu0 0
      %497 = vmatprep.subr.bf16.mxu0 0
      %498 = vmatpush1.bf16.msra.mxu0 0
      %499 = vmatprep.subr.bf16.mxu0 0
      %500 = vmatpush1.bf16.msra.mxu0 0
      %501 = vmatprep.subr.bf16.mxu0 0
      %502 = vmatpush1.bf16.msra.mxu0 0
      %503 = vmatprep.subr.bf16.mxu0 0
      %504 = vmatpush1.bf16.msra.mxu0 0
      %505 = vmatprep.mubr.bf16.mxu0 0
      %506 = vmatmul.mubr.bf16.gmra.mrb[0].mxu0 %v462
      %v507 = vpop.f32.mrb[0].mxu0
      %v508 = vadd.f32 %v415, %v507
      %v509 = vpop.f32.mrb[0].mxu0
      %v510 = vadd.f32 %v417, %v509
      %v511 = vpop.f32.mrb[0].mxu0
      %v512 = vpop.f32.mrb[0].mxu0
      %513 = vdwg.mxu0
      %514 = vmatprep.subr.bf16.mxu0 0
      %515 = vmatpush1.bf16.msra.mxu0 %v471
      %516 = vmatprep.subr.bf16.mxu0 0
      %517 = vmatpush1.bf16.msra.mxu0 0
      %518 = vmatprep.subr.bf16.mxu0 0
      %519 = vmatpush1.bf16.msra.mxu0 0
      %520 = vmatprep.subr.bf16.mxu0 0
      %521 = vmatpush1.bf16.msra.mxu0 0
      %522 = vmatprep.subr.bf16.mxu0 0
      %523 = vmatpush1.bf16.msra.mxu0 0
      %524 = vmatprep.subr.bf16.mxu0 0
      %525 = vmatpush1.bf16.msra.mxu0 0
      %526 = vmatprep.subr.bf16.mxu0 0
      %527 = vmatpush1.bf16.msra.mxu0 0
      %528 = vmatprep.subr.bf16.mxu0 0
      %529 = vmatpush1.bf16.msra.mxu0 0
      %530 = vmatprep.subr.bf16.mxu0 0
      %531 = vmatpush1.bf16.msra.mxu0 0
      %532 = vmatprep.subr.bf16.mxu0 0
      %533 = vmatpush1.bf16.msra.mxu0 0
      %534 = vmatprep.subr.bf16.mxu0 0
      %535 = vmatpush1.bf16.msra.mxu0 0
      %536 = vmatprep.subr.bf16.mxu0 0
      %537 = vmatpush1.bf16.msra.mxu0 0
      %538 = vmatprep.subr.bf16.mxu0 0
      %539 = vmatpush1.bf16.msra.mxu0 0
      %540 = vmatprep.subr.bf16.mxu0 0
      %541 = vmatpush1.bf16.msra.mxu0 0
      %542 = vmatprep.subr.bf16.mxu0 0
      %543 = vmatpush1.bf16.msra.mxu0 0
      %544 = vmatprep.subr.bf16.mxu0 0
      %545 = vmatpush1.bf16.msra.mxu0 0
      %546 = vmatprep.mubr.bf16.mxu0 0
      %547 = vmatmul.mubr.bf16.gmra.mrb[0].mxu0 %v462
      %v548 = vpop.f32.mrb[0].mxu0
      %v549 = vadd.f32 %v456, %v548
      %v550 = vpop.f32.mrb[0].mxu0
      %v551 = vpop.f32.mrb[0].mxu0
      %v552 = vpop.f32.mrb[0].mxu0
      %553 = vdwg.mxu0
      %v554 = vld [vmem:[%s315] sm:$0x3f]
      %s555 = scalar_lea.vmem %s2, 8
      %v556 = vld [vmem:[%s555] sm:$0xf]
      %v558 = vcombine.high %v554, %v554
      %v560 = vunpack.c.l.s4 1983009808
      %v561 = vunpack.c.0.s8 %v560
      %v562 = vlaneseq
      %v563 = vshrl.u32 %v562, 7
      %v564 = vsub.s32 %v561, %v563
      %v565 = vrot.slane %v554, %v564
      %v567 = vunpack.c.l.s4 1983009808
      %v568 = vunpack.c.0.s8 %v567
      %v569 = vlaneseq
      %v570 = vshrl.u32 %v569, 7
      %v571 = vsub.s32 %v568, %v570
      %v572 = vrot.slane %v558, %v571
      %v573 = vcombine.high %v565, %v565
      %574 = vrot.lane.b32.xlu0 %v565, 126
      %v575 = vpop.permute.xlu0 %574
      %576 = vrot.lane.b32.xlu0 %v573, 126
      %v577 = vpop.permute.xlu0 %576
      %578 = vrot.lane.b32.xlu0 %v572, 126
      %v579 = vpop.permute.xlu0 %578
      %vm580 = vcmask 1031168
      %v581 = vsel %vm580, %v575, %v577
      %v582 = vsel %vm580, %v577, %v579
      %v584 = vsel %vm366, %v556, 0
      %v587 = vsel %vm370, %v581, 0
      %v590 = vsel %vm370, %v582, 0
      %v593 = vsel %vm370, %v579, 0
      %595 = vmatprep.subr.bf16.mxu0 %v590
      %596 = vmatpush1.bf16.msra.mxu0 %v587
      %597 = vmatprep.subr.bf16.mxu0 0
      %598 = vmatpush1.bf16.msra.mxu0 0
      %599 = vmatprep.subr.bf16.mxu0 0
      %600 = vmatpush1.bf16.msra.mxu0 0
      %601 = vmatprep.subr.bf16.mxu0 0
      %602 = vmatpush1.bf16.msra.mxu0 0
      %603 = vmatprep.subr.bf16.mxu0 0
      %604 = vmatpush1.bf16.msra.mxu0 0
      %605 = vmatprep.subr.bf16.mxu0 0
      %606 = vmatpush1.bf16.msra.mxu0 0
      %607 = vmatprep.subr.bf16.mxu0 0
      %608 = vmatpush1.bf16.msra.mxu0 0
      %609 = vmatprep.subr.bf16.mxu0 0
      %610 = vmatpush1.bf16.msra.mxu0 0
      %611 = vmatprep.subr.bf16.mxu0 0
      %612 = vmatpush1.bf16.msra.mxu0 0
      %613 = vmatprep.subr.bf16.mxu0 0
      %614 = vmatpush1.bf16.msra.mxu0 0
      %615 = vmatprep.subr.bf16.mxu0 0
      %616 = vmatpush1.bf16.msra.mxu0 0
      %617 = vmatprep.subr.bf16.mxu0 0
      %618 = vmatpush1.bf16.msra.mxu0 0
      %619 = vmatprep.subr.bf16.mxu0 0
      %620 = vmatpush1.bf16.msra.mxu0 0
      %621 = vmatprep.subr.bf16.mxu0 0
      %622 = vmatpush1.bf16.msra.mxu0 0
      %623 = vmatprep.subr.bf16.mxu0 0
      %624 = vmatpush1.bf16.msra.mxu0 0
      %625 = vmatprep.subr.bf16.mxu0 0
      %626 = vmatpush1.bf16.msra.mxu0 0
      %627 = vmatprep.mubr.bf16.mxu0 0
      %628 = vmatmul.mubr.bf16.gmra.mrb[0].mxu0 %v584
      %v629 = vpop.f32.mrb[0].mxu0
      %v630 = vadd.f32 0.0, %v629
      %v631 = vpop.f32.mrb[0].mxu0
      %v632 = vadd.f32 0.0, %v631
      %v633 = vpop.f32.mrb[0].mxu0
      %v634 = vpop.f32.mrb[0].mxu0
      %635 = vdwg.mxu0
      %636 = vmatprep.subr.bf16.mxu0 0
      %637 = vmatpush1.bf16.msra.mxu0 %v593
      %638 = vmatprep.subr.bf16.mxu0 0
      %639 = vmatpush1.bf16.msra.mxu0 0
      %640 = vmatprep.subr.bf16.mxu0 0
      %641 = vmatpush1.bf16.msra.mxu0 0
      %642 = vmatprep.subr.bf16.mxu0 0
      %643 = vmatpush1.bf16.msra.mxu0 0
      %644 = vmatprep.subr.bf16.mxu0 0
      %645 = vmatpush1.bf16.msra.mxu0 0
      %646 = vmatprep.subr.bf16.mxu0 0
      %647 = vmatpush1.bf16.msra.mxu0 0
      %648 = vmatprep.subr.bf16.mxu0 0
      %649 = vmatpush1.bf16.msra.mxu0 0
      %650 = vmatprep.subr.bf16.mxu0 0
      %651 = vmatpush1.bf16.msra.mxu0 0
      %652 = vmatprep.subr.bf16.mxu0 0
      %653 = vmatpush1.bf16.msra.mxu0 0
      %654 = vmatprep.subr.bf16.mxu0 0
      %655 = vmatpush1.bf16.msra.mxu0 0
      %656 = vmatprep.subr.bf16.mxu0 0
      %657 = vmatpush1.bf16.msra.mxu0 0
      %658 = vmatprep.subr.bf16.mxu0 0
      %659 = vmatpush1.bf16.msra.mxu0 0
      %660 = vmatprep.subr.bf16.mxu0 0
      %661 = vmatpush1.bf16.msra.mxu0 0
      %662 = vmatprep.subr.bf16.mxu0 0
      %663 = vmatpush1.bf16.msra.mxu0 0
      %664 = vmatprep.subr.bf16.mxu0 0
      %665 = vmatpush1.bf16.msra.mxu0 0
      %666 = vmatprep.subr.bf16.mxu0 0
      %667 = vmatpush1.bf16.msra.mxu0 0
      %668 = vmatprep.mubr.bf16.mxu0 0
      %669 = vmatmul.mubr.bf16.gmra.mrb[0].mxu0 %v584
      %v670 = vpop.f32.mrb[0].mxu0
      %v671 = vadd.f32 0.0, %v670
      %v672 = vpop.f32.mrb[0].mxu0
      %v673 = vpop.f32.mrb[0].mxu0
      %v674 = vpop.f32.mrb[0].mxu0
      %675 = vdwg.mxu0
      %v676 = vadd.f32 %v508, %v630
      %v677 = vadd.f32 %v510, %v632
      %v678 = vadd.f32 %v549, %v671
      %v679 = vld [vmem:[%s315] sm:$0x3f]
      %s680 = scalar_lea.vmem %s2, 12
      %v681 = vld [vmem:[%s680] sm:$0xf]
      %v683 = vcombine.high %v679, %v679
      %v685 = vunpack.c.l.s4 1983009808
      %v686 = vunpack.c.0.s8 %v685
      %v687 = vlaneseq
      %v688 = vshrl.u32 %v687, 7
      %v689 = vsub.s32 %v686, %v688
      %v690 = vrot.slane %v679, %v689
      %v692 = vunpack.c.l.s4 1983009808
      %v693 = vunpack.c.0.s8 %v692
      %v694 = vlaneseq
      %v695 = vshrl.u32 %v694, 7
      %v696 = vsub.s32 %v693, %v695
      %v697 = vrot.slane %v683, %v696
      %v698 = vcombine.high %v690, %v690
      %699 = vrot.lane.b32.xlu0 %v690, 110
      %v700 = vpop.permute.xlu0 %699
      %701 = vrot.lane.b32.xlu0 %v698, 110
      %v702 = vpop.permute.xlu0 %701
      %703 = vrot.lane.b32.xlu0 %v697, 110
      %v704 = vpop.permute.xlu0 %703
      %vm705 = vcmask 900096
      %v706 = vsel %vm705, %v700, %v702
      %v707 = vsel %vm705, %v702, %v704
      %v709 = vsel %vm366, %v681, 0
      %v712 = vsel %vm370, %v706, 0
      %v715 = vsel %vm370, %v707, 0
      %v718 = vsel %vm370, %v704, 0
      %720 = vmatprep.subr.bf16.mxu0 %v715
      %721 = vmatpush1.bf16.msra.mxu0 %v712
      %722 = vmatprep.subr.bf16.mxu0 0
      %723 = vmatpush1.bf16.msra.mxu0 0
      %724 = vmatprep.subr.bf16.mxu0 0
      %725 = vmatpush1.bf16.msra.mxu0 0
      %726 = vmatprep.subr.bf16.mxu0 0
      %727 = vmatpush1.bf16.msra.mxu0 0
      %728 = vmatprep.subr.bf16.mxu0 0
      %729 = vmatpush1.bf16.msra.mxu0 0
      %730 = vmatprep.subr.bf16.mxu0 0
      %731 = vmatpush1.bf16.msra.mxu0 0
      %732 = vmatprep.subr.bf16.mxu0 0
      %733 = vmatpush1.bf16.msra.mxu0 0
      %734 = vmatprep.subr.bf16.mxu0 0
      %735 = vmatpush1.bf16.msra.mxu0 0
      %736 = vmatprep.subr.bf16.mxu0 0
      %737 = vmatpush1.bf16.msra.mxu0 0
      %738 = vmatprep.subr.bf16.mxu0 0
      %739 = vmatpush1.bf16.msra.mxu0 0
      %740 = vmatprep.subr.bf16.mxu0 0
      %741 = vmatpush1.bf16.msra.mxu0 0
      %742 = vmatprep.subr.bf16.mxu0 0
      %743 = vmatpush1.bf16.msra.mxu0 0
      %744 = vmatprep.subr.bf16.mxu0 0
      %745 = vmatpush1.bf16.msra.mxu0 0
      %746 = vmatprep.subr.bf16.mxu0 0
      %747 = vmatpush1.bf16.msra.mxu0 0
      %748 = vmatprep.subr.bf16.mxu0 0
      %749 = vmatpush1.bf16.msra.mxu0 0
      %750 = vmatprep.subr.bf16.mxu0 0
      %751 = vmatpush1.bf16.msra.mxu0 0
      %752 = vmatprep.mubr.bf16.mxu0 0
      %753 = vmatmul.mubr.bf16.gmra.mrb[0].mxu0 %v709
      %v754 = vpop.f32.mrb[0].mxu0
      %v755 = vadd.f32 0.0, %v754
      %v756 = vpop.f32.mrb[0].mxu0
      %v757 = vadd.f32 0.0, %v756
      %v758 = vpop.f32.mrb[0].mxu0
      %v759 = vpop.f32.mrb[0].mxu0
      %760 = vdwg.mxu0
      %761 = vmatprep.subr.bf16.mxu0 0
      %762 = vmatpush1.bf16.msra.mxu0 %v718
      %763 = vmatprep.subr.bf16.mxu0 0
      %764 = vmatpush1.bf16.msra.mxu0 0
      %765 = vmatprep.subr.bf16.mxu0 0
      %766 = vmatpush1.bf16.msra.mxu0 0
      %767 = vmatprep.subr.bf16.mxu0 0
      %768 = vmatpush1.bf16.msra.mxu0 0
      %769 = vmatprep.subr.bf16.mxu0 0
      %770 = vmatpush1.bf16.msra.mxu0 0
      %771 = vmatprep.subr.bf16.mxu0 0
      %772 = vmatpush1.bf16.msra.mxu0 0
      %773 = vmatprep.subr.bf16.mxu0 0
      %774 = vmatpush1.bf16.msra.mxu0 0
      %775 = vmatprep.subr.bf16.mxu0 0
      %776 = vmatpush1.bf16.msra.mxu0 0
      %777 = vmatprep.subr.bf16.mxu0 0
      %778 = vmatpush1.bf16.msra.mxu0 0
      %779 = vmatprep.subr.bf16.mxu0 0
      %780 = vmatpush1.bf16.msra.mxu0 0
      %781 = vmatprep.subr.bf16.mxu0 0
      %782 = vmatpush1.bf16.msra.mxu0 0
      %783 = vmatprep.subr.bf16.mxu0 0
      %784 = vmatpush1.bf16.msra.mxu0 0
      %785 = vmatprep.subr.bf16.mxu0 0
      %786 = vmatpush1.bf16.msra.mxu0 0
      %787 = vmatprep.subr.bf16.mxu0 0
      %788 = vmatpush1.bf16.msra.mxu0 0
      %789 = vmatprep.subr.bf16.mxu0 0
      %790 = vmatpush1.bf16.msra.mxu0 0
      %791 = vmatprep.subr.bf16.mxu0 0
      %792 = vmatpush1.bf16.msra.mxu0 0
      %793 = vmatprep.mubr.bf16.mxu0 0
      %794 = vmatmul.mubr.bf16.gmra.mrb[0].mxu0 %v709
      %v795 = vpop.f32.mrb[0].mxu0
      %v796 = vadd.f32 0.0, %v795
      %v797 = vpop.f32.mrb[0].mxu0
      %v798 = vpop.f32.mrb[0].mxu0
      %v799 = vpop.f32.mrb[0].mxu0
      %800 = vdwg.mxu0
      %v801 = vadd.f32 %v676, %v755
      %v802 = vadd.f32 %v677, %v757
      %v803 = vadd.f32 %v678, %v796
      %v804 = vld [vmem:[%s315] sm:$0x3f]
      %s805 = scalar_lea.vmem %s2, 16
      %v806 = vld [vmem:[%s805] sm:$0xf]
      %v808 = vcombine.high %v804, %v804
      %v810 = vunpack.c.l.s4 1983009808
      %v811 = vunpack.c.0.s8 %v810
      %v812 = vlaneseq
      %v813 = vshrl.u32 %v812, 7
      %v814 = vsub.s32 %v811, %v813
      %v815 = vrot.slane %v804, %v814
      %v817 = vunpack.c.l.s4 1983009808
      %v818 = vunpack.c.0.s8 %v817
      %v819 = vlaneseq
      %v820 = vshrl.u32 %v819, 7
      %v821 = vsub.s32 %v818, %v820
      %v822 = vrot.slane %v808, %v821
      %v823 = vcombine.high %v815, %v815
      %824 = vrot.lane.b32.xlu0 %v815, 109
      %v825 = vpop.permute.xlu0 %824
      %826 = vrot.lane.b32.xlu0 %v823, 109
      %v827 = vpop.permute.xlu0 %826
      %828 = vrot.lane.b32.xlu0 %v822, 109
      %v829 = vpop.permute.xlu0 %828
      %vm830 = vcmask 891904
      %v831 = vsel %vm830, %v825, %v827
      %v832 = vsel %vm830, %v827, %v829
      %v834 = vsel %vm366, %v806, 0
      %v837 = vsel %vm370, %v831, 0
      %v840 = vsel %vm370, %v832, 0
      %v843 = vsel %vm370, %v829, 0
      %845 = vmatprep.subr.bf16.mxu0 %v840
      %846 = vmatpush1.bf16.msra.mxu0 %v837
      %847 = vmatprep.subr.bf16.mxu0 0
      %848 = vmatpush1.bf16.msra.mxu0 0
      %849 = vmatprep.subr.bf16.mxu0 0
      %850 = vmatpush1.bf16.msra.mxu0 0
      %851 = vmatprep.subr.bf16.mxu0 0
      %852 = vmatpush1.bf16.msra.mxu0 0
      %853 = vmatprep.subr.bf16.mxu0 0
      %854 = vmatpush1.bf16.msra.mxu0 0
      %855 = vmatprep.subr.bf16.mxu0 0
      %856 = vmatpush1.bf16.msra.mxu0 0
      %857 = vmatprep.subr.bf16.mxu0 0
      %858 = vmatpush1.bf16.msra.mxu0 0
      %859 = vmatprep.subr.bf16.mxu0 0
      %860 = vmatpush1.bf16.msra.mxu0 0
      %861 = vmatprep.subr.bf16.mxu0 0
      %862 = vmatpush1.bf16.msra.mxu0 0
      %863 = vmatprep.subr.bf16.mxu0 0
      %864 = vmatpush1.bf16.msra.mxu0 0
      %865 = vmatprep.subr.bf16.mxu0 0
      %866 = vmatpush1.bf16.msra.mxu0 0
      %867 = vmatprep.subr.bf16.mxu0 0
      %868 = vmatpush1.bf16.msra.mxu0 0
      %869 = vmatprep.subr.bf16.mxu0 0
      %870 = vmatpush1.bf16.msra.mxu0 0
      %871 = vmatprep.subr.bf16.mxu0 0
      %872 = vmatpush1.bf16.msra.mxu0 0
      %873 = vmatprep.subr.bf16.mxu0 0
      %874 = vmatpush1.bf16.msra.mxu0 0
      %875 = vmatprep.subr.bf16.mxu0 0
      %876 = vmatpush1.bf16.msra.mxu0 0
      %877 = vmatprep.mubr.bf16.mxu0 0
      %878 = vmatmul.mubr.bf16.gmra.mrb[0].mxu0 %v834
      %v879 = vpop.f32.mrb[0].mxu0
      %v880 = vadd.f32 0.0, %v879
      %v881 = vpop.f32.mrb[0].mxu0
      %v882 = vadd.f32 0.0, %v881
      %v883 = vpop.f32.mrb[0].mxu0
      %v884 = vpop.f32.mrb[0].mxu0
      %885 = vdwg.mxu0
      %886 = vmatprep.subr.bf16.mxu0 0
      %887 = vmatpush1.bf16.msra.mxu0 %v843
      %888 = vmatprep.subr.bf16.mxu0 0
      %889 = vmatpush1.bf16.msra.mxu0 0
      %890 = vmatprep.subr.bf16.mxu0 0
      %891 = vmatpush1.bf16.msra.mxu0 0
      %892 = vmatprep.subr.bf16.mxu0 0
      %893 = vmatpush1.bf16.msra.mxu0 0
      %894 = vmatprep.subr.bf16.mxu0 0
      %895 = vmatpush1.bf16.msra.mxu0 0
      %896 = vmatprep.subr.bf16.mxu0 0
      %897 = vmatpush1.bf16.msra.mxu0 0
      %898 = vmatprep.subr.bf16.mxu0 0
      %899 = vmatpush1.bf16.msra.mxu0 0
      %900 = vmatprep.subr.bf16.mxu0 0
      %901 = vmatpush1.bf16.msra.mxu0 0
      %902 = vmatprep.subr.bf16.mxu0 0
      %903 = vmatpush1.bf16.msra.mxu0 0
      %904 = vmatprep.subr.bf16.mxu0 0
      %905 = vmatpush1.bf16.msra.mxu0 0
      %906 = vmatprep.subr.bf16.mxu0 0
      %907 = vmatpush1.bf16.msra.mxu0 0
      %908 = vmatprep.subr.bf16.mxu0 0
      %909 = vmatpush1.bf16.msra.mxu0 0
      %910 = vmatprep.subr.bf16.mxu0 0
      %911 = vmatpush1.bf16.msra.mxu0 0
      %912 = vmatprep.subr.bf16.mxu0 0
      %913 = vmatpush1.bf16.msra.mxu0 0
      %914 = vmatprep.subr.bf16.mxu0 0
      %915 = vmatpush1.bf16.msra.mxu0 0
      %916 = vmatprep.subr.bf16.mxu0 0
      %917 = vmatpush1.bf16.msra.mxu0 0
      %918 = vmatprep.mubr.bf16.mxu0 0
      %919 = vmatmul.mubr.bf16.gmra.mrb[0].mxu0 %v834
      %v920 = vpop.f32.mrb[0].mxu0
      %v921 = vadd.f32 0.0, %v920
      %v922 = vpop.f32.mrb[0].mxu0
      %v923 = vpop.f32.mrb[0].mxu0
      %v924 = vpop.f32.mrb[0].mxu0
      %925 = vdwg.mxu0
      %v926 = vadd.f32 %v801, %v880
      %v927 = vadd.f32 %v802, %v882
      %v928 = vadd.f32 %v803, %v921
      %v929 = vld [vmem:[%s315] sm:$0x3f]
      %s930 = scalar_lea.vmem %s2, 20
      %v931 = vld [vmem:[%s930] sm:$0xf]
      %v933 = vcombine.high %v929, %v929
      %v935 = vunpack.c.l.s4 1983009808
      %v936 = vunpack.c.0.s8 %v935
      %v937 = vlaneseq
      %v938 = vshrl.u32 %v937, 7
      %v939 = vsub.s32 %v936, %v938
      %v940 = vrot.slane %v929, %v939
      %v942 = vunpack.c.l.s4 1983009808
      %v943 = vunpack.c.0.s8 %v942
      %v944 = vlaneseq
      %v945 = vshrl.u32 %v944, 7
      %v946 = vsub.s32 %v943, %v945
      %v947 = vrot.slane %v933, %v946
      %v948 = vcombine.high %v940, %v940
      %949 = vrot.lane.b32.xlu0 %v940, 108
      %v950 = vpop.permute.xlu0 %949
      %951 = vrot.lane.b32.xlu0 %v948, 108
      %v952 = vpop.permute.xlu0 %951
      %953 = vrot.lane.b32.xlu0 %v947, 108
      %v954 = vpop.permute.xlu0 %953
      %vm955 = vcmask 883712
      %v956 = vsel %vm955, %v950, %v952
      %v957 = vsel %vm955, %v952, %v954
      %v959 = vsel %vm366, %v931, 0
      %v962 = vsel %vm370, %v956, 0
      %v965 = vsel %vm370, %v957, 0
      %v968 = vsel %vm370, %v954, 0
      %970 = vmatprep.subr.bf16.mxu0 %v965
      %971 = vmatpush1.bf16.msra.mxu0 %v962
      %972 = vmatprep.subr.bf16.mxu0 0
      %973 = vmatpush1.bf16.msra.mxu0 0
      %974 = vmatprep.subr.bf16.mxu0 0
      %975 = vmatpush1.bf16.msra.mxu0 0
      %976 = vmatprep.subr.bf16.mxu0 0
      %977 = vmatpush1.bf16.msra.mxu0 0
      %978 = vmatprep.subr.bf16.mxu0 0
      %979 = vmatpush1.bf16.msra.mxu0 0
      %980 = vmatprep.subr.bf16.mxu0 0
      %981 = vmatpush1.bf16.msra.mxu0 0
      %982 = vmatprep.subr.bf16.mxu0 0
      %983 = vmatpush1.bf16.msra.mxu0 0
      %984 = vmatprep.subr.bf16.mxu0 0
      %985 = vmatpush1.bf16.msra.mxu0 0
      %986 = vmatprep.subr.bf16.mxu0 0
      %987 = vmatpush1.bf16.msra.mxu0 0
      %988 = vmatprep.subr.bf16.mxu0 0
      %989 = vmatpush1.bf16.msra.mxu0 0
      %990 = vmatprep.subr.bf16.mxu0 0
      %991 = vmatpush1.bf16.msra.mxu0 0
      %992 = vmatprep.subr.bf16.mxu0 0
      %993 = vmatpush1.bf16.msra.mxu0 0
      %994 = vmatprep.subr.bf16.mxu0 0
      %995 = vmatpush1.bf16.msra.mxu0 0
      %996 = vmatprep.subr.bf16.mxu0 0
      %997 = vmatpush1.bf16.msra.mxu0 0
      %998 = vmatprep.subr.bf16.mxu0 0
      %999 = vmatpush1.bf16.msra.mxu0 0
      %1000 = vmatprep.subr.bf16.mxu0 0
      %1001 = vmatpush1.bf16.msra.mxu0 0
      %1002 = vmatprep.mubr.bf16.mxu0 0
      %1003 = vmatmul.mubr.bf16.gmra.mrb[0].mxu0 %v959
      %v1004 = vpop.f32.mrb[0].mxu0
      %v1005 = vadd.f32 0.0, %v1004
      %v1006 = vpop.f32.mrb[0].mxu0
      %v1007 = vadd.f32 0.0, %v1006
      %v1008 = vpop.f32.mrb[0].mxu0
      %v1009 = vpop.f32.mrb[0].mxu0
      %1010 = vdwg.mxu0
      %1011 = vmatprep.subr.bf16.mxu0 0
      %1012 = vmatpush1.bf16.msra.mxu0 %v968
      %1013 = vmatprep.subr.bf16.mxu0 0
      %1014 = vmatpush1.bf16.msra.mxu0 0
      %1015 = vmatprep.subr.bf16.mxu0 0
      %1016 = vmatpush1.bf16.msra.mxu0 0
      %1017 = vmatprep.subr.bf16.mxu0 0
      %1018 = vmatpush1.bf16.msra.mxu0 0
      %1019 = vmatprep.subr.bf16.mxu0 0
      %1020 = vmatpush1.bf16.msra.mxu0 0
      %1021 = vmatprep.subr.bf16.mxu0 0
      %1022 = vmatpush1.bf16.msra.mxu0 0
      %1023 = vmatprep.subr.bf16.mxu0 0
      %1024 = vmatpush1.bf16.msra.mxu0 0
      %1025 = vmatprep.subr.bf16.mxu0 0
      %1026 = vmatpush1.bf16.msra.mxu0 0
      %1027 = vmatprep.subr.bf16.mxu0 0
      %1028 = vmatpush1.bf16.msra.mxu0 0
      %1029 = vmatprep.subr.bf16.mxu0 0
      %1030 = vmatpush1.bf16.msra.mxu0 0
      %1031 = vmatprep.subr.bf16.mxu0 0
      %1032 = vmatpush1.bf16.msra.mxu0 0
      %1033 = vmatprep.subr.bf16.mxu0 0
      %1034 = vmatpush1.bf16.msra.mxu0 0
      %1035 = vmatprep.subr.bf16.mxu0 0
      %1036 = vmatpush1.bf16.msra.mxu0 0
      %1037 = vmatprep.subr.bf16.mxu0 0
      %1038 = vmatpush1.bf16.msra.mxu0 0
      %1039 = vmatprep.subr.bf16.mxu0 0
      %1040 = vmatpush1.bf16.msra.mxu0 0
      %1041 = vmatprep.subr.bf16.mxu0 0
      %1042 = vmatpush1.bf16.msra.mxu0 0
      %1043 = vmatprep.mubr.bf16.mxu0 0
      %1044 = vmatmul.mubr.bf16.gmra.mrb[0].mxu0 %v959
      %v1045 = vpop.f32.mrb[0].mxu0
      %v1046 = vadd.f32 0.0, %v1045
      %v1047 = vpop.f32.mrb[0].mxu0
      %v1048 = vpop.f32.mrb[0].mxu0
      %v1049 = vpop.f32.mrb[0].mxu0
      %1050 = vdwg.mxu0
      %v1051 = vadd.f32 %v926, %v1005
      %v1052 = vadd.f32 %v927, %v1007
      %v1053 = vadd.f32 %v928, %v1046
      %v1054 = vld [vmem:[%s315] sm:$0x3f]
      %s1055 = scalar_lea.vmem %s2, 24
      %v1056 = vld [vmem:[%s1055] sm:$0xf]
      %v1058 = vcombine.high %v1054, %v1054
      %v1060 = vunpack.c.l.s4 1983009808
      %v1061 = vunpack.c.0.s8 %v1060
      %v1062 = vlaneseq
      %v1063 = vshrl.u32 %v1062, 7
      %v1064 = vsub.s32 %v1061, %v1063
      %v1065 = vrot.slane %v1054, %v1064
      %v1067 = vunpack.c.l.s4 1983009808
      %v1068 = vunpack.c.0.s8 %v1067
      %v1069 = vlaneseq
      %v1070 = vshrl.u32 %v1069, 7
      %v1071 = vsub.s32 %v1068, %v1070
      %v1072 = vrot.slane %v1058, %v1071
      %v1073 = vcombine.high %v1065, %v1065
      %1074 = vrot.lane.b32.xlu0 %v1065, 92
      %v1075 = vpop.permute.xlu0 %1074
      %1076 = vrot.lane.b32.xlu0 %v1073, 92
      %v1077 = vpop.permute.xlu0 %1076
      %1078 = vrot.lane.b32.xlu0 %v1072, 92
      %v1079 = vpop.permute.xlu0 %1078
      %vm1080 = vcmask 752640
      %v1081 = vsel %vm1080, %v1075, %v1077
      %v1082 = vsel %vm1080, %v1077, %v1079
      %v1084 = vsel %vm366, %v1056, 0
      %v1087 = vsel %vm370, %v1081, 0
      %v1090 = vsel %vm370, %v1082, 0
      %v1093 = vsel %vm370, %v1079, 0
      %1095 = vmatprep.subr.bf16.mxu0 %v1090
      %1096 = vmatpush1.bf16.msra.mxu0 %v1087
      %1097 = vmatprep.subr.bf16.mxu0 0
      %1098 = vmatpush1.bf16.msra.mxu0 0
      %1099 = vmatprep.subr.bf16.mxu0 0
      %1100 = vmatpush1.bf16.msra.mxu0 0
      %1101 = vmatprep.subr.bf16.mxu0 0
      %1102 = vmatpush1.bf16.msra.mxu0 0
      %1103 = vmatprep.subr.bf16.mxu0 0
      %1104 = vmatpush1.bf16.msra.mxu0 0
      %1105 = vmatprep.subr.bf16.mxu0 0
      %1106 = vmatpush1.bf16.msra.mxu0 0
      %1107 = vmatprep.subr.bf16.mxu0 0
      %1108 = vmatpush1.bf16.msra.mxu0 0
      %1109 = vmatprep.subr.bf16.mxu0 0
      %1110 = vmatpush1.bf16.msra.mxu0 0
      %1111 = vmatprep.subr.bf16.mxu0 0
      %1112 = vmatpush1.bf16.msra.mxu0 0
      %1113 = vmatprep.subr.bf16.mxu0 0
      %1114 = vmatpush1.bf16.msra.mxu0 0
      %1115 = vmatprep.subr.bf16.mxu0 0
      %1116 = vmatpush1.bf16.msra.mxu0 0
      %1117 = vmatprep.subr.bf16.mxu0 0
      %1118 = vmatpush1.bf16.msra.mxu0 0
      %1119 = vmatprep.subr.bf16.mxu0 0
      %1120 = vmatpush1.bf16.msra.mxu0 0
      %1121 = vmatprep.subr.bf16.mxu0 0
      %1122 = vmatpush1.bf16.msra.mxu0 0
      %1123 = vmatprep.subr.bf16.mxu0 0
      %1124 = vmatpush1.bf16.msra.mxu0 0
      %1125 = vmatprep.subr.bf16.mxu0 0
      %1126 = vmatpush1.bf16.msra.mxu0 0
      %1127 = vmatprep.mubr.bf16.mxu0 0
      %1128 = vmatmul.mubr.bf16.gmra.mrb[0].mxu0 %v1084
      %v1129 = vpop.f32.mrb[0].mxu0
      %v1130 = vadd.f32 0.0, %v1129
      %v1131 = vpop.f32.mrb[0].mxu0
      %v1132 = vadd.f32 0.0, %v1131
      %v1133 = vpop.f32.mrb[0].mxu0
      %v1134 = vpop.f32.mrb[0].mxu0
      %1135 = vdwg.mxu0
      %1136 = vmatprep.subr.bf16.mxu0 0
      %1137 = vmatpush1.bf16.msra.mxu0 %v1093
      %1138 = vmatprep.subr.bf16.mxu0 0
      %1139 = vmatpush1.bf16.msra.mxu0 0
      %1140 = vmatprep.subr.bf16.mxu0 0
      %1141 = vmatpush1.bf16.msra.mxu0 0
      %1142 = vmatprep.subr.bf16.mxu0 0
      %1143 = vmatpush1.bf16.msra.mxu0 0
      %1144 = vmatprep.subr.bf16.mxu0 0
      %1145 = vmatpush1.bf16.msra.mxu0 0
      %1146 = vmatprep.subr.bf16.mxu0 0
      %1147 = vmatpush1.bf16.msra.mxu0 0
      %1148 = vmatprep.subr.bf16.mxu0 0
      %1149 = vmatpush1.bf16.msra.mxu0 0
      %1150 = vmatprep.subr.bf16.mxu0 0
      %1151 = vmatpush1.bf16.msra.mxu0 0
      %1152 = vmatprep.subr.bf16.mxu0 0
      %1153 = vmatpush1.bf16.msra.mxu0 0
      %1154 = vmatprep.subr.bf16.mxu0 0
      %1155 = vmatpush1.bf16.msra.mxu0 0
      %1156 = vmatprep.subr.bf16.mxu0 0
      %1157 = vmatpush1.bf16.msra.mxu0 0
      %1158 = vmatprep.subr.bf16.mxu0 0
      %1159 = vmatpush1.bf16.msra.mxu0 0
      %1160 = vmatprep.subr.bf16.mxu0 0
      %1161 = vmatpush1.bf16.msra.mxu0 0
      %1162 = vmatprep.subr.bf16.mxu0 0
      %1163 = vmatpush1.bf16.msra.mxu0 0
      %1164 = vmatprep.subr.bf16.mxu0 0
      %1165 = vmatpush1.bf16.msra.mxu0 0
      %1166 = vmatprep.subr.bf16.mxu0 0
      %1167 = vmatpush1.bf16.msra.mxu0 0
      %1168 = vmatprep.mubr.bf16.mxu0 0
      %1169 = vmatmul.mubr.bf16.gmra.mrb[0].mxu0 %v1084
      %v1170 = vpop.f32.mrb[0].mxu0
      %v1171 = vadd.f32 0.0, %v1170
      %v1172 = vpop.f32.mrb[0].mxu0
      %v1173 = vpop.f32.mrb[0].mxu0
      %v1174 = vpop.f32.mrb[0].mxu0
      %1175 = vdwg.mxu0
      %v1176 = vadd.f32 %v1051, %v1130
      %v1177 = vadd.f32 %v1052, %v1132
      %v1178 = vadd.f32 %v1053, %v1171
      %v1179 = vld [vmem:[%s315] sm:$0x3f]
      %s1180 = scalar_lea.vmem %s2, 28
      %v1181 = vld [vmem:[%s1180] sm:$0xf]
      %v1183 = vcombine.high %v1179, %v1179
      %v1185 = vunpack.c.l.s4 1983009808
      %v1186 = vunpack.c.0.s8 %v1185
      %v1187 = vlaneseq
      %v1188 = vshrl.u32 %v1187, 7
      %v1189 = vsub.s32 %v1186, %v1188
      %v1190 = vrot.slane %v1179, %v1189
      %v1192 = vunpack.c.l.s4 1983009808
      %v1193 = vunpack.c.0.s8 %v1192
      %v1194 = vlaneseq
      %v1195 = vshrl.u32 %v1194, 7
      %v1196 = vsub.s32 %v1193, %v1195
      %v1197 = vrot.slane %v1183, %v1196
      %v1198 = vcombine.high %v1190, %v1190
      %1199 = vrot.lane.b32.xlu0 %v1190, 91
      %v1200 = vpop.permute.xlu0 %1199
      %1201 = vrot.lane.b32.xlu0 %v1198, 91
      %v1202 = vpop.permute.xlu0 %1201
      %1203 = vrot.lane.b32.xlu0 %v1197, 91
      %v1204 = vpop.permute.xlu0 %1203
      %vm1205 = vcmask 744448
      %v1206 = vsel %vm1205, %v1200, %v1202
      %v1207 = vsel %vm1205, %v1202, %v1204
      %v1209 = vsel %vm366, %v1181, 0
      %v1212 = vsel %vm370, %v1206, 0
      %v1215 = vsel %vm370, %v1207, 0
      %v1218 = vsel %vm370, %v1204, 0
      %1220 = vmatprep.subr.bf16.mxu0 %v1215
      %1221 = vmatpush1.bf16.msra.mxu0 %v1212
      %1222 = vmatprep.subr.bf16.mxu0 0
      %1223 = vmatpush1.bf16.msra.mxu0 0
      %1224 = vmatprep.subr.bf16.mxu0 0
      %1225 = vmatpush1.bf16.msra.mxu0 0
      %1226 = vmatprep.subr.bf16.mxu0 0
      %1227 = vmatpush1.bf16.msra.mxu0 0
      %1228 = vmatprep.subr.bf16.mxu0 0
      %1229 = vmatpush1.bf16.msra.mxu0 0
      %1230 = vmatprep.subr.bf16.mxu0 0
      %1231 = vmatpush1.bf16.msra.mxu0 0
      %1232 = vmatprep.subr.bf16.mxu0 0
      %1233 = vmatpush1.bf16.msra.mxu0 0
      %1234 = vmatprep.subr.bf16.mxu0 0
      %1235 = vmatpush1.bf16.msra.mxu0 0
      %1236 = vmatprep.subr.bf16.mxu0 0
      %1237 = vmatpush1.bf16.msra.mxu0 0
      %1238 = vmatprep.subr.bf16.mxu0 0
      %1239 = vmatpush1.bf16.msra.mxu0 0
      %1240 = vmatprep.subr.bf16.mxu0 0
      %1241 = vmatpush1.bf16.msra.mxu0 0
      %1242 = vmatprep.subr.bf16.mxu0 0
      %1243 = vmatpush1.bf16.msra.mxu0 0
      %1244 = vmatprep.subr.bf16.mxu0 0
      %1245 = vmatpush1.bf16.msra.mxu0 0
      %1246 = vmatprep.subr.bf16.mxu0 0
      %1247 = vmatpush1.bf16.msra.mxu0 0
      %1248 = vmatprep.subr.bf16.mxu0 0
      %1249 = vmatpush1.bf16.msra.mxu0 0
      %1250 = vmatprep.subr.bf16.mxu0 0
      %1251 = vmatpush1.bf16.msra.mxu0 0
      %1252 = vmatprep.mubr.bf16.mxu0 0
      %1253 = vmatmul.mubr.bf16.gmra.mrb[0].mxu0 %v1209
      %v1254 = vpop.f32.mrb[0].mxu0
      %v1255 = vadd.f32 0.0, %v1254
      %v1256 = vpop.f32.mrb[0].mxu0
      %v1257 = vadd.f32 0.0, %v1256
      %v1258 = vpop.f32.mrb[0].mxu0
      %v1259 = vpop.f32.mrb[0].mxu0
      %1260 = vdwg.mxu0
      %1261 = vmatprep.subr.bf16.mxu0 0
      %1262 = vmatpush1.bf16.msra.mxu0 %v1218
      %1263 = vmatprep.subr.bf16.mxu0 0
      %1264 = vmatpush1.bf16.msra.mxu0 0
      %1265 = vmatprep.subr.bf16.mxu0 0
      %1266 = vmatpush1.bf16.msra.mxu0 0
      %1267 = vmatprep.subr.bf16.mxu0 0
      %1268 = vmatpush1.bf16.msra.mxu0 0
      %1269 = vmatprep.subr.bf16.mxu0 0
      %1270 = vmatpush1.bf16.msra.mxu0 0
      %1271 = vmatprep.subr.bf16.mxu0 0
      %1272 = vmatpush1.bf16.msra.mxu0 0
      %1273 = vmatprep.subr.bf16.mxu0 0
      %1274 = vmatpush1.bf16.msra.mxu0 0
      %1275 = vmatprep.subr.bf16.mxu0 0
      %1276 = vmatpush1.bf16.msra.mxu0 0
      %1277 = vmatprep.subr.bf16.mxu0 0
      %1278 = vmatpush1.bf16.msra.mxu0 0
      %1279 = vmatprep.subr.bf16.mxu0 0
      %1280 = vmatpush1.bf16.msra.mxu0 0
      %1281 = vmatprep.subr.bf16.mxu0 0
      %1282 = vmatpush1.bf16.msra.mxu0 0
      %1283 = vmatprep.subr.bf16.mxu0 0
      %1284 = vmatpush1.bf16.msra.mxu0 0
      %1285 = vmatprep.subr.bf16.mxu0 0
      %1286 = vmatpush1.bf16.msra.mxu0 0
      %1287 = vmatprep.subr.bf16.mxu0 0
      %1288 = vmatpush1.bf16.msra.mxu0 0
      %1289 = vmatprep.subr.bf16.mxu0 0
      %1290 = vmatpush1.bf16.msra.mxu0 0
      %1291 = vmatprep.subr.bf16.mxu0 0
      %1292 = vmatpush1.bf16.msra.mxu0 0
      %1293 = vmatprep.mubr.bf16.mxu0 0
      %1294 = vmatmul.mubr.bf16.gmra.mrb[0].mxu0 %v1209
      %v1295 = vpop.f32.mrb[0].mxu0
      %v1296 = vadd.f32 0.0, %v1295
      %v1297 = vpop.f32.mrb[0].mxu0
      %v1298 = vpop.f32.mrb[0].mxu0
      %v1299 = vpop.f32.mrb[0].mxu0
      %1300 = vdwg.mxu0
      %v1301 = vadd.f32 %v1176, %v1255
      %v1302 = vadd.f32 %v1177, %v1257
      %v1303 = vadd.f32 %v1178, %v1296
      %v1304 = vld [vmem:[%s315] sm:$0x3f]
      %s1305 = scalar_lea.vmem %s2, 32
      %v1306 = vld [vmem:[%s1305] sm:$0xf]
      %v1308 = vcombine.high %v1304, %v1304
      %v1310 = vunpack.c.l.s4 1983009808
      %v1311 = vunpack.c.0.s8 %v1310
      %v1312 = vlaneseq
      %v1313 = vshrl.u32 %v1312, 7
      %v1314 = vsub.s32 %v1311, %v1313
      %v1315 = vrot.slane %v1304, %v1314
      %v1317 = vunpack.c.l.s4 1983009808
      %v1318 = vunpack.c.0.s8 %v1317
      %v1319 = vlaneseq
      %v1320 = vshrl.u32 %v1319, 7
      %v1321 = vsub.s32 %v1318, %v1320
      %v1322 = vrot.slane %v1308, %v1321
      %v1323 = vcombine.high %v1315, %v1315
      %1324 = vrot.lane.b32.xlu0 %v1315, 90
      %v1325 = vpop.permute.xlu0 %1324
      %1326 = vrot.lane.b32.xlu0 %v1323, 90
      %v1327 = vpop.permute.xlu0 %1326
      %1328 = vrot.lane.b32.xlu0 %v1322, 90
      %v1329 = vpop.permute.xlu0 %1328
      %vm1330 = vcmask 736256
      %v1331 = vsel %vm1330, %v1325, %v1327
      %v1332 = vsel %vm1330, %v1327, %v1329
      %v1334 = vsel %vm366, %v1306, 0
      %v1337 = vsel %vm370, %v1331, 0
      %v1340 = vsel %vm370, %v1332, 0
      %v1343 = vsel %vm370, %v1329, 0
      %1345 = vmatprep.subr.bf16.mxu0 %v1340
      %1346 = vmatpush1.bf16.msra.mxu0 %v1337
      %1347 = vmatprep.subr.bf16.mxu0 0
      %1348 = vmatpush1.bf16.msra.mxu0 0
      %1349 = vmatprep.subr.bf16.mxu0 0
      %1350 = vmatpush1.bf16.msra.mxu0 0
      %1351 = vmatprep.subr.bf16.mxu0 0
      %1352 = vmatpush1.bf16.msra.mxu0 0
      %1353 = vmatprep.subr.bf16.mxu0 0
      %1354 = vmatpush1.bf16.msra.mxu0 0
      %1355 = vmatprep.subr.bf16.mxu0 0
      %1356 = vmatpush1.bf16.msra.mxu0 0
      %1357 = vmatprep.subr.bf16.mxu0 0
      %1358 = vmatpush1.bf16.msra.mxu0 0
      %1359 = vmatprep.subr.bf16.mxu0 0
      %1360 = vmatpush1.bf16.msra.mxu0 0
      %1361 = vmatprep.subr.bf16.mxu0 0
      %1362 = vmatpush1.bf16.msra.mxu0 0
      %1363 = vmatprep.subr.bf16.mxu0 0
      %1364 = vmatpush1.bf16.msra.mxu0 0
      %1365 = vmatprep.subr.bf16.mxu0 0
      %1366 = vmatpush1.bf16.msra.mxu0 0
      %1367 = vmatprep.subr.bf16.mxu0 0
      %1368 = vmatpush1.bf16.msra.mxu0 0
      %1369 = vmatprep.subr.bf16.mxu0 0
      %1370 = vmatpush1.bf16.msra.mxu0 0
      %1371 = vmatprep.subr.bf16.mxu0 0
      %1372 = vmatpush1.bf16.msra.mxu0 0
      %1373 = vmatprep.subr.bf16.mxu0 0
      %1374 = vmatpush1.bf16.msra.mxu0 0
      %1375 = vmatprep.subr.bf16.mxu0 0
      %1376 = vmatpush1.bf16.msra.mxu0 0
      %1377 = vmatprep.mubr.bf16.mxu0 0
      %1378 = vmatmul.mubr.bf16.gmra.mrb[0].mxu0 %v1334
      %v1379 = vpop.f32.mrb[0].mxu0
      %v1380 = vadd.f32 0.0, %v1379
      %v1381 = vpop.f32.mrb[0].mxu0
      %v1382 = vadd.f32 0.0, %v1381
      %v1383 = vpop.f32.mrb[0].mxu0
      %v1384 = vpop.f32.mrb[0].mxu0
      %1385 = vdwg.mxu0
      %1386 = vmatprep.subr.bf16.mxu0 0
      %1387 = vmatpush1.bf16.msra.mxu0 %v1343
      %1388 = vmatprep.subr.bf16.mxu0 0
      %1389 = vmatpush1.bf16.msra.mxu0 0
      %1390 = vmatprep.subr.bf16.mxu0 0
      %1391 = vmatpush1.bf16.msra.mxu0 0
      %1392 = vmatprep.subr.bf16.mxu0 0
      %1393 = vmatpush1.bf16.msra.mxu0 0
      %1394 = vmatprep.subr.bf16.mxu0 0
      %1395 = vmatpush1.bf16.msra.mxu0 0
      %1396 = vmatprep.subr.bf16.mxu0 0
      %1397 = vmatpush1.bf16.msra.mxu0 0
      %1398 = vmatprep.subr.bf16.mxu0 0
      %1399 = vmatpush1.bf16.msra.mxu0 0
      %1400 = vmatprep.subr.bf16.mxu0 0
      %1401 = vmatpush1.bf16.msra.mxu0 0
      %1402 = vmatprep.subr.bf16.mxu0 0
      %1403 = vmatpush1.bf16.msra.mxu0 0
      %1404 = vmatprep.subr.bf16.mxu0 0
      %1405 = vmatpush1.bf16.msra.mxu0 0
      %1406 = vmatprep.subr.bf16.mxu0 0
      %1407 = vmatpush1.bf16.msra.mxu0 0
      %1408 = vmatprep.subr.bf16.mxu0 0
      %1409 = vmatpush1.bf16.msra.mxu0 0
      %1410 = vmatprep.subr.bf16.mxu0 0
      %1411 = vmatpush1.bf16.msra.mxu0 0
      %1412 = vmatprep.subr.bf16.mxu0 0
      %1413 = vmatpush1.bf16.msra.mxu0 0
      %1414 = vmatprep.subr.bf16.mxu0 0
      %1415 = vmatpush1.bf16.msra.mxu0 0
      %1416 = vmatprep.subr.bf16.mxu0 0
      %1417 = vmatpush1.bf16.msra.mxu0 0
      %1418 = vmatprep.mubr.bf16.mxu0 0
      %1419 = vmatmul.mubr.bf16.gmra.mrb[0].mxu0 %v1334
      %v1420 = vpop.f32.mrb[0].mxu0
      %v1421 = vadd.f32 0.0, %v1420
      %v1422 = vpop.f32.mrb[0].mxu0
      %v1423 = vpop.f32.mrb[0].mxu0
      %v1424 = vpop.f32.mrb[0].mxu0
      %1425 = vdwg.mxu0
      %v1426 = vadd.f32 %v1301, %v1380
      %v1427 = vadd.f32 %v1302, %v1382
      %v1428 = vadd.f32 %v1303, %v1421
      %1430 = vset.pattern.permute.xlu0 0
      %1431 = vperm.xlu0 %1430, %v335
      %v1432 = vpop.permute.xlu0 %1431
      %v1434 = vmul.f32 %v1426, %v1432
      %v1435 = vmul.f32 %v1427, %v1432
      %v1436 = vmul.f32 %v1428, %v1432
      %1437 = vset.pattern.permute.xlu0 1
      %1438 = vperm.xlu0 %1437, %v335
      %v1439 = vpop.permute.xlu0 %1438
      %v1441 = vadd.f32 %v1434, %v1439
      %v1442 = vadd.f32 %v1435, %v1439
      %v1443 = vadd.f32 %v1436, %v1439
      %v1444 = vmax.f32 %v1441, 0.0
      %v1445 = vmax.f32 %v1442, 0.0
      %v1446 = vmax.f32 %v1443, 0.0
      %v1448 = vlaneseq
      %v1449 = vshrl.u32 %v1448, 7
      %v1450 = vsub.s32 0, %v1449
      %v1451 = vrot.slane %v334, %v1450
      %v1452 = vlaneseq
      %v1453 = vshrl.u32 %v1452, 7
      %v1454 = vsub.s32 1, %v1453
      %v1455 = vrot.slane %v334, %v1454
      %v1456 = vlaneseq
      %v1457 = vshrl.u32 %v1456, 7
      %v1458 = vsub.s32 2, %v1457
      %v1459 = vrot.slane %v334, %v1458
      %v1463 = vmul.f32 %v1444, %v1451
      %v1464 = vmul.f32 %v1445, %v1455
      %v1465 = vmul.f32 %v1446, %v1459
      %v1466 = vpack.c.bf16 %v1463, %v1463
      %v1467 = vpack.c.bf16 %v1464, %v1464
      %v1468 = vpack.c.bf16 %v1465, %v1465
      %v1472 = vunpack.c.l.b16 %v1466
      %v1473 = vunpack.c.l.b16 %v1467
      %v1474 = vunpack.c.l.b16 %v1468
      %v1475 = vpack.c.b16 %v1473, %v1472
      %v1476 = vpack.c.b16 %v1474, %v1474
      %1477 = vrot.lane.b32.xlu0 %v1475, 19
      %v1478 = vpop.permute.xlu0 %1477
      %1479 = vrot.lane.b32.xlu0 %v1476, 19
      %v1480 = vpop.permute.xlu0 %1479
      %v1481 = vrot.slane %v1478, 4
      %vm1482 = vcmask 154624
      %v1483 = vsel %vm1482, %v1481, %v1478
      %v1484 = vsel %vm1482, %v1481, %v1480
      %vm1487 = vcmask 1043608
      %vm1488 = vcmask 1047556
      %vm1489 = vmor %vm1488, %vm1487
      %1490 = vst.msk [vmem:[#allocation2] sm:$0xff] %vm1489, %v1483
      %vm1491 = vcmask 707584
      %1492 = vst.msk [vmem:[#allocation2 + $0x8] sm:$0xf] %vm1491, %v1484
      %v1493 = vld [vmem:[%s320] sm:$0xf]
      %1495 = vrot.lane.b32.xlu0 %v1493, 38
      %v1496 = vpop.permute.xlu0 %1495
      %vm1498 = vcmask 437552
      %1499 = vst.msk [vmem:[#allocation3] sm:$0xf] %vm1498, %v1496
      %v1500 = vld [vmem:[%s320] sm:$0xf]
      %1502 = vrot.lane.b32.xlu0 %v1500, 40
      %v1503 = vpop.permute.xlu0 %1502
      %vm1505 = vcmask 585152
      %1506 = vst.msk [vmem:[#allocation3] sm:$0xf] %vm1505, %v1503
      %v1507 = vld [vmem:[%s320] sm:$0xf]
      %1509 = vrot.lane.b32.xlu0 %v1507, 42
      %v1510 = vpop.permute.xlu0 %1509
      %vm1512 = vcmask 732752
      %1513 = vst.msk [vmem:[#allocation3] sm:$0xf] %vm1512, %v1510
      %v1514 = vld [vmem:[%s320] sm:$0xf]
      %1516 = vrot.lane.b32.xlu0 %v1514, 44
      %v1517 = vpop.permute.xlu0 %1516
      %vm1519 = vcmask 880352
      %1520 = vst.msk [vmem:[#allocation3] sm:$0xf] %vm1519, %v1517
      %v1521 = vld [vmem:[%s320] sm:$0xf]
      %1523 = vrot.lane.b32.xlu0 %v1521, 46
      %v1524 = vpop.permute.xlu0 %1523
      %vm1526 = vcmask 1027952
      %1527 = vst.msk [vmem:[#allocation3] sm:$0xf] %vm1526, %v1524
      %v1528 = vld [vmem:[%s320] sm:$0xf]
      %1530 = vrot.lane.b32.xlu0 %v1528, 48
      %v1531 = vpop.permute.xlu0 %1530
      %vm1533 = vcmask 125952
      %1534 = vst.msk [vmem:[#allocation3 + $0x4] sm:$0xf] %vm1533, %v1531
      %v1535 = vld [vmem:[%s320] sm:$0xf]
      %1537 = vrot.lane.b32.xlu0 %v1535, 50
      %v1538 = vpop.permute.xlu0 %1537
      %vm1540 = vcmask 273552
      %1541 = vst.msk [vmem:[#allocation3 + $0x4] sm:$0xf] %vm1540, %v1538
      %v1542 = vld [vmem:[%s320] sm:$0xf]
      %1544 = vrot.lane.b32.xlu0 %v1542, 52
      %v1545 = vpop.permute.xlu0 %1544
      %vm1547 = vcmask 421152
      %1548 = vst.msk [vmem:[#allocation3 + $0x4] sm:$0xf] %vm1547, %v1545
      %v1549 = vld [vmem:[%s320 + $0x4] sm:$0xf]
      %1551 = vrot.lane.b32.xlu0 %v1549, 54
      %v1552 = vpop.permute.xlu0 %1551
      %vm1554 = vcmask 568752
      %1555 = vst.msk [vmem:[#allocation3 + $0x4] sm:$0xf] %vm1554, %v1552
      %v1556 = vld [vmem:[%s320 + $0x4] sm:$0xf]
      %1558 = vrot.lane.b32.xlu0 %v1556, 56
      %v1559 = vpop.permute.xlu0 %1558
      %vm1561 = vcmask 716352
      %1562 = vst.msk [vmem:[#allocation3 + $0x4] sm:$0xf] %vm1561, %v1559
      %v1563 = vld [vmem:[%s320 + $0x4] sm:$0xf]
      %1565 = vrot.lane.b32.xlu0 %v1563, 58
      %v1566 = vpop.permute.xlu0 %1565
      %vm1568 = vcmask 863952
      %1569 = vst.msk [vmem:[#allocation3 + $0x4] sm:$0xf] %vm1568, %v1566
      %v1570 = vld [vmem:[%s320 + $0x4] sm:$0xf]
      %1572 = vrot.lane.b32.xlu0 %v1570, 60
      %v1573 = vpop.permute.xlu0 %1572
      %vm1575 = vcmask 1011552
      %1576 = vst.msk [vmem:[#allocation3 + $0x4] sm:$0xf] %vm1575, %v1573
      %v1577 = vld [vmem:[%s320 + $0x4] sm:$0xf]
      %1579 = vrot.lane.b32.xlu0 %v1577, 62
      %v1580 = vpop.permute.xlu0 %1579
      %v1581 = vrot.slane %v1580, 4
      %vm1582 = vcmask 506880
      %v1583 = vsel %vm1582, %v1581, %v1580
      %vm1585 = vcmask 1044464
      %vm1586 = vcmask 113668
      %vm1587 = vmor %vm1586, %vm1585
      %1588 = vst.msk [vmem:[#allocation3 + $0x4] sm:$0xff] %vm1587, %v1583
      %v1589 = vld [vmem:[%s320 + $0x4] sm:$0xf]
      %1591 = vrot.lane.b32.xlu0 %v1589, 64
      %v1592 = vpop.permute.xlu0 %1591
      %vm1594 = vcmask 257152
      %1595 = vst.msk [vmem:[#allocation3 + $0x8] sm:$0xf] %vm1594, %v1592
      %v1596 = vld [vmem:[%s320 + $0x4] sm:$0xf]
      %1598 = vrot.lane.b32.xlu0 %v1596, 66
      %v1599 = vpop.permute.xlu0 %1598
      %vm1601 = vcmask 404752
      %1602 = vst.msk [vmem:[#allocation3 + $0x8] sm:$0xf] %vm1601, %v1599
      %v1603 = vld [vmem:[%s320 + $0x4] sm:$0xf]
      %1605 = vrot.lane.b32.xlu0 %v1603, 68
      %v1606 = vpop.permute.xlu0 %1605
      %vm1608 = vcmask 552352
      %1609 = vst.msk [vmem:[#allocation3 + $0x8] sm:$0xf] %vm1608, %v1606
      %v1610 = vld [vmem:[%s6] sm:$0xff]
      %v1611 = vld [vmem:[#allocation2] sm:$0xff]
      %v1612 = vld [vmem:[#allocation2 + $0x8] sm:$0xf]
      %v1613 = vld [vmem:[%s3] sm:$0xf]
      %v1614 = vld [vmem:[#allocation3] sm:$0xff]
      %v1615 = vld [vmem:[#allocation3 + $0x8] sm:$0xf]
      %v1616 = vld [vmem:[%s4] sm:$0xf]
      %v1619 = vunpack.c.l.b16 %v1614
      %v1620 = vunpack.c.h.b16 %v1614
      %v1621 = vunpack.c.l.b16 %v1615
      %v1622 = vpack.c.b16 %v1619, %v1619
      %v1623 = vpack.c.b16 %v1620, %v1620
      %v1624 = vpack.c.b16 %v1621, %v1621
      %vm1625 = vcmask 64512
      %v1627 = vsel %vm1625, %v1616, 0
      %vm1629 = vcmask 1043456
      %v1631 = vsel %vm1629, %v1622, 0
      %v1634 = vsel %vm1629, %v1623, 0
      %v1637 = vsel %vm1629, %v1624, 0
      %1639 = vmatprep.subr.bf16.mxu0 %v1634
      %1640 = vmatpush1.bf16.msra.mxu0 %v1631
      %1641 = vmatprep.subr.bf16.mxu0 0
      %1642 = vmatpush1.bf16.msra.mxu0 0
      %1643 = vmatprep.subr.bf16.mxu0 0
      %1644 = vmatpush1.bf16.msra.mxu0 0
      %1645 = vmatprep.subr.bf16.mxu0 0
      %1646 = vmatpush1.bf16.msra.mxu0 0
      %1647 = vmatprep.subr.bf16.mxu0 0
      %1648 = vmatpush1.bf16.msra.mxu0 0
      %1649 = vmatprep.subr.bf16.mxu0 0
      %1650 = vmatpush1.bf16.msra.mxu0 0
      %1651 = vmatprep.subr.bf16.mxu0 0
      %1652 = vmatpush1.bf16.msra.mxu0 0
      %1653 = vmatprep.subr.bf16.mxu0 0
      %1654 = vmatpush1.bf16.msra.mxu0 0
      %1655 = vmatprep.subr.bf16.mxu0 0
      %1656 = vmatpush1.bf16.msra.mxu0 0
      %1657 = vmatprep.subr.bf16.mxu0 0
      %1658 = vmatpush1.bf16.msra.mxu0 0
      %1659 = vmatprep.subr.bf16.mxu0 0
      %1660 = vmatpush1.bf16.msra.mxu0 0
      %1661 = vmatprep.subr.bf16.mxu0 0
      %1662 = vmatpush1.bf16.msra.mxu0 0
      %1663 = vmatprep.subr.bf16.mxu0 0
      %1664 = vmatpush1.bf16.msra.mxu0 0
      %1665 = vmatprep.subr.bf16.mxu0 0
      %1666 = vmatpush1.bf16.msra.mxu0 0
      %1667 = vmatprep.subr.bf16.mxu0 0
      %1668 = vmatpush1.bf16.msra.mxu0 0
      %1669 = vmatprep.subr.bf16.mxu0 0
      %1670 = vmatpush1.bf16.msra.mxu0 0
      %1671 = vmatprep.mubr.bf16.mxu0 0
      %1672 = vmatmul.mubr.bf16.gmra.mrb[0].mxu0 %v1627
      %v1673 = vpop.f32.mrb[0].mxu0
      %v1674 = vadd.f32 0.0, %v1673
      %v1675 = vpop.f32.mrb[0].mxu0
      %v1676 = vadd.f32 0.0, %v1675
      %v1677 = vpop.f32.mrb[0].mxu0
      %v1678 = vpop.f32.mrb[0].mxu0
      %1679 = vdwg.mxu0
      %1680 = vmatprep.subr.bf16.mxu0 0
      %1681 = vmatpush1.bf16.msra.mxu0 %v1637
      %1682 = vmatprep.subr.bf16.mxu0 0
      %1683 = vmatpush1.bf16.msra.mxu0 0
      %1684 = vmatprep.subr.bf16.mxu0 0
      %1685 = vmatpush1.bf16.msra.mxu0 0
      %1686 = vmatprep.subr.bf16.mxu0 0
      %1687 = vmatpush1.bf16.msra.mxu0 0
      %1688 = vmatprep.subr.bf16.mxu0 0
      %1689 = vmatpush1.bf16.msra.mxu0 0
      %1690 = vmatprep.subr.bf16.mxu0 0
      %1691 = vmatpush1.bf16.msra.mxu0 0
      %1692 = vmatprep.subr.bf16.mxu0 0
      %1693 = vmatpush1.bf16.msra.mxu0 0
      %1694 = vmatprep.subr.bf16.mxu0 0
      %1695 = vmatpush1.bf16.msra.mxu0 0
      %1696 = vmatprep.subr.bf16.mxu0 0
      %1697 = vmatpush1.bf16.msra.mxu0 0
      %1698 = vmatprep.subr.bf16.mxu0 0
      %1699 = vmatpush1.bf16.msra.mxu0 0
      %1700 = vmatprep.subr.bf16.mxu0 0
      %1701 = vmatpush1.bf16.msra.mxu0 0
      %1702 = vmatprep.subr.bf16.mxu0 0
      %1703 = vmatpush1.bf16.msra.mxu0 0
      %1704 = vmatprep.subr.bf16.mxu0 0
      %1705 = vmatpush1.bf16.msra.mxu0 0
      %1706 = vmatprep.subr.bf16.mxu0 0
      %1707 = vmatpush1.bf16.msra.mxu0 0
      %1708 = vmatprep.subr.bf16.mxu0 0
      %1709 = vmatpush1.bf16.msra.mxu0 0
      %1710 = vmatprep.subr.bf16.mxu0 0
      %1711 = vmatpush1.bf16.msra.mxu0 0
      %1712 = vmatprep.mubr.bf16.mxu0 0
      %1713 = vmatmul.mubr.bf16.gmra.mrb[0].mxu0 %v1627
      %v1714 = vpop.f32.mrb[0].mxu0
      %v1715 = vadd.f32 0.0, %v1714
      %v1716 = vpop.f32.mrb[0].mxu0
      %v1717 = vpop.f32.mrb[0].mxu0
      %v1718 = vpop.f32.mrb[0].mxu0
      %1719 = vdwg.mxu0
      %v1722 = vunpack.c.l.b16 %v1611
      %v1723 = vunpack.c.h.b16 %v1611
      %v1724 = vunpack.c.l.b16 %v1612
      %v1725 = vpack.c.b16 %v1722, %v1722
      %v1726 = vpack.c.b16 %v1723, %v1723
      %v1727 = vpack.c.b16 %v1724, %v1724
      %v1729 = vsel %vm1625, %v1613, 0
      %v1732 = vsel %vm1629, %v1725, 0
      %v1735 = vsel %vm1629, %v1726, 0
      %v1738 = vsel %vm1629, %v1727, 0
      %1740 = vmatprep.subr.bf16.mxu0 %v1735
      %1741 = vmatpush1.bf16.msra.mxu0 %v1732
      %1742 = vmatprep.subr.bf16.mxu0 0
      %1743 = vmatpush1.bf16.msra.mxu0 0
      %1744 = vmatprep.subr.bf16.mxu0 0
      %1745 = vmatpush1.bf16.msra.mxu0 0
      %1746 = vmatprep.subr.bf16.mxu0 0
      %1747 = vmatpush1.bf16.msra.mxu0 0
      %1748 = vmatprep.subr.bf16.mxu0 0
      %1749 = vmatpush1.bf16.msra.mxu0 0
      %1750 = vmatprep.subr.bf16.mxu0 0
      %1751 = vmatpush1.bf16.msra.mxu0 0
      %1752 = vmatprep.subr.bf16.mxu0 0
      %1753 = vmatpush1.bf16.msra.mxu0 0
      %1754 = vmatprep.subr.bf16.mxu0 0
      %1755 = vmatpush1.bf16.msra.mxu0 0
      %1756 = vmatprep.subr.bf16.mxu0 0
      %1757 = vmatpush1.bf16.msra.mxu0 0
      %1758 = vmatprep.subr.bf16.mxu0 0
      %1759 = vmatpush1.bf16.msra.mxu0 0
      %1760 = vmatprep.subr.bf16.mxu0 0
      %1761 = vmatpush1.bf16.msra.mxu0 0
      %1762 = vmatprep.subr.bf16.mxu0 0
      %1763 = vmatpush1.bf16.msra.mxu0 0
      %1764 = vmatprep.subr.bf16.mxu0 0
      %1765 = vmatpush1.bf16.msra.mxu0 0
      %1766 = vmatprep.subr.bf16.mxu0 0
      %1767 = vmatpush1.bf16.msra.mxu0 0
      %1768 = vmatprep.subr.bf16.mxu0 0
      %1769 = vmatpush1.bf16.msra.mxu0 0
      %1770 = vmatprep.subr.bf16.mxu0 0
      %1771 = vmatpush1.bf16.msra.mxu0 0
      %1772 = vmatprep.mubr.bf16.mxu0 0
      %1773 = vmatmul.mubr.bf16.gmra.mrb[0].mxu0 %v1729
      %v1774 = vpop.f32.mrb[0].mxu0
      %v1775 = vadd.f32 %v1674, %v1774
      %v1776 = vpop.f32.mrb[0].mxu0
      %v1777 = vadd.f32 %v1676, %v1776
      %v1778 = vpop.f32.mrb[0].mxu0
      %v1779 = vpop.f32.mrb[0].mxu0
      %1780 = vdwg.mxu0
      %1781 = vmatprep.subr.bf16.mxu0 0
      %1782 = vmatpush1.bf16.msra.mxu0 %v1738
      %1783 = vmatprep.subr.bf16.mxu0 0
      %1784 = vmatpush1.bf16.msra.mxu0 0
      %1785 = vmatprep.subr.bf16.mxu0 0
      %1786 = vmatpush1.bf16.msra.mxu0 0
      %1787 = vmatprep.subr.bf16.mxu0 0
      %1788 = vmatpush1.bf16.msra.mxu0 0
      %1789 = vmatprep.subr.bf16.mxu0 0
      %1790 = vmatpush1.bf16.msra.mxu0 0
      %1791 = vmatprep.subr.bf16.mxu0 0
      %1792 = vmatpush1.bf16.msra.mxu0 0
      %1793 = vmatprep.subr.bf16.mxu0 0
      %1794 = vmatpush1.bf16.msra.mxu0 0
      %1795 = vmatprep.subr.bf16.mxu0 0
      %1796 = vmatpush1.bf16.msra.mxu0 0
      %1797 = vmatprep.subr.bf16.mxu0 0
      %1798 = vmatpush1.bf16.msra.mxu0 0
      %1799 = vmatprep.subr.bf16.mxu0 0
      %1800 = vmatpush1.bf16.msra.mxu0 0
      %1801 = vmatprep.subr.bf16.mxu0 0
      %1802 = vmatpush1.bf16.msra.mxu0 0
      %1803 = vmatprep.subr.bf16.mxu0 0
      %1804 = vmatpush1.bf16.msra.mxu0 0
      %1805 = vmatprep.subr.bf16.mxu0 0
      %1806 = vmatpush1.bf16.msra.mxu0 0
      %1807 = vmatprep.subr.bf16.mxu0 0
      %1808 = vmatpush1.bf16.msra.mxu0 0
      %1809 = vmatprep.subr.bf16.mxu0 0
      %1810 = vmatpush1.bf16.msra.mxu0 0
      %1811 = vmatprep.subr.bf16.mxu0 0
      %1812 = vmatpush1.bf16.msra.mxu0 0
      %1813 = vmatprep.mubr.bf16.mxu0 0
      %1814 = vmatmul.mubr.bf16.gmra.mrb[0].mxu0 %v1729
      %v1815 = vpop.f32.mrb[0].mxu0
      %v1816 = vadd.f32 %v1715, %v1815
      %v1817 = vpop.f32.mrb[0].mxu0
      %v1818 = vpop.f32.mrb[0].mxu0
      %v1819 = vpop.f32.mrb[0].mxu0
      %1820 = vdwg.mxu0
      %s1821 = scalar_lea.vmem %s3, 4
      %v1822 = vld [vmem:[%s1821] sm:$0xf]
      %1823 = vrot.lane.b32.xlu0 %v1725, 127
      %v1824 = vpop.permute.xlu0 %1823
      %1825 = vrot.lane.b32.xlu0 %v1726, 127
      %v1826 = vpop.permute.xlu0 %1825
      %1827 = vrot.lane.b32.xlu0 %v1727, 127
      %v1828 = vpop.permute.xlu0 %1827
      %v1829 = vsel %vm363, %v1824, %v1826
      %v1830 = vsel %vm363, %v1826, %v1828
      %v1832 = vsel %vm1625, %v1822, 0
      %v1835 = vsel %vm1629, %v1829, 0
      %v1838 = vsel %vm1629, %v1830, 0
      %v1841 = vsel %vm1629, %v1828, 0
      %1843 = vmatprep.subr.bf16.mxu0 %v1838
      %1844 = vmatpush1.bf16.msra.mxu0 %v1835
      %1845 = vmatprep.subr.bf16.mxu0 0
      %1846 = vmatpush1.bf16.msra.mxu0 0
      %1847 = vmatprep.subr.bf16.mxu0 0
      %1848 = vmatpush1.bf16.msra.mxu0 0
      %1849 = vmatprep.subr.bf16.mxu0 0
      %1850 = vmatpush1.bf16.msra.mxu0 0
      %1851 = vmatprep.subr.bf16.mxu0 0
      %1852 = vmatpush1.bf16.msra.mxu0 0
      %1853 = vmatprep.subr.bf16.mxu0 0
      %1854 = vmatpush1.bf16.msra.mxu0 0
      %1855 = vmatprep.subr.bf16.mxu0 0
      %1856 = vmatpush1.bf16.msra.mxu0 0
      %1857 = vmatprep.subr.bf16.mxu0 0
      %1858 = vmatpush1.bf16.msra.mxu0 0
      %1859 = vmatprep.subr.bf16.mxu0 0
      %1860 = vmatpush1.bf16.msra.mxu0 0
      %1861 = vmatprep.subr.bf16.mxu0 0
      %1862 = vmatpush1.bf16.msra.mxu0 0
      %1863 = vmatprep.subr.bf16.mxu0 0
      %1864 = vmatpush1.bf16.msra.mxu0 0
      %1865 = vmatprep.subr.bf16.mxu0 0
      %1866 = vmatpush1.bf16.msra.mxu0 0
      %1867 = vmatprep.subr.bf16.mxu0 0
      %1868 = vmatpush1.bf16.msra.mxu0 0
      %1869 = vmatprep.subr.bf16.mxu0 0
      %1870 = vmatpush1.bf16.msra.mxu0 0
      %1871 = vmatprep.subr.bf16.mxu0 0
      %1872 = vmatpush1.bf16.msra.mxu0 0
      %1873 = vmatprep.subr.bf16.mxu0 0
      %1874 = vmatpush1.bf16.msra.mxu0 0
      %1875 = vmatprep.mubr.bf16.mxu0 0
      %1876 = vmatmul.mubr.bf16.gmra.mrb[0].mxu0 %v1832
      %v1877 = vpop.f32.mrb[0].mxu0
      %v1878 = vadd.f32 0.0, %v1877
      %v1879 = vpop.f32.mrb[0].mxu0
      %v1880 = vadd.f32 0.0, %v1879
      %v1881 = vpop.f32.mrb[0].mxu0
      %v1882 = vpop.f32.mrb[0].mxu0
      %1883 = vdwg.mxu0
      %1884 = vmatprep.subr.bf16.mxu0 0
      %1885 = vmatpush1.bf16.msra.mxu0 %v1841
      %1886 = vmatprep.subr.bf16.mxu0 0
      %1887 = vmatpush1.bf16.msra.mxu0 0
      %1888 = vmatprep.subr.bf16.mxu0 0
      %1889 = vmatpush1.bf16.msra.mxu0 0
      %1890 = vmatprep.subr.bf16.mxu0 0
      %1891 = vmatpush1.bf16.msra.mxu0 0
      %1892 = vmatprep.subr.bf16.mxu0 0
      %1893 = vmatpush1.bf16.msra.mxu0 0
      %1894 = vmatprep.subr.bf16.mxu0 0
      %1895 = vmatpush1.bf16.msra.mxu0 0
      %1896 = vmatprep.subr.bf16.mxu0 0
      %1897 = vmatpush1.bf16.msra.mxu0 0
      %1898 = vmatprep.subr.bf16.mxu0 0
      %1899 = vmatpush1.bf16.msra.mxu0 0
      %1900 = vmatprep.subr.bf16.mxu0 0
      %1901 = vmatpush1.bf16.msra.mxu0 0
      %1902 = vmatprep.subr.bf16.mxu0 0
      %1903 = vmatpush1.bf16.msra.mxu0 0
      %1904 = vmatprep.subr.bf16.mxu0 0
      %1905 = vmatpush1.bf16.msra.mxu0 0
      %1906 = vmatprep.subr.bf16.mxu0 0
      %1907 = vmatpush1.bf16.msra.mxu0 0
      %1908 = vmatprep.subr.bf16.mxu0 0
      %1909 = vmatpush1.bf16.msra.mxu0 0
      %1910 = vmatprep.subr.bf16.mxu0 0
      %1911 = vmatpush1.bf16.msra.mxu0 0
      %1912 = vmatprep.subr.bf16.mxu0 0
      %1913 = vmatpush1.bf16.msra.mxu0 0
      %1914 = vmatprep.subr.bf16.mxu0 0
      %1915 = vmatpush1.bf16.msra.mxu0 0
      %1916 = vmatprep.mubr.bf16.mxu0 0
      %1917 = vmatmul.mubr.bf16.gmra.mrb[0].mxu0 %v1832
      %v1918 = vpop.f32.mrb[0].mxu0
      %v1919 = vadd.f32 0.0, %v1918
      %v1920 = vpop.f32.mrb[0].mxu0
      %v1921 = vpop.f32.mrb[0].mxu0
      %v1922 = vpop.f32.mrb[0].mxu0
      %1923 = vdwg.mxu0
      %v1924 = vadd.f32 %v1775, %v1878
      %v1925 = vadd.f32 %v1777, %v1880
      %v1926 = vadd.f32 %v1816, %v1919
      %s1927 = scalar_lea.vmem %s4, 4
      %v1928 = vld [vmem:[%s1927] sm:$0xf]
      %1929 = vrot.lane.b32.xlu0 %v1622, 127
      %v1930 = vpop.permute.xlu0 %1929
      %1931 = vrot.lane.b32.xlu0 %v1623, 127
      %v1932 = vpop.permute.xlu0 %1931
      %1933 = vrot.lane.b32.xlu0 %v1624, 127
      %v1934 = vpop.permute.xlu0 %1933
      %v1935 = vsel %vm363, %v1930, %v1932
      %v1936 = vsel %vm363, %v1932, %v1934
      %v1938 = vsel %vm1625, %v1928, 0
      %v1941 = vsel %vm1629, %v1935, 0
      %v1944 = vsel %vm1629, %v1936, 0
      %v1947 = vsel %vm1629, %v1934, 0
      %1949 = vmatprep.subr.bf16.mxu0 %v1944
      %1950 = vmatpush1.bf16.msra.mxu0 %v1941
      %1951 = vmatprep.subr.bf16.mxu0 0
      %1952 = vmatpush1.bf16.msra.mxu0 0
      %1953 = vmatprep.subr.bf16.mxu0 0
      %1954 = vmatpush1.bf16.msra.mxu0 0
      %1955 = vmatprep.subr.bf16.mxu0 0
      %1956 = vmatpush1.bf16.msra.mxu0 0
      %1957 = vmatprep.subr.bf16.mxu0 0
      %1958 = vmatpush1.bf16.msra.mxu0 0
      %1959 = vmatprep.subr.bf16.mxu0 0
      %1960 = vmatpush1.bf16.msra.mxu0 0
      %1961 = vmatprep.subr.bf16.mxu0 0
      %1962 = vmatpush1.bf16.msra.mxu0 0
      %1963 = vmatprep.subr.bf16.mxu0 0
      %1964 = vmatpush1.bf16.msra.mxu0 0
      %1965 = vmatprep.subr.bf16.mxu0 0
      %1966 = vmatpush1.bf16.msra.mxu0 0
      %1967 = vmatprep.subr.bf16.mxu0 0
      %1968 = vmatpush1.bf16.msra.mxu0 0
      %1969 = vmatprep.subr.bf16.mxu0 0
      %1970 = vmatpush1.bf16.msra.mxu0 0
      %1971 = vmatprep.subr.bf16.mxu0 0
      %1972 = vmatpush1.bf16.msra.mxu0 0
      %1973 = vmatprep.subr.bf16.mxu0 0
      %1974 = vmatpush1.bf16.msra.mxu0 0
      %1975 = vmatprep.subr.bf16.mxu0 0
      %1976 = vmatpush1.bf16.msra.mxu0 0
      %1977 = vmatprep.subr.bf16.mxu0 0
      %1978 = vmatpush1.bf16.msra.mxu0 0
      %1979 = vmatprep.subr.bf16.mxu0 0
      %1980 = vmatpush1.bf16.msra.mxu0 0
      %1981 = vmatprep.mubr.bf16.mxu0 0
      %1982 = vmatmul.mubr.bf16.gmra.mrb[0].mxu0 %v1938
      %v1983 = vpop.f32.mrb[0].mxu0
      %v1984 = vadd.f32 0.0, %v1983
      %v1985 = vpop.f32.mrb[0].mxu0
      %v1986 = vadd.f32 0.0, %v1985
      %v1987 = vpop.f32.mrb[0].mxu0
      %v1988 = vpop.f32.mrb[0].mxu0
      %1989 = vdwg.mxu0
      %1990 = vmatprep.subr.bf16.mxu0 0
      %1991 = vmatpush1.bf16.msra.mxu0 %v1947
      %1992 = vmatprep.subr.bf16.mxu0 0
      %1993 = vmatpush1.bf16.msra.mxu0 0
      %1994 = vmatprep.subr.bf16.mxu0 0
      %1995 = vmatpush1.bf16.msra.mxu0 0
      %1996 = vmatprep.subr.bf16.mxu0 0
      %1997 = vmatpush1.bf16.msra.mxu0 0
      %1998 = vmatprep.subr.bf16.mxu0 0
      %1999 = vmatpush1.bf16.msra.mxu0 0
      %2000 = vmatprep.subr.bf16.mxu0 0
      %2001 = vmatpush1.bf16.msra.mxu0 0
      %2002 = vmatprep.subr.bf16.mxu0 0
      %2003 = vmatpush1.bf16.msra.mxu0 0
      %2004 = vmatprep.subr.bf16.mxu0 0
      %2005 = vmatpush1.bf16.msra.mxu0 0
      %2006 = vmatprep.subr.bf16.mxu0 0
      %2007 = vmatpush1.bf16.msra.mxu0 0
      %2008 = vmatprep.subr.bf16.mxu0 0
      %2009 = vmatpush1.bf16.msra.mxu0 0
      %2010 = vmatprep.subr.bf16.mxu0 0
      %2011 = vmatpush1.bf16.msra.mxu0 0
      %2012 = vmatprep.subr.bf16.mxu0 0
      %2013 = vmatpush1.bf16.msra.mxu0 0
      %2014 = vmatprep.subr.bf16.mxu0 0
      %2015 = vmatpush1.bf16.msra.mxu0 0
      %2016 = vmatprep.subr.bf16.mxu0 0
      %2017 = vmatpush1.bf16.msra.mxu0 0
      %2018 = vmatprep.subr.bf16.mxu0 0
      %2019 = vmatpush1.bf16.msra.mxu0 0
      %2020 = vmatprep.subr.bf16.mxu0 0
      %2021 = vmatpush1.bf16.msra.mxu0 0
      %2022 = vmatprep.mubr.bf16.mxu0 0
      %2023 = vmatmul.mubr.bf16.gmra.mrb[0].mxu0 %v1938
      %v2024 = vpop.f32.mrb[0].mxu0
      %v2025 = vadd.f32 0.0, %v2024
      %v2026 = vpop.f32.mrb[0].mxu0
      %v2027 = vpop.f32.mrb[0].mxu0
      %v2028 = vpop.f32.mrb[0].mxu0
      %2029 = vdwg.mxu0
      %v2030 = vadd.f32 %v1924, %v1984
      %v2031 = vadd.f32 %v1925, %v1986
      %v2032 = vadd.f32 %v1926, %v2025
      %s2033 = scalar_lea.vmem %s3, 8
      %v2034 = vld [vmem:[%s2033] sm:$0xf]
      %2035 = vrot.lane.b32.xlu0 %v1725, 126
      %v2036 = vpop.permute.xlu0 %2035
      %2037 = vrot.lane.b32.xlu0 %v1726, 126
      %v2038 = vpop.permute.xlu0 %2037
      %2039 = vrot.lane.b32.xlu0 %v1727, 126
      %v2040 = vpop.permute.xlu0 %2039
      %v2041 = vsel %vm580, %v2036, %v2038
      %v2042 = vsel %vm580, %v2038, %v2040
      %v2044 = vsel %vm1625, %v2034, 0
      %v2047 = vsel %vm1629, %v2041, 0
      %v2050 = vsel %vm1629, %v2042, 0
      %v2053 = vsel %vm1629, %v2040, 0
      %2055 = vmatprep.subr.bf16.mxu0 %v2050
      %2056 = vmatpush1.bf16.msra.mxu0 %v2047
      %2057 = vmatprep.subr.bf16.mxu0 0
      %2058 = vmatpush1.bf16.msra.mxu0 0
      %2059 = vmatprep.subr.bf16.mxu0 0
      %2060 = vmatpush1.bf16.msra.mxu0 0
      %2061 = vmatprep.subr.bf16.mxu0 0
      %2062 = vmatpush1.bf16.msra.mxu0 0
      %2063 = vmatprep.subr.bf16.mxu0 0
      %2064 = vmatpush1.bf16.msra.mxu0 0
      %2065 = vmatprep.subr.bf16.mxu0 0
      %2066 = vmatpush1.bf16.msra.mxu0 0
      %2067 = vmatprep.subr.bf16.mxu0 0
      %2068 = vmatpush1.bf16.msra.mxu0 0
      %2069 = vmatprep.subr.bf16.mxu0 0
      %2070 = vmatpush1.bf16.msra.mxu0 0
      %2071 = vmatprep.subr.bf16.mxu0 0
      %2072 = vmatpush1.bf16.msra.mxu0 0
      %2073 = vmatprep.subr.bf16.mxu0 0
      %2074 = vmatpush1.bf16.msra.mxu0 0
      %2075 = vmatprep.subr.bf16.mxu0 0
      %2076 = vmatpush1.bf16.msra.mxu0 0
      %2077 = vmatprep.subr.bf16.mxu0 0
      %2078 = vmatpush1.bf16.msra.mxu0 0
      %2079 = vmatprep.subr.bf16.mxu0 0
      %2080 = vmatpush1.bf16.msra.mxu0 0
      %2081 = vmatprep.subr.bf16.mxu0 0
      %2082 = vmatpush1.bf16.msra.mxu0 0
      %2083 = vmatprep.subr.bf16.mxu0 0
      %2084 = vmatpush1.bf16.msra.mxu0 0
      %2085 = vmatprep.subr.bf16.mxu0 0
      %2086 = vmatpush1.bf16.msra.mxu0 0
      %2087 = vmatprep.mubr.bf16.mxu0 0
      %2088 = vmatmul.mubr.bf16.gmra.mrb[0].mxu0 %v2044
      %v2089 = vpop.f32.mrb[0].mxu0
      %v2090 = vadd.f32 0.0, %v2089
      %v2091 = vpop.f32.mrb[0].mxu0
      %v2092 = vadd.f32 0.0, %v2091
      %v2093 = vpop.f32.mrb[0].mxu0
      %v2094 = vpop.f32.mrb[0].mxu0
      %2095 = vdwg.mxu0
      %2096 = vmatprep.subr.bf16.mxu0 0
      %2097 = vmatpush1.bf16.msra.mxu0 %v2053
      %2098 = vmatprep.subr.bf16.mxu0 0
      %2099 = vmatpush1.bf16.msra.mxu0 0
      %2100 = vmatprep.subr.bf16.mxu0 0
      %2101 = vmatpush1.bf16.msra.mxu0 0
      %2102 = vmatprep.subr.bf16.mxu0 0
      %2103 = vmatpush1.bf16.msra.mxu0 0
      %2104 = vmatprep.subr.bf16.mxu0 0
      %2105 = vmatpush1.bf16.msra.mxu0 0
      %2106 = vmatprep.subr.bf16.mxu0 0
      %2107 = vmatpush1.bf16.msra.mxu0 0
      %2108 = vmatprep.subr.bf16.mxu0 0
      %2109 = vmatpush1.bf16.msra.mxu0 0
      %2110 = vmatprep.subr.bf16.mxu0 0
      %2111 = vmatpush1.bf16.msra.mxu0 0
      %2112 = vmatprep.subr.bf16.mxu0 0
      %2113 = vmatpush1.bf16.msra.mxu0 0
      %2114 = vmatprep.subr.bf16.mxu0 0
      %2115 = vmatpush1.bf16.msra.mxu0 0
      %2116 = vmatprep.subr.bf16.mxu0 0
      %2117 = vmatpush1.bf16.msra.mxu0 0
      %2118 = vmatprep.subr.bf16.mxu0 0
      %2119 = vmatpush1.bf16.msra.mxu0 0
      %2120 = vmatprep.subr.bf16.mxu0 0
      %2121 = vmatpush1.bf16.msra.mxu0 0
      %2122 = vmatprep.subr.bf16.mxu0 0
      %2123 = vmatpush1.bf16.msra.mxu0 0
      %2124 = vmatprep.subr.bf16.mxu0 0
      %2125 = vmatpush1.bf16.msra.mxu0 0
      %2126 = vmatprep.subr.bf16.mxu0 0
      %2127 = vmatpush1.bf16.msra.mxu0 0
      %2128 = vmatprep.mubr.bf16.mxu0 0
      %2129 = vmatmul.mubr.bf16.gmra.mrb[0].mxu0 %v2044
      %v2130 = vpop.f32.mrb[0].mxu0
      %v2131 = vadd.f32 0.0, %v2130
      %v2132 = vpop.f32.mrb[0].mxu0
      %v2133 = vpop.f32.mrb[0].mxu0
      %v2134 = vpop.f32.mrb[0].mxu0
      %2135 = vdwg.mxu0
      %v2136 = vadd.f32 %v2030, %v2090
      %v2137 = vadd.f32 %v2031, %v2092
      %v2138 = vadd.f32 %v2032, %v2131
      %s2139 = scalar_lea.vmem %s4, 8
      %v2140 = vld [vmem:[%s2139] sm:$0xf]
      %2141 = vrot.lane.b32.xlu0 %v1622, 126
      %v2142 = vpop.permute.xlu0 %2141
      %2143 = vrot.lane.b32.xlu0 %v1623, 126
      %v2144 = vpop.permute.xlu0 %2143
      %2145 = vrot.lane.b32.xlu0 %v1624, 126
      %v2146 = vpop.permute.xlu0 %2145
      %v2147 = vsel %vm580, %v2142, %v2144
      %v2148 = vsel %vm580, %v2144, %v2146
      %v2150 = vsel %vm1625, %v2140, 0
      %v2153 = vsel %vm1629, %v2147, 0
      %v2156 = vsel %vm1629, %v2148, 0
      %v2159 = vsel %vm1629, %v2146, 0
      %2161 = vmatprep.subr.bf16.mxu0 %v2156
      %2162 = vmatpush1.bf16.msra.mxu0 %v2153
      %2163 = vmatprep.subr.bf16.mxu0 0
      %2164 = vmatpush1.bf16.msra.mxu0 0
      %2165 = vmatprep.subr.bf16.mxu0 0
      %2166 = vmatpush1.bf16.msra.mxu0 0
      %2167 = vmatprep.subr.bf16.mxu0 0
      %2168 = vmatpush1.bf16.msra.mxu0 0
      %2169 = vmatprep.subr.bf16.mxu0 0
      %2170 = vmatpush1.bf16.msra.mxu0 0
      %2171 = vmatprep.subr.bf16.mxu0 0
      %2172 = vmatpush1.bf16.msra.mxu0 0
      %2173 = vmatprep.subr.bf16.mxu0 0
      %2174 = vmatpush1.bf16.msra.mxu0 0
      %2175 = vmatprep.subr.bf16.mxu0 0
      %2176 = vmatpush1.bf16.msra.mxu0 0
      %2177 = vmatprep.subr.bf16.mxu0 0
      %2178 = vmatpush1.bf16.msra.mxu0 0
      %2179 = vmatprep.subr.bf16.mxu0 0
      %2180 = vmatpush1.bf16.msra.mxu0 0
      %2181 = vmatprep.subr.bf16.mxu0 0
      %2182 = vmatpush1.bf16.msra.mxu0 0
      %2183 = vmatprep.subr.bf16.mxu0 0
      %2184 = vmatpush1.bf16.msra.mxu0 0
      %2185 = vmatprep.subr.bf16.mxu0 0
      %2186 = vmatpush1.bf16.msra.mxu0 0
      %2187 = vmatprep.subr.bf16.mxu0 0
      %2188 = vmatpush1.bf16.msra.mxu0 0
      %2189 = vmatprep.subr.bf16.mxu0 0
      %2190 = vmatpush1.bf16.msra.mxu0 0
      %2191 = vmatprep.subr.bf16.mxu0 0
      %2192 = vmatpush1.bf16.msra.mxu0 0
      %2193 = vmatprep.mubr.bf16.mxu0 0
      %2194 = vmatmul.mubr.bf16.gmra.mrb[0].mxu0 %v2150
      %v2195 = vpop.f32.mrb[0].mxu0
      %v2196 = vadd.f32 0.0, %v2195
      %v2197 = vpop.f32.mrb[0].mxu0
      %v2198 = vadd.f32 0.0, %v2197
      %v2199 = vpop.f32.mrb[0].mxu0
      %v2200 = vpop.f32.mrb[0].mxu0
      %2201 = vdwg.mxu0
      %2202 = vmatprep.subr.bf16.mxu0 0
      %2203 = vmatpush1.bf16.msra.mxu0 %v2159
      %2204 = vmatprep.subr.bf16.mxu0 0
      %2205 = vmatpush1.bf16.msra.mxu0 0
      %2206 = vmatprep.subr.bf16.mxu0 0
      %2207 = vmatpush1.bf16.msra.mxu0 0
      %2208 = vmatprep.subr.bf16.mxu0 0
      %2209 = vmatpush1.bf16.msra.mxu0 0
      %2210 = vmatprep.subr.bf16.mxu0 0
      %2211 = vmatpush1.bf16.msra.mxu0 0
      %2212 = vmatprep.subr.bf16.mxu0 0
      %2213 = vmatpush1.bf16.msra.mxu0 0
      %2214 = vmatprep.subr.bf16.mxu0 0
      %2215 = vmatpush1.bf16.msra.mxu0 0
      %2216 = vmatprep.subr.bf16.mxu0 0
      %2217 = vmatpush1.bf16.msra.mxu0 0
      %2218 = vmatprep.subr.bf16.mxu0 0
      %2219 = vmatpush1.bf16.msra.mxu0 0
      %2220 = vmatprep.subr.bf16.mxu0 0
      %2221 = vmatpush1.bf16.msra.mxu0 0
      %2222 = vmatprep.subr.bf16.mxu0 0
      %2223 = vmatpush1.bf16.msra.mxu0 0
      %2224 = vmatprep.subr.bf16.mxu0 0
      %2225 = vmatpush1.bf16.msra.mxu0 0
      %2226 = vmatprep.subr.bf16.mxu0 0
      %2227 = vmatpush1.bf16.msra.mxu0 0
      %2228 = vmatprep.subr.bf16.mxu0 0
      %2229 = vmatpush1.bf16.msra.mxu0 0
      %2230 = vmatprep.subr.bf16.mxu0 0
      %2231 = vmatpush1.bf16.msra.mxu0 0
      %2232 = vmatprep.subr.bf16.mxu0 0
      %2233 = vmatpush1.bf16.msra.mxu0 0
      %2234 = vmatprep.mubr.bf16.mxu0 0
      %2235 = vmatmul.mubr.bf16.gmra.mrb[0].mxu0 %v2150
      %v2236 = vpop.f32.mrb[0].mxu0
      %v2237 = vadd.f32 0.0, %v2236
      %v2238 = vpop.f32.mrb[0].mxu0
      %v2239 = vpop.f32.mrb[0].mxu0
      %v2240 = vpop.f32.mrb[0].mxu0
      %2241 = vdwg.mxu0
      %v2242 = vadd.f32 %v2136, %v2196
      %v2243 = vadd.f32 %v2137, %v2198
      %v2244 = vadd.f32 %v2138, %v2237
      %s2245 = scalar_lea.vmem %s3, 12
      %v2246 = vld [vmem:[%s2245] sm:$0xf]
      %2247 = vrot.lane.b32.xlu0 %v1725, 110
      %v2248 = vpop.permute.xlu0 %2247
      %2249 = vrot.lane.b32.xlu0 %v1726, 110
      %v2250 = vpop.permute.xlu0 %2249
      %2251 = vrot.lane.b32.xlu0 %v1727, 110
      %v2252 = vpop.permute.xlu0 %2251
      %v2253 = vsel %vm705, %v2248, %v2250
      %v2254 = vsel %vm705, %v2250, %v2252
      %v2256 = vsel %vm1625, %v2246, 0
      %v2259 = vsel %vm1629, %v2253, 0
      %v2262 = vsel %vm1629, %v2254, 0
      %v2265 = vsel %vm1629, %v2252, 0
      %2267 = vmatprep.subr.bf16.mxu0 %v2262
      %2268 = vmatpush1.bf16.msra.mxu0 %v2259
      %2269 = vmatprep.subr.bf16.mxu0 0
      %2270 = vmatpush1.bf16.msra.mxu0 0
      %2271 = vmatprep.subr.bf16.mxu0 0
      %2272 = vmatpush1.bf16.msra.mxu0 0
      %2273 = vmatprep.subr.bf16.mxu0 0
      %2274 = vmatpush1.bf16.msra.mxu0 0
      %2275 = vmatprep.subr.bf16.mxu0 0
      %2276 = vmatpush1.bf16.msra.mxu0 0
      %2277 = vmatprep.subr.bf16.mxu0 0
      %2278 = vmatpush1.bf16.msra.mxu0 0
      %2279 = vmatprep.subr.bf16.mxu0 0
      %2280 = vmatpush1.bf16.msra.mxu0 0
      %2281 = vmatprep.subr.bf16.mxu0 0
      %2282 = vmatpush1.bf16.msra.mxu0 0
      %2283 = vmatprep.subr.bf16.mxu0 0
      %2284 = vmatpush1.bf16.msra.mxu0 0
      %2285 = vmatprep.subr.bf16.mxu0 0
      %2286 = vmatpush1.bf16.msra.mxu0 0
      %2287 = vmatprep.subr.bf16.mxu0 0
      %2288 = vmatpush1.bf16.msra.mxu0 0
      %2289 = vmatprep.subr.bf16.mxu0 0
      %2290 = vmatpush1.bf16.msra.mxu0 0
      %2291 = vmatprep.subr.bf16.mxu0 0
      %2292 = vmatpush1.bf16.msra.mxu0 0
      %2293 = vmatprep.subr.bf16.mxu0 0
      %2294 = vmatpush1.bf16.msra.mxu0 0
      %2295 = vmatprep.subr.bf16.mxu0 0
      %2296 = vmatpush1.bf16.msra.mxu0 0
      %2297 = vmatprep.subr.bf16.mxu0 0
      %2298 = vmatpush1.bf16.msra.mxu0 0
      %2299 = vmatprep.mubr.bf16.mxu0 0
      %2300 = vmatmul.mubr.bf16.gmra.mrb[0].mxu0 %v2256
      %v2301 = vpop.f32.mrb[0].mxu0
      %v2302 = vadd.f32 0.0, %v2301
      %v2303 = vpop.f32.mrb[0].mxu0
      %v2304 = vadd.f32 0.0, %v2303
      %v2305 = vpop.f32.mrb[0].mxu0
      %v2306 = vpop.f32.mrb[0].mxu0
      %2307 = vdwg.mxu0
      %2308 = vmatprep.subr.bf16.mxu0 0
      %2309 = vmatpush1.bf16.msra.mxu0 %v2265
      %2310 = vmatprep.subr.bf16.mxu0 0
      %2311 = vmatpush1.bf16.msra.mxu0 0
      %2312 = vmatprep.subr.bf16.mxu0 0
      %2313 = vmatpush1.bf16.msra.mxu0 0
      %2314 = vmatprep.subr.bf16.mxu0 0
      %2315 = vmatpush1.bf16.msra.mxu0 0
      %2316 = vmatprep.subr.bf16.mxu0 0
      %2317 = vmatpush1.bf16.msra.mxu0 0
      %2318 = vmatprep.subr.bf16.mxu0 0
      %2319 = vmatpush1.bf16.msra.mxu0 0
      %2320 = vmatprep.subr.bf16.mxu0 0
      %2321 = vmatpush1.bf16.msra.mxu0 0
      %2322 = vmatprep.subr.bf16.mxu0 0
      %2323 = vmatpush1.bf16.msra.mxu0 0
      %2324 = vmatprep.subr.bf16.mxu0 0
      %2325 = vmatpush1.bf16.msra.mxu0 0
      %2326 = vmatprep.subr.bf16.mxu0 0
      %2327 = vmatpush1.bf16.msra.mxu0 0
      %2328 = vmatprep.subr.bf16.mxu0 0
      %2329 = vmatpush1.bf16.msra.mxu0 0
      %2330 = vmatprep.subr.bf16.mxu0 0
      %2331 = vmatpush1.bf16.msra.mxu0 0
      %2332 = vmatprep.subr.bf16.mxu0 0
      %2333 = vmatpush1.bf16.msra.mxu0 0
      %2334 = vmatprep.subr.bf16.mxu0 0
      %2335 = vmatpush1.bf16.msra.mxu0 0
      %2336 = vmatprep.subr.bf16.mxu0 0
      %2337 = vmatpush1.bf16.msra.mxu0 0
      %2338 = vmatprep.subr.bf16.mxu0 0
      %2339 = vmatpush1.bf16.msra.mxu0 0
      %2340 = vmatprep.mubr.bf16.mxu0 0
      %2341 = vmatmul.mubr.bf16.gmra.mrb[0].mxu0 %v2256
      %v2342 = vpop.f32.mrb[0].mxu0
      %v2343 = vadd.f32 0.0, %v2342
      %v2344 = vpop.f32.mrb[0].mxu0
      %v2345 = vpop.f32.mrb[0].mxu0
      %v2346 = vpop.f32.mrb[0].mxu0
      %2347 = vdwg.mxu0
      %v2348 = vadd.f32 %v2242, %v2302
      %v2349 = vadd.f32 %v2243, %v2304
      %v2350 = vadd.f32 %v2244, %v2343
      %s2351 = scalar_lea.vmem %s4, 12
      %v2352 = vld [vmem:[%s2351] sm:$0xf]
      %2353 = vrot.lane.b32.xlu0 %v1622, 110
      %v2354 = vpop.permute.xlu0 %2353
      %2355 = vrot.lane.b32.xlu0 %v1623, 110
      %v2356 = vpop.permute.xlu0 %2355
      %2357 = vrot.lane.b32.xlu0 %v1624, 110
      %v2358 = vpop.permute.xlu0 %2357
      %v2359 = vsel %vm705, %v2354, %v2356
      %v2360 = vsel %vm705, %v2356, %v2358
      %v2362 = vsel %vm1625, %v2352, 0
      %v2365 = vsel %vm1629, %v2359, 0
      %v2368 = vsel %vm1629, %v2360, 0
      %v2371 = vsel %vm1629, %v2358, 0
      %2373 = vmatprep.subr.bf16.mxu0 %v2368
      %2374 = vmatpush1.bf16.msra.mxu0 %v2365
      %2375 = vmatprep.subr.bf16.mxu0 0
      %2376 = vmatpush1.bf16.msra.mxu0 0
      %2377 = vmatprep.subr.bf16.mxu0 0
      %2378 = vmatpush1.bf16.msra.mxu0 0
      %2379 = vmatprep.subr.bf16.mxu0 0
      %2380 = vmatpush1.bf16.msra.mxu0 0
      %2381 = vmatprep.subr.bf16.mxu0 0
      %2382 = vmatpush1.bf16.msra.mxu0 0
      %2383 = vmatprep.subr.bf16.mxu0 0
      %2384 = vmatpush1.bf16.msra.mxu0 0
      %2385 = vmatprep.subr.bf16.mxu0 0
      %2386 = vmatpush1.bf16.msra.mxu0 0
      %2387 = vmatprep.subr.bf16.mxu0 0
      %2388 = vmatpush1.bf16.msra.mxu0 0
      %2389 = vmatprep.subr.bf16.mxu0 0
      %2390 = vmatpush1.bf16.msra.mxu0 0
      %2391 = vmatprep.subr.bf16.mxu0 0
      %2392 = vmatpush1.bf16.msra.mxu0 0
      %2393 = vmatprep.subr.bf16.mxu0 0
      %2394 = vmatpush1.bf16.msra.mxu0 0
      %2395 = vmatprep.subr.bf16.mxu0 0
      %2396 = vmatpush1.bf16.msra.mxu0 0
      %2397 = vmatprep.subr.bf16.mxu0 0
      %2398 = vmatpush1.bf16.msra.mxu0 0
      %2399 = vmatprep.subr.bf16.mxu0 0
      %2400 = vmatpush1.bf16.msra.mxu0 0
      %2401 = vmatprep.subr.bf16.mxu0 0
      %2402 = vmatpush1.bf16.msra.mxu0 0
      %2403 = vmatprep.subr.bf16.mxu0 0
      %2404 = vmatpush1.bf16.msra.mxu0 0
      %2405 = vmatprep.mubr.bf16.mxu0 0
      %2406 = vmatmul.mubr.bf16.gmra.mrb[0].mxu0 %v2362
      %v2407 = vpop.f32.mrb[0].mxu0
      %v2408 = vadd.f32 0.0, %v2407
      %v2409 = vpop.f32.mrb[0].mxu0
      %v2410 = vadd.f32 0.0, %v2409
      %v2411 = vpop.f32.mrb[0].mxu0
      %v2412 = vpop.f32.mrb[0].mxu0
      %2413 = vdwg.mxu0
      %2414 = vmatprep.subr.bf16.mxu0 0
      %2415 = vmatpush1.bf16.msra.mxu0 %v2371
      %2416 = vmatprep.subr.bf16.mxu0 0
      %2417 = vmatpush1.bf16.msra.mxu0 0
      %2418 = vmatprep.subr.bf16.mxu0 0
      %2419 = vmatpush1.bf16.msra.mxu0 0
      %2420 = vmatprep.subr.bf16.mxu0 0
      %2421 = vmatpush1.bf16.msra.mxu0 0
      %2422 = vmatprep.subr.bf16.mxu0 0
      %2423 = vmatpush1.bf16.msra.mxu0 0
      %2424 = vmatprep.subr.bf16.mxu0 0
      %2425 = vmatpush1.bf16.msra.mxu0 0
      %2426 = vmatprep.subr.bf16.mxu0 0
      %2427 = vmatpush1.bf16.msra.mxu0 0
      %2428 = vmatprep.subr.bf16.mxu0 0
      %2429 = vmatpush1.bf16.msra.mxu0 0
      %2430 = vmatprep.subr.bf16.mxu0 0
      %2431 = vmatpush1.bf16.msra.mxu0 0
      %2432 = vmatprep.subr.bf16.mxu0 0
      %2433 = vmatpush1.bf16.msra.mxu0 0
      %2434 = vmatprep.subr.bf16.mxu0 0
      %2435 = vmatpush1.bf16.msra.mxu0 0
      %2436 = vmatprep.subr.bf16.mxu0 0
      %2437 = vmatpush1.bf16.msra.mxu0 0
      %2438 = vmatprep.subr.bf16.mxu0 0
      %2439 = vmatpush1.bf16.msra.mxu0 0
      %2440 = vmatprep.subr.bf16.mxu0 0
      %2441 = vmatpush1.bf16.msra.mxu0 0
      %2442 = vmatprep.subr.bf16.mxu0 0
      %2443 = vmatpush1.bf16.msra.mxu0 0
      %2444 = vmatprep.subr.bf16.mxu0 0
      %2445 = vmatpush1.bf16.msra.mxu0 0
      %2446 = vmatprep.mubr.bf16.mxu0 0
      %2447 = vmatmul.mubr.bf16.gmra.mrb[0].mxu0 %v2362
      %v2448 = vpop.f32.mrb[0].mxu0
      %v2449 = vadd.f32 0.0, %v2448
      %v2450 = vpop.f32.mrb[0].mxu0
      %v2451 = vpop.f32.mrb[0].mxu0
      %v2452 = vpop.f32.mrb[0].mxu0
      %2453 = vdwg.mxu0
      %v2454 = vadd.f32 %v2348, %v2408
      %v2455 = vadd.f32 %v2349, %v2410
      %v2456 = vadd.f32 %v2350, %v2449
      %s2457 = scalar_lea.vmem %s3, 16
      %v2458 = vld [vmem:[%s2457] sm:$0xf]
      %2459 = vrot.lane.b32.xlu0 %v1725, 109
      %v2460 = vpop.permute.xlu0 %2459
      %2461 = vrot.lane.b32.xlu0 %v1726, 109
      %v2462 = vpop.permute.xlu0 %2461
      %2463 = vrot.lane.b32.xlu0 %v1727, 109
      %v2464 = vpop.permute.xlu0 %2463
      %v2465 = vsel %vm830, %v2460, %v2462
      %v2466 = vsel %vm830, %v2462, %v2464
      %v2468 = vsel %vm1625, %v2458, 0
      %v2471 = vsel %vm1629, %v2465, 0
      %v2474 = vsel %vm1629, %v2466, 0
      %v2477 = vsel %vm1629, %v2464, 0
      %2479 = vmatprep.subr.bf16.mxu0 %v2474
      %2480 = vmatpush1.bf16.msra.mxu0 %v2471
      %2481 = vmatprep.subr.bf16.mxu0 0
      %2482 = vmatpush1.bf16.msra.mxu0 0
      %2483 = vmatprep.subr.bf16.mxu0 0
      %2484 = vmatpush1.bf16.msra.mxu0 0
      %2485 = vmatprep.subr.bf16.mxu0 0
      %2486 = vmatpush1.bf16.msra.mxu0 0
      %2487 = vmatprep.subr.bf16.mxu0 0
      %2488 = vmatpush1.bf16.msra.mxu0 0
      %2489 = vmatprep.subr.bf16.mxu0 0
      %2490 = vmatpush1.bf16.msra.mxu0 0
      %2491 = vmatprep.subr.bf16.mxu0 0
      %2492 = vmatpush1.bf16.msra.mxu0 0
      %2493 = vmatprep.subr.bf16.mxu0 0
      %2494 = vmatpush1.bf16.msra.mxu0 0
      %2495 = vmatprep.subr.bf16.mxu0 0
      %2496 = vmatpush1.bf16.msra.mxu0 0
      %2497 = vmatprep.subr.bf16.mxu0 0
      %2498 = vmatpush1.bf16.msra.mxu0 0
      %2499 = vmatprep.subr.bf16.mxu0 0
      %2500 = vmatpush1.bf16.msra.mxu0 0
      %2501 = vmatprep.subr.bf16.mxu0 0
      %2502 = vmatpush1.bf16.msra.mxu0 0
      %2503 = vmatprep.subr.bf16.mxu0 0
      %2504 = vmatpush1.bf16.msra.mxu0 0
      %2505 = vmatprep.subr.bf16.mxu0 0
      %2506 = vmatpush1.bf16.msra.mxu0 0
      %2507 = vmatprep.subr.bf16.mxu0 0
      %2508 = vmatpush1.bf16.msra.mxu0 0
      %2509 = vmatprep.subr.bf16.mxu0 0
      %2510 = vmatpush1.bf16.msra.mxu0 0
      %2511 = vmatprep.mubr.bf16.mxu0 0
      %2512 = vmatmul.mubr.bf16.gmra.mrb[0].mxu0 %v2468
      %v2513 = vpop.f32.mrb[0].mxu0
      %v2514 = vadd.f32 0.0, %v2513
      %v2515 = vpop.f32.mrb[0].mxu0
      %v2516 = vadd.f32 0.0, %v2515
      %v2517 = vpop.f32.mrb[0].mxu0
      %v2518 = vpop.f32.mrb[0].mxu0
      %2519 = vdwg.mxu0
      %2520 = vmatprep.subr.bf16.mxu0 0
      %2521 = vmatpush1.bf16.msra.mxu0 %v2477
      %2522 = vmatprep.subr.bf16.mxu0 0
      %2523 = vmatpush1.bf16.msra.mxu0 0
      %2524 = vmatprep.subr.bf16.mxu0 0
      %2525 = vmatpush1.bf16.msra.mxu0 0
      %2526 = vmatprep.subr.bf16.mxu0 0
      %2527 = vmatpush1.bf16.msra.mxu0 0
      %2528 = vmatprep.subr.bf16.mxu0 0
      %2529 = vmatpush1.bf16.msra.mxu0 0
      %2530 = vmatprep.subr.bf16.mxu0 0
      %2531 = vmatpush1.bf16.msra.mxu0 0
      %2532 = vmatprep.subr.bf16.mxu0 0
      %2533 = vmatpush1.bf16.msra.mxu0 0
      %2534 = vmatprep.subr.bf16.mxu0 0
      %2535 = vmatpush1.bf16.msra.mxu0 0
      %2536 = vmatprep.subr.bf16.mxu0 0
      %2537 = vmatpush1.bf16.msra.mxu0 0
      %2538 = vmatprep.subr.bf16.mxu0 0
      %2539 = vmatpush1.bf16.msra.mxu0 0
      %2540 = vmatprep.subr.bf16.mxu0 0
      %2541 = vmatpush1.bf16.msra.mxu0 0
      %2542 = vmatprep.subr.bf16.mxu0 0
      %2543 = vmatpush1.bf16.msra.mxu0 0
      %2544 = vmatprep.subr.bf16.mxu0 0
      %2545 = vmatpush1.bf16.msra.mxu0 0
      %2546 = vmatprep.subr.bf16.mxu0 0
      %2547 = vmatpush1.bf16.msra.mxu0 0
      %2548 = vmatprep.subr.bf16.mxu0 0
      %2549 = vmatpush1.bf16.msra.mxu0 0
      %2550 = vmatprep.subr.bf16.mxu0 0
      %2551 = vmatpush1.bf16.msra.mxu0 0
      %2552 = vmatprep.mubr.bf16.mxu0 0
      %2553 = vmatmul.mubr.bf16.gmra.mrb[0].mxu0 %v2468
      %v2554 = vpop.f32.mrb[0].mxu0
      %v2555 = vadd.f32 0.0, %v2554
      %v2556 = vpop.f32.mrb[0].mxu0
      %v2557 = vpop.f32.mrb[0].mxu0
      %v2558 = vpop.f32.mrb[0].mxu0
      %2559 = vdwg.mxu0
      %v2560 = vadd.f32 %v2454, %v2514
      %v2561 = vadd.f32 %v2455, %v2516
      %v2562 = vadd.f32 %v2456, %v2555
      %s2563 = scalar_lea.vmem %s4, 16
      %v2564 = vld [vmem:[%s2563] sm:$0xf]
      %2565 = vrot.lane.b32.xlu0 %v1622, 109
      %v2566 = vpop.permute.xlu0 %2565
      %2567 = vrot.lane.b32.xlu0 %v1623, 109
      %v2568 = vpop.permute.xlu0 %2567
      %2569 = vrot.lane.b32.xlu0 %v1624, 109
      %v2570 = vpop.permute.xlu0 %2569
      %v2571 = vsel %vm830, %v2566, %v2568
      %v2572 = vsel %vm830, %v2568, %v2570
      %v2574 = vsel %vm1625, %v2564, 0
      %v2577 = vsel %vm1629, %v2571, 0
      %v2580 = vsel %vm1629, %v2572, 0
      %v2583 = vsel %vm1629, %v2570, 0
      %2585 = vmatprep.subr.bf16.mxu0 %v2580
      %2586 = vmatpush1.bf16.msra.mxu0 %v2577
      %2587 = vmatprep.subr.bf16.mxu0 0
      %2588 = vmatpush1.bf16.msra.mxu0 0
      %2589 = vmatprep.subr.bf16.mxu0 0
      %2590 = vmatpush1.bf16.msra.mxu0 0
      %2591 = vmatprep.subr.bf16.mxu0 0
      %2592 = vmatpush1.bf16.msra.mxu0 0
      %2593 = vmatprep.subr.bf16.mxu0 0
      %2594 = vmatpush1.bf16.msra.mxu0 0
      %2595 = vmatprep.subr.bf16.mxu0 0
      %2596 = vmatpush1.bf16.msra.mxu0 0
      %2597 = vmatprep.subr.bf16.mxu0 0
      %2598 = vmatpush1.bf16.msra.mxu0 0
      %2599 = vmatprep.subr.bf16.mxu0 0
      %2600 = vmatpush1.bf16.msra.mxu0 0
      %2601 = vmatprep.subr.bf16.mxu0 0
      %2602 = vmatpush1.bf16.msra.mxu0 0
      %2603 = vmatprep.subr.bf16.mxu0 0
      %2604 = vmatpush1.bf16.msra.mxu0 0
      %2605 = vmatprep.subr.bf16.mxu0 0
      %2606 = vmatpush1.bf16.msra.mxu0 0
      %2607 = vmatprep.subr.bf16.mxu0 0
      %2608 = vmatpush1.bf16.msra.mxu0 0
      %2609 = vmatprep.subr.bf16.mxu0 0
      %2610 = vmatpush1.bf16.msra.mxu0 0
      %2611 = vmatprep.subr.bf16.mxu0 0
      %2612 = vmatpush1.bf16.msra.mxu0 0
      %2613 = vmatprep.subr.bf16.mxu0 0
      %2614 = vmatpush1.bf16.msra.mxu0 0
      %2615 = vmatprep.subr.bf16.mxu0 0
      %2616 = vmatpush1.bf16.msra.mxu0 0
      %2617 = vmatprep.mubr.bf16.mxu0 0
      %2618 = vmatmul.mubr.bf16.gmra.mrb[0].mxu0 %v2574
      %v2619 = vpop.f32.mrb[0].mxu0
      %v2620 = vadd.f32 0.0, %v2619
      %v2621 = vpop.f32.mrb[0].mxu0
      %v2622 = vadd.f32 0.0, %v2621
      %v2623 = vpop.f32.mrb[0].mxu0
      %v2624 = vpop.f32.mrb[0].mxu0
      %2625 = vdwg.mxu0
      %2626 = vmatprep.subr.bf16.mxu0 0
      %2627 = vmatpush1.bf16.msra.mxu0 %v2583
      %2628 = vmatprep.subr.bf16.mxu0 0
      %2629 = vmatpush1.bf16.msra.mxu0 0
      %2630 = vmatprep.subr.bf16.mxu0 0
      %2631 = vmatpush1.bf16.msra.mxu0 0
      %2632 = vmatprep.subr.bf16.mxu0 0
      %2633 = vmatpush1.bf16.msra.mxu0 0
      %2634 = vmatprep.subr.bf16.mxu0 0
      %2635 = vmatpush1.bf16.msra.mxu0 0
      %2636 = vmatprep.subr.bf16.mxu0 0
      %2637 = vmatpush1.bf16.msra.mxu0 0
      %2638 = vmatprep.subr.bf16.mxu0 0
      %2639 = vmatpush1.bf16.msra.mxu0 0
      %2640 = vmatprep.subr.bf16.mxu0 0
      %2641 = vmatpush1.bf16.msra.mxu0 0
      %2642 = vmatprep.subr.bf16.mxu0 0
      %2643 = vmatpush1.bf16.msra.mxu0 0
      %2644 = vmatprep.subr.bf16.mxu0 0
      %2645 = vmatpush1.bf16.msra.mxu0 0
      %2646 = vmatprep.subr.bf16.mxu0 0
      %2647 = vmatpush1.bf16.msra.mxu0 0
      %2648 = vmatprep.subr.bf16.mxu0 0
      %2649 = vmatpush1.bf16.msra.mxu0 0
      %2650 = vmatprep.subr.bf16.mxu0 0
      %2651 = vmatpush1.bf16.msra.mxu0 0
      %2652 = vmatprep.subr.bf16.mxu0 0
      %2653 = vmatpush1.bf16.msra.mxu0 0
      %2654 = vmatprep.subr.bf16.mxu0 0
      %2655 = vmatpush1.bf16.msra.mxu0 0
      %2656 = vmatprep.subr.bf16.mxu0 0
      %2657 = vmatpush1.bf16.msra.mxu0 0
      %2658 = vmatprep.mubr.bf16.mxu0 0
      %2659 = vmatmul.mubr.bf16.gmra.mrb[0].mxu0 %v2574
      %v2660 = vpop.f32.mrb[0].mxu0
      %v2661 = vadd.f32 0.0, %v2660
      %v2662 = vpop.f32.mrb[0].mxu0
      %v2663 = vpop.f32.mrb[0].mxu0
      %v2664 = vpop.f32.mrb[0].mxu0
      %2665 = vdwg.mxu0
      %v2666 = vadd.f32 %v2560, %v2620
      %v2667 = vadd.f32 %v2561, %v2622
      %v2668 = vadd.f32 %v2562, %v2661
      %s2669 = scalar_lea.vmem %s3, 20
      %v2670 = vld [vmem:[%s2669] sm:$0xf]
      %2671 = vrot.lane.b32.xlu0 %v1725, 108
      %v2672 = vpop.permute.xlu0 %2671
      %2673 = vrot.lane.b32.xlu0 %v1726, 108
      %v2674 = vpop.permute.xlu0 %2673
      %2675 = vrot.lane.b32.xlu0 %v1727, 108
      %v2676 = vpop.permute.xlu0 %2675
      %v2677 = vsel %vm955, %v2672, %v2674
      %v2678 = vsel %vm955, %v2674, %v2676
      %v2680 = vsel %vm1625, %v2670, 0
      %v2683 = vsel %vm1629, %v2677, 0
      %v2686 = vsel %vm1629, %v2678, 0
      %v2689 = vsel %vm1629, %v2676, 0
      %2691 = vmatprep.subr.bf16.mxu0 %v2686
      %2692 = vmatpush1.bf16.msra.mxu0 %v2683
      %2693 = vmatprep.subr.bf16.mxu0 0
      %2694 = vmatpush1.bf16.msra.mxu0 0
      %2695 = vmatprep.subr.bf16.mxu0 0
      %2696 = vmatpush1.bf16.msra.mxu0 0
      %2697 = vmatprep.subr.bf16.mxu0 0
      %2698 = vmatpush1.bf16.msra.mxu0 0
      %2699 = vmatprep.subr.bf16.mxu0 0
      %2700 = vmatpush1.bf16.msra.mxu0 0
      %2701 = vmatprep.subr.bf16.mxu0 0
      %2702 = vmatpush1.bf16.msra.mxu0 0
      %2703 = vmatprep.subr.bf16.mxu0 0
      %2704 = vmatpush1.bf16.msra.mxu0 0
      %2705 = vmatprep.subr.bf16.mxu0 0
      %2706 = vmatpush1.bf16.msra.mxu0 0
      %2707 = vmatprep.subr.bf16.mxu0 0
      %2708 = vmatpush1.bf16.msra.mxu0 0
      %2709 = vmatprep.subr.bf16.mxu0 0
      %2710 = vmatpush1.bf16.msra.mxu0 0
      %2711 = vmatprep.subr.bf16.mxu0 0
      %2712 = vmatpush1.bf16.msra.mxu0 0
      %2713 = vmatprep.subr.bf16.mxu0 0
      %2714 = vmatpush1.bf16.msra.mxu0 0
      %2715 = vmatprep.subr.bf16.mxu0 0
      %2716 = vmatpush1.bf16.msra.mxu0 0
      %2717 = vmatprep.subr.bf16.mxu0 0
      %2718 = vmatpush1.bf16.msra.mxu0 0
      %2719 = vmatprep.subr.bf16.mxu0 0
      %2720 = vmatpush1.bf16.msra.mxu0 0
      %2721 = vmatprep.subr.bf16.mxu0 0
      %2722 = vmatpush1.bf16.msra.mxu0 0
      %2723 = vmatprep.mubr.bf16.mxu0 0
      %2724 = vmatmul.mubr.bf16.gmra.mrb[0].mxu0 %v2680
      %v2725 = vpop.f32.mrb[0].mxu0
      %v2726 = vadd.f32 0.0, %v2725
      %v2727 = vpop.f32.mrb[0].mxu0
      %v2728 = vadd.f32 0.0, %v2727
      %v2729 = vpop.f32.mrb[0].mxu0
      %v2730 = vpop.f32.mrb[0].mxu0
      %2731 = vdwg.mxu0
      %2732 = vmatprep.subr.bf16.mxu0 0
      %2733 = vmatpush1.bf16.msra.mxu0 %v2689
      %2734 = vmatprep.subr.bf16.mxu0 0
      %2735 = vmatpush1.bf16.msra.mxu0 0
      %2736 = vmatprep.subr.bf16.mxu0 0
      %2737 = vmatpush1.bf16.msra.mxu0 0
      %2738 = vmatprep.subr.bf16.mxu0 0
      %2739 = vmatpush1.bf16.msra.mxu0 0
      %2740 = vmatprep.subr.bf16.mxu0 0
      %2741 = vmatpush1.bf16.msra.mxu0 0
      %2742 = vmatprep.subr.bf16.mxu0 0
      %2743 = vmatpush1.bf16.msra.mxu0 0
      %2744 = vmatprep.subr.bf16.mxu0 0
      %2745 = vmatpush1.bf16.msra.mxu0 0
      %2746 = vmatprep.subr.bf16.mxu0 0
      %2747 = vmatpush1.bf16.msra.mxu0 0
      %2748 = vmatprep.subr.bf16.mxu0 0
      %2749 = vmatpush1.bf16.msra.mxu0 0
      %2750 = vmatprep.subr.bf16.mxu0 0
      %2751 = vmatpush1.bf16.msra.mxu0 0
      %2752 = vmatprep.subr.bf16.mxu0 0
      %2753 = vmatpush1.bf16.msra.mxu0 0
      %2754 = vmatprep.subr.bf16.mxu0 0
      %2755 = vmatpush1.bf16.msra.mxu0 0
      %2756 = vmatprep.subr.bf16.mxu0 0
      %2757 = vmatpush1.bf16.msra.mxu0 0
      %2758 = vmatprep.subr.bf16.mxu0 0
      %2759 = vmatpush1.bf16.msra.mxu0 0
      %2760 = vmatprep.subr.bf16.mxu0 0
      %2761 = vmatpush1.bf16.msra.mxu0 0
      %2762 = vmatprep.subr.bf16.mxu0 0
      %2763 = vmatpush1.bf16.msra.mxu0 0
      %2764 = vmatprep.mubr.bf16.mxu0 0
      %2765 = vmatmul.mubr.bf16.gmra.mrb[0].mxu0 %v2680
      %v2766 = vpop.f32.mrb[0].mxu0
      %v2767 = vadd.f32 0.0, %v2766
      %v2768 = vpop.f32.mrb[0].mxu0
      %v2769 = vpop.f32.mrb[0].mxu0
      %v2770 = vpop.f32.mrb[0].mxu0
      %2771 = vdwg.mxu0
      %v2772 = vadd.f32 %v2666, %v2726
      %v2773 = vadd.f32 %v2667, %v2728
      %v2774 = vadd.f32 %v2668, %v2767
      %s2775 = scalar_lea.vmem %s4, 20
      %v2776 = vld [vmem:[%s2775] sm:$0xf]
      %2777 = vrot.lane.b32.xlu0 %v1622, 108
      %v2778 = vpop.permute.xlu0 %2777
      %2779 = vrot.lane.b32.xlu0 %v1623, 108
      %v2780 = vpop.permute.xlu0 %2779
      %2781 = vrot.lane.b32.xlu0 %v1624, 108
      %v2782 = vpop.permute.xlu0 %2781
      %v2783 = vsel %vm955, %v2778, %v2780
      %v2784 = vsel %vm955, %v2780, %v2782
      %v2786 = vsel %vm1625, %v2776, 0
      %v2789 = vsel %vm1629, %v2783, 0
      %v2792 = vsel %vm1629, %v2784, 0
      %v2795 = vsel %vm1629, %v2782, 0
      %2797 = vmatprep.subr.bf16.mxu0 %v2792
      %2798 = vmatpush1.bf16.msra.mxu0 %v2789
      %2799 = vmatprep.subr.bf16.mxu0 0
      %2800 = vmatpush1.bf16.msra.mxu0 0
      %2801 = vmatprep.subr.bf16.mxu0 0
      %2802 = vmatpush1.bf16.msra.mxu0 0
      %2803 = vmatprep.subr.bf16.mxu0 0
      %2804 = vmatpush1.bf16.msra.mxu0 0
      %2805 = vmatprep.subr.bf16.mxu0 0
      %2806 = vmatpush1.bf16.msra.mxu0 0
      %2807 = vmatprep.subr.bf16.mxu0 0
      %2808 = vmatpush1.bf16.msra.mxu0 0
      %2809 = vmatprep.subr.bf16.mxu0 0
      %2810 = vmatpush1.bf16.msra.mxu0 0
      %2811 = vmatprep.subr.bf16.mxu0 0
      %2812 = vmatpush1.bf16.msra.mxu0 0
      %2813 = vmatprep.subr.bf16.mxu0 0
      %2814 = vmatpush1.bf16.msra.mxu0 0
      %2815 = vmatprep.subr.bf16.mxu0 0
      %2816 = vmatpush1.bf16.msra.mxu0 0
      %2817 = vmatprep.subr.bf16.mxu0 0
      %2818 = vmatpush1.bf16.msra.mxu0 0
      %2819 = vmatprep.subr.bf16.mxu0 0
      %2820 = vmatpush1.bf16.msra.mxu0 0
      %2821 = vmatprep.subr.bf16.mxu0 0
      %2822 = vmatpush1.bf16.msra.mxu0 0
      %2823 = vmatprep.subr.bf16.mxu0 0
      %2824 = vmatpush1.bf16.msra.mxu0 0
      %2825 = vmatprep.subr.bf16.mxu0 0
      %2826 = vmatpush1.bf16.msra.mxu0 0
      %2827 = vmatprep.subr.bf16.mxu0 0
      %2828 = vmatpush1.bf16.msra.mxu0 0
      %2829 = vmatprep.mubr.bf16.mxu0 0
      %2830 = vmatmul.mubr.bf16.gmra.mrb[0].mxu0 %v2786
      %v2831 = vpop.f32.mrb[0].mxu0
      %v2832 = vadd.f32 0.0, %v2831
      %v2833 = vpop.f32.mrb[0].mxu0
      %v2834 = vadd.f32 0.0, %v2833
      %v2835 = vpop.f32.mrb[0].mxu0
      %v2836 = vpop.f32.mrb[0].mxu0
      %2837 = vdwg.mxu0
      %2838 = vmatprep.subr.bf16.mxu0 0
      %2839 = vmatpush1.bf16.msra.mxu0 %v2795
      %2840 = vmatprep.subr.bf16.mxu0 0
      %2841 = vmatpush1.bf16.msra.mxu0 0
      %2842 = vmatprep.subr.bf16.mxu0 0
      %2843 = vmatpush1.bf16.msra.mxu0 0
      %2844 = vmatprep.subr.bf16.mxu0 0
      %2845 = vmatpush1.bf16.msra.mxu0 0
      %2846 = vmatprep.subr.bf16.mxu0 0
      %2847 = vmatpush1.bf16.msra.mxu0 0
      %2848 = vmatprep.subr.bf16.mxu0 0
      %2849 = vmatpush1.bf16.msra.mxu0 0
      %2850 = vmatprep.subr.bf16.mxu0 0
      %2851 = vmatpush1.bf16.msra.mxu0 0
      %2852 = vmatprep.subr.bf16.mxu0 0
      %2853 = vmatpush1.bf16.msra.mxu0 0
      %2854 = vmatprep.subr.bf16.mxu0 0
      %2855 = vmatpush1.bf16.msra.mxu0 0
      %2856 = vmatprep.subr.bf16.mxu0 0
      %2857 = vmatpush1.bf16.msra.mxu0 0
      %2858 = vmatprep.subr.bf16.mxu0 0
      %2859 = vmatpush1.bf16.msra.mxu0 0
      %2860 = vmatprep.subr.bf16.mxu0 0
      %2861 = vmatpush1.bf16.msra.mxu0 0
      %2862 = vmatprep.subr.bf16.mxu0 0
      %2863 = vmatpush1.bf16.msra.mxu0 0
      %2864 = vmatprep.subr.bf16.mxu0 0
      %2865 = vmatpush1.bf16.msra.mxu0 0
      %2866 = vmatprep.subr.bf16.mxu0 0
      %2867 = vmatpush1.bf16.msra.mxu0 0
      %2868 = vmatprep.subr.bf16.mxu0 0
      %2869 = vmatpush1.bf16.msra.mxu0 0
      %2870 = vmatprep.mubr.bf16.mxu0 0
      %2871 = vmatmul.mubr.bf16.gmra.mrb[0].mxu0 %v2786
      %v2872 = vpop.f32.mrb[0].mxu0
      %v2873 = vadd.f32 0.0, %v2872
      %v2874 = vpop.f32.mrb[0].mxu0
      %v2875 = vpop.f32.mrb[0].mxu0
      %v2876 = vpop.f32.mrb[0].mxu0
      %2877 = vdwg.mxu0
      %v2878 = vadd.f32 %v2772, %v2832
      %v2879 = vadd.f32 %v2773, %v2834
      %v2880 = vadd.f32 %v2774, %v2873
      %s2881 = scalar_lea.vmem %s3, 24
      %v2882 = vld [vmem:[%s2881] sm:$0xf]
      %2883 = vrot.lane.b32.xlu0 %v1725, 92
      %v2884 = vpop.permute.xlu0 %2883
      %2885 = vrot.lane.b32.xlu0 %v1726, 92
      %v2886 = vpop.permute.xlu0 %2885
      %2887 = vrot.lane.b32.xlu0 %v1727, 92
      %v2888 = vpop.permute.xlu0 %2887
      %v2889 = vsel %vm1080, %v2884, %v2886
      %v2890 = vsel %vm1080, %v2886, %v2888
      %v2892 = vsel %vm1625, %v2882, 0
      %v2895 = vsel %vm1629, %v2889, 0
      %v2898 = vsel %vm1629, %v2890, 0
      %v2901 = vsel %vm1629, %v2888, 0
      %2903 = vmatprep.subr.bf16.mxu0 %v2898
      %2904 = vmatpush1.bf16.msra.mxu0 %v2895
      %2905 = vmatprep.subr.bf16.mxu0 0
      %2906 = vmatpush1.bf16.msra.mxu0 0
      %2907 = vmatprep.subr.bf16.mxu0 0
      %2908 = vmatpush1.bf16.msra.mxu0 0
      %2909 = vmatprep.subr.bf16.mxu0 0
      %2910 = vmatpush1.bf16.msra.mxu0 0
      %2911 = vmatprep.subr.bf16.mxu0 0
      %2912 = vmatpush1.bf16.msra.mxu0 0
      %2913 = vmatprep.subr.bf16.mxu0 0
      %2914 = vmatpush1.bf16.msra.mxu0 0
      %2915 = vmatprep.subr.bf16.mxu0 0
      %2916 = vmatpush1.bf16.msra.mxu0 0
      %2917 = vmatprep.subr.bf16.mxu0 0
      %2918 = vmatpush1.bf16.msra.mxu0 0
      %2919 = vmatprep.subr.bf16.mxu0 0
      %2920 = vmatpush1.bf16.msra.mxu0 0
      %2921 = vmatprep.subr.bf16.mxu0 0
      %2922 = vmatpush1.bf16.msra.mxu0 0
      %2923 = vmatprep.subr.bf16.mxu0 0
      %2924 = vmatpush1.bf16.msra.mxu0 0
      %2925 = vmatprep.subr.bf16.mxu0 0
      %2926 = vmatpush1.bf16.msra.mxu0 0
      %2927 = vmatprep.subr.bf16.mxu0 0
      %2928 = vmatpush1.bf16.msra.mxu0 0
      %2929 = vmatprep.subr.bf16.mxu0 0
      %2930 = vmatpush1.bf16.msra.mxu0 0
      %2931 = vmatprep.subr.bf16.mxu0 0
      %2932 = vmatpush1.bf16.msra.mxu0 0
      %2933 = vmatprep.subr.bf16.mxu0 0
      %2934 = vmatpush1.bf16.msra.mxu0 0
      %2935 = vmatprep.mubr.bf16.mxu0 0
      %2936 = vmatmul.mubr.bf16.gmra.mrb[0].mxu0 %v2892
      %v2937 = vpop.f32.mrb[0].mxu0
      %v2938 = vadd.f32 0.0, %v2937
      %v2939 = vpop.f32.mrb[0].mxu0
      %v2940 = vadd.f32 0.0, %v2939
      %v2941 = vpop.f32.mrb[0].mxu0
      %v2942 = vpop.f32.mrb[0].mxu0
      %2943 = vdwg.mxu0
      %2944 = vmatprep.subr.bf16.mxu0 0
      %2945 = vmatpush1.bf16.msra.mxu0 %v2901
      %2946 = vmatprep.subr.bf16.mxu0 0
      %2947 = vmatpush1.bf16.msra.mxu0 0
      %2948 = vmatprep.subr.bf16.mxu0 0
      %2949 = vmatpush1.bf16.msra.mxu0 0
      %2950 = vmatprep.subr.bf16.mxu0 0
      %2951 = vmatpush1.bf16.msra.mxu0 0
      %2952 = vmatprep.subr.bf16.mxu0 0
      %2953 = vmatpush1.bf16.msra.mxu0 0
      %2954 = vmatprep.subr.bf16.mxu0 0
      %2955 = vmatpush1.bf16.msra.mxu0 0
      %2956 = vmatprep.subr.bf16.mxu0 0
      %2957 = vmatpush1.bf16.msra.mxu0 0
      %2958 = vmatprep.subr.bf16.mxu0 0
      %2959 = vmatpush1.bf16.msra.mxu0 0
      %2960 = vmatprep.subr.bf16.mxu0 0
      %2961 = vmatpush1.bf16.msra.mxu0 0
      %2962 = vmatprep.subr.bf16.mxu0 0
      %2963 = vmatpush1.bf16.msra.mxu0 0
      %2964 = vmatprep.subr.bf16.mxu0 0
      %2965 = vmatpush1.bf16.msra.mxu0 0
      %2966 = vmatprep.subr.bf16.mxu0 0
      %2967 = vmatpush1.bf16.msra.mxu0 0
      %2968 = vmatprep.subr.bf16.mxu0 0
      %2969 = vmatpush1.bf16.msra.mxu0 0
      %2970 = vmatprep.subr.bf16.mxu0 0
      %2971 = vmatpush1.bf16.msra.mxu0 0
      %2972 = vmatprep.subr.bf16.mxu0 0
      %2973 = vmatpush1.bf16.msra.mxu0 0
      %2974 = vmatprep.subr.bf16.mxu0 0
      %2975 = vmatpush1.bf16.msra.mxu0 0
      %2976 = vmatprep.mubr.bf16.mxu0 0
      %2977 = vmatmul.mubr.bf16.gmra.mrb[0].mxu0 %v2892
      %v2978 = vpop.f32.mrb[0].mxu0
      %v2979 = vadd.f32 0.0, %v2978
      %v2980 = vpop.f32.mrb[0].mxu0
      %v2981 = vpop.f32.mrb[0].mxu0
      %v2982 = vpop.f32.mrb[0].mxu0
      %2983 = vdwg.mxu0
      %v2984 = vadd.f32 %v2878, %v2938
      %v2985 = vadd.f32 %v2879, %v2940
      %v2986 = vadd.f32 %v2880, %v2979
      %s2987 = scalar_lea.vmem %s4, 24
      %v2988 = vld [vmem:[%s2987] sm:$0xf]
      %2989 = vrot.lane.b32.xlu0 %v1622, 92
      %v2990 = vpop.permute.xlu0 %2989
      %2991 = vrot.lane.b32.xlu0 %v1623, 92
      %v2992 = vpop.permute.xlu0 %2991
      %2993 = vrot.lane.b32.xlu0 %v1624, 92
      %v2994 = vpop.permute.xlu0 %2993
      %v2995 = vsel %vm1080, %v2990, %v2992
      %v2996 = vsel %vm1080, %v2992, %v2994
      %v2998 = vsel %vm1625, %v2988, 0
      %v3001 = vsel %vm1629, %v2995, 0
      %v3004 = vsel %vm1629, %v2996, 0
      %v3007 = vsel %vm1629, %v2994, 0
      %3009 = vmatprep.subr.bf16.mxu0 %v3004
      %3010 = vmatpush1.bf16.msra.mxu0 %v3001
      %3011 = vmatprep.subr.bf16.mxu0 0
      %3012 = vmatpush1.bf16.msra.mxu0 0
      %3013 = vmatprep.subr.bf16.mxu0 0
      %3014 = vmatpush1.bf16.msra.mxu0 0
      %3015 = vmatprep.subr.bf16.mxu0 0
      %3016 = vmatpush1.bf16.msra.mxu0 0
      %3017 = vmatprep.subr.bf16.mxu0 0
      %3018 = vmatpush1.bf16.msra.mxu0 0
      %3019 = vmatprep.subr.bf16.mxu0 0
      %3020 = vmatpush1.bf16.msra.mxu0 0
      %3021 = vmatprep.subr.bf16.mxu0 0
      %3022 = vmatpush1.bf16.msra.mxu0 0
      %3023 = vmatprep.subr.bf16.mxu0 0
      %3024 = vmatpush1.bf16.msra.mxu0 0
      %3025 = vmatprep.subr.bf16.mxu0 0
      %3026 = vmatpush1.bf16.msra.mxu0 0
      %3027 = vmatprep.subr.bf16.mxu0 0
      %3028 = vmatpush1.bf16.msra.mxu0 0
      %3029 = vmatprep.subr.bf16.mxu0 0
      %3030 = vmatpush1.bf16.msra.mxu0 0
      %3031 = vmatprep.subr.bf16.mxu0 0
      %3032 = vmatpush1.bf16.msra.mxu0 0
      %3033 = vmatprep.subr.bf16.mxu0 0
      %3034 = vmatpush1.bf16.msra.mxu0 0
      %3035 = vmatprep.subr.bf16.mxu0 0
      %3036 = vmatpush1.bf16.msra.mxu0 0
      %3037 = vmatprep.subr.bf16.mxu0 0
      %3038 = vmatpush1.bf16.msra.mxu0 0
      %3039 = vmatprep.subr.bf16.mxu0 0
      %3040 = vmatpush1.bf16.msra.mxu0 0
      %3041 = vmatprep.mubr.bf16.mxu0 0
      %3042 = vmatmul.mubr.bf16.gmra.mrb[0].mxu0 %v2998
      %v3043 = vpop.f32.mrb[0].mxu0
      %v3044 = vadd.f32 0.0, %v3043
      %v3045 = vpop.f32.mrb[0].mxu0
      %v3046 = vadd.f32 0.0, %v3045
      %v3047 = vpop.f32.mrb[0].mxu0
      %v3048 = vpop.f32.mrb[0].mxu0
      %3049 = vdwg.mxu0
      %3050 = vmatprep.subr.bf16.mxu0 0
      %3051 = vmatpush1.bf16.msra.mxu0 %v3007
      %3052 = vmatprep.subr.bf16.mxu0 0
      %3053 = vmatpush1.bf16.msra.mxu0 0
      %3054 = vmatprep.subr.bf16.mxu0 0
      %3055 = vmatpush1.bf16.msra.mxu0 0
      %3056 = vmatprep.subr.bf16.mxu0 0
      %3057 = vmatpush1.bf16.msra.mxu0 0
      %3058 = vmatprep.subr.bf16.mxu0 0
      %3059 = vmatpush1.bf16.msra.mxu0 0
      %3060 = vmatprep.subr.bf16.mxu0 0
      %3061 = vmatpush1.bf16.msra.mxu0 0
      %3062 = vmatprep.subr.bf16.mxu0 0
      %3063 = vmatpush1.bf16.msra.mxu0 0
      %3064 = vmatprep.subr.bf16.mxu0 0
      %3065 = vmatpush1.bf16.msra.mxu0 0
      %3066 = vmatprep.subr.bf16.mxu0 0
      %3067 = vmatpush1.bf16.msra.mxu0 0
      %3068 = vmatprep.subr.bf16.mxu0 0
      %3069 = vmatpush1.bf16.msra.mxu0 0
      %3070 = vmatprep.subr.bf16.mxu0 0
      %3071 = vmatpush1.bf16.msra.mxu0 0
      %3072 = vmatprep.subr.bf16.mxu0 0
      %3073 = vmatpush1.bf16.msra.mxu0 0
      %3074 = vmatprep.subr.bf16.mxu0 0
      %3075 = vmatpush1.bf16.msra.mxu0 0
      %3076 = vmatprep.subr.bf16.mxu0 0
      %3077 = vmatpush1.bf16.msra.mxu0 0
      %3078 = vmatprep.subr.bf16.mxu0 0
      %3079 = vmatpush1.bf16.msra.mxu0 0
      %3080 = vmatprep.subr.bf16.mxu0 0
      %3081 = vmatpush1.bf16.msra.mxu0 0
      %3082 = vmatprep.mubr.bf16.mxu0 0
      %3083 = vmatmul.mubr.bf16.gmra.mrb[0].mxu0 %v2998
      %v3084 = vpop.f32.mrb[0].mxu0
      %v3085 = vadd.f32 0.0, %v3084
      %v3086 = vpop.f32.mrb[0].mxu0
      %v3087 = vpop.f32.mrb[0].mxu0
      %v3088 = vpop.f32.mrb[0].mxu0
      %3089 = vdwg.mxu0
      %v3090 = vadd.f32 %v2984, %v3044
      %v3091 = vadd.f32 %v2985, %v3046
      %v3092 = vadd.f32 %v2986, %v3085
      %s3093 = scalar_lea.vmem %s3, 28
      %v3094 = vld [vmem:[%s3093] sm:$0xf]
      %3095 = vrot.lane.b32.xlu0 %v1725, 91
      %v3096 = vpop.permute.xlu0 %3095
      %3097 = vrot.lane.b32.xlu0 %v1726, 91
      %v3098 = vpop.permute.xlu0 %3097
      %3099 = vrot.lane.b32.xlu0 %v1727, 91
      %v3100 = vpop.permute.xlu0 %3099
      %v3101 = vsel %vm1205, %v3096, %v3098
      %v3102 = vsel %vm1205, %v3098, %v3100
      %v3104 = vsel %vm1625, %v3094, 0
      %v3107 = vsel %vm1629, %v3101, 0
      %v3110 = vsel %vm1629, %v3102, 0
      %v3113 = vsel %vm1629, %v3100, 0
      %3115 = vmatprep.subr.bf16.mxu0 %v3110
      %3116 = vmatpush1.bf16.msra.mxu0 %v3107
      %3117 = vmatprep.subr.bf16.mxu0 0
      %3118 = vmatpush1.bf16.msra.mxu0 0
      %3119 = vmatprep.subr.bf16.mxu0 0
      %3120 = vmatpush1.bf16.msra.mxu0 0
      %3121 = vmatprep.subr.bf16.mxu0 0
      %3122 = vmatpush1.bf16.msra.mxu0 0
      %3123 = vmatprep.subr.bf16.mxu0 0
      %3124 = vmatpush1.bf16.msra.mxu0 0
      %3125 = vmatprep.subr.bf16.mxu0 0
      %3126 = vmatpush1.bf16.msra.mxu0 0
      %3127 = vmatprep.subr.bf16.mxu0 0
      %3128 = vmatpush1.bf16.msra.mxu0 0
      %3129 = vmatprep.subr.bf16.mxu0 0
      %3130 = vmatpush1.bf16.msra.mxu0 0
      %3131 = vmatprep.subr.bf16.mxu0 0
      %3132 = vmatpush1.bf16.msra.mxu0 0
      %3133 = vmatprep.subr.bf16.mxu0 0
      %3134 = vmatpush1.bf16.msra.mxu0 0
      %3135 = vmatprep.subr.bf16.mxu0 0
      %3136 = vmatpush1.bf16.msra.mxu0 0
      %3137 = vmatprep.subr.bf16.mxu0 0
      %3138 = vmatpush1.bf16.msra.mxu0 0
      %3139 = vmatprep.subr.bf16.mxu0 0
      %3140 = vmatpush1.bf16.msra.mxu0 0
      %3141 = vmatprep.subr.bf16.mxu0 0
      %3142 = vmatpush1.bf16.msra.mxu0 0
      %3143 = vmatprep.subr.bf16.mxu0 0
      %3144 = vmatpush1.bf16.msra.mxu0 0
      %3145 = vmatprep.subr.bf16.mxu0 0
      %3146 = vmatpush1.bf16.msra.mxu0 0
      %3147 = vmatprep.mubr.bf16.mxu0 0
      %3148 = vmatmul.mubr.bf16.gmra.mrb[0].mxu0 %v3104
      %v3149 = vpop.f32.mrb[0].mxu0
      %v3150 = vadd.f32 0.0, %v3149
      %v3151 = vpop.f32.mrb[0].mxu0
      %v3152 = vadd.f32 0.0, %v3151
      %v3153 = vpop.f32.mrb[0].mxu0
      %v3154 = vpop.f32.mrb[0].mxu0
      %3155 = vdwg.mxu0
      %3156 = vmatprep.subr.bf16.mxu0 0
      %3157 = vmatpush1.bf16.msra.mxu0 %v3113
      %3158 = vmatprep.subr.bf16.mxu0 0
      %3159 = vmatpush1.bf16.msra.mxu0 0
      %3160 = vmatprep.subr.bf16.mxu0 0
      %3161 = vmatpush1.bf16.msra.mxu0 0
      %3162 = vmatprep.subr.bf16.mxu0 0
      %3163 = vmatpush1.bf16.msra.mxu0 0
      %3164 = vmatprep.subr.bf16.mxu0 0
      %3165 = vmatpush1.bf16.msra.mxu0 0
      %3166 = vmatprep.subr.bf16.mxu0 0
      %3167 = vmatpush1.bf16.msra.mxu0 0
      %3168 = vmatprep.subr.bf16.mxu0 0
      %3169 = vmatpush1.bf16.msra.mxu0 0
      %3170 = vmatprep.subr.bf16.mxu0 0
      %3171 = vmatpush1.bf16.msra.mxu0 0
      %3172 = vmatprep.subr.bf16.mxu0 0
      %3173 = vmatpush1.bf16.msra.mxu0 0
      %3174 = vmatprep.subr.bf16.mxu0 0
      %3175 = vmatpush1.bf16.msra.mxu0 0
      %3176 = vmatprep.subr.bf16.mxu0 0
      %3177 = vmatpush1.bf16.msra.mxu0 0
      %3178 = vmatprep.subr.bf16.mxu0 0
      %3179 = vmatpush1.bf16.msra.mxu0 0
      %3180 = vmatprep.subr.bf16.mxu0 0
      %3181 = vmatpush1.bf16.msra.mxu0 0
      %3182 = vmatprep.subr.bf16.mxu0 0
      %3183 = vmatpush1.bf16.msra.mxu0 0
      %3184 = vmatprep.subr.bf16.mxu0 0
      %3185 = vmatpush1.bf16.msra.mxu0 0
      %3186 = vmatprep.subr.bf16.mxu0 0
      %3187 = vmatpush1.bf16.msra.mxu0 0
      %3188 = vmatprep.mubr.bf16.mxu0 0
      %3189 = vmatmul.mubr.bf16.gmra.mrb[0].mxu0 %v3104
      %v3190 = vpop.f32.mrb[0].mxu0
      %v3191 = vadd.f32 0.0, %v3190
      %v3192 = vpop.f32.mrb[0].mxu0
      %v3193 = vpop.f32.mrb[0].mxu0
      %v3194 = vpop.f32.mrb[0].mxu0
      %3195 = vdwg.mxu0
      %v3196 = vadd.f32 %v3090, %v3150
      %v3197 = vadd.f32 %v3091, %v3152
      %v3198 = vadd.f32 %v3092, %v3191
      %s3199 = scalar_lea.vmem %s4, 28
      %v3200 = vld [vmem:[%s3199] sm:$0xf]
      %3201 = vrot.lane.b32.xlu0 %v1622, 91
      %v3202 = vpop.permute.xlu0 %3201
      %3203 = vrot.lane.b32.xlu0 %v1623, 91
      %v3204 = vpop.permute.xlu0 %3203
      %3205 = vrot.lane.b32.xlu0 %v1624, 91
      %v3206 = vpop.permute.xlu0 %3205
      %v3207 = vsel %vm1205, %v3202, %v3204
      %v3208 = vsel %vm1205, %v3204, %v3206
      %v3210 = vsel %vm1625, %v3200, 0
      %v3213 = vsel %vm1629, %v3207, 0
      %v3216 = vsel %vm1629, %v3208, 0
      %v3219 = vsel %vm1629, %v3206, 0
      %3221 = vmatprep.subr.bf16.mxu0 %v3216
      %3222 = vmatpush1.bf16.msra.mxu0 %v3213
      %3223 = vmatprep.subr.bf16.mxu0 0
      %3224 = vmatpush1.bf16.msra.mxu0 0
      %3225 = vmatprep.subr.bf16.mxu0 0
      %3226 = vmatpush1.bf16.msra.mxu0 0
      %3227 = vmatprep.subr.bf16.mxu0 0
      %3228 = vmatpush1.bf16.msra.mxu0 0
      %3229 = vmatprep.subr.bf16.mxu0 0
      %3230 = vmatpush1.bf16.msra.mxu0 0
      %3231 = vmatprep.subr.bf16.mxu0 0
      %3232 = vmatpush1.bf16.msra.mxu0 0
      %3233 = vmatprep.subr.bf16.mxu0 0
      %3234 = vmatpush1.bf16.msra.mxu0 0
      %3235 = vmatprep.subr.bf16.mxu0 0
      %3236 = vmatpush1.bf16.msra.mxu0 0
      %3237 = vmatprep.subr.bf16.mxu0 0
      %3238 = vmatpush1.bf16.msra.mxu0 0
      %3239 = vmatprep.subr.bf16.mxu0 0
      %3240 = vmatpush1.bf16.msra.mxu0 0
      %3241 = vmatprep.subr.bf16.mxu0 0
      %3242 = vmatpush1.bf16.msra.mxu0 0
      %3243 = vmatprep.subr.bf16.mxu0 0
      %3244 = vmatpush1.bf16.msra.mxu0 0
      %3245 = vmatprep.subr.bf16.mxu0 0
      %3246 = vmatpush1.bf16.msra.mxu0 0
      %3247 = vmatprep.subr.bf16.mxu0 0
      %3248 = vmatpush1.bf16.msra.mxu0 0
      %3249 = vmatprep.subr.bf16.mxu0 0
      %3250 = vmatpush1.bf16.msra.mxu0 0
      %3251 = vmatprep.subr.bf16.mxu0 0
      %3252 = vmatpush1.bf16.msra.mxu0 0
      %3253 = vmatprep.mubr.bf16.mxu0 0
      %3254 = vmatmul.mubr.bf16.gmra.mrb[0].mxu0 %v3210
      %v3255 = vpop.f32.mrb[0].mxu0
      %v3256 = vadd.f32 0.0, %v3255
      %v3257 = vpop.f32.mrb[0].mxu0
      %v3258 = vadd.f32 0.0, %v3257
      %v3259 = vpop.f32.mrb[0].mxu0
      %v3260 = vpop.f32.mrb[0].mxu0
      %3261 = vdwg.mxu0
      %3262 = vmatprep.subr.bf16.mxu0 0
      %3263 = vmatpush1.bf16.msra.mxu0 %v3219
      %3264 = vmatprep.subr.bf16.mxu0 0
      %3265 = vmatpush1.bf16.msra.mxu0 0
      %3266 = vmatprep.subr.bf16.mxu0 0
      %3267 = vmatpush1.bf16.msra.mxu0 0
      %3268 = vmatprep.subr.bf16.mxu0 0
      %3269 = vmatpush1.bf16.msra.mxu0 0
      %3270 = vmatprep.subr.bf16.mxu0 0
      %3271 = vmatpush1.bf16.msra.mxu0 0
      %3272 = vmatprep.subr.bf16.mxu0 0
      %3273 = vmatpush1.bf16.msra.mxu0 0
      %3274 = vmatprep.subr.bf16.mxu0 0
      %3275 = vmatpush1.bf16.msra.mxu0 0
      %3276 = vmatprep.subr.bf16.mxu0 0
      %3277 = vmatpush1.bf16.msra.mxu0 0
      %3278 = vmatprep.subr.bf16.mxu0 0
      %3279 = vmatpush1.bf16.msra.mxu0 0
      %3280 = vmatprep.subr.bf16.mxu0 0
      %3281 = vmatpush1.bf16.msra.mxu0 0
      %3282 = vmatprep.subr.bf16.mxu0 0
      %3283 = vmatpush1.bf16.msra.mxu0 0
      %3284 = vmatprep.subr.bf16.mxu0 0
      %3285 = vmatpush1.bf16.msra.mxu0 0
      %3286 = vmatprep.subr.bf16.mxu0 0
      %3287 = vmatpush1.bf16.msra.mxu0 0
      %3288 = vmatprep.subr.bf16.mxu0 0
      %3289 = vmatpush1.bf16.msra.mxu0 0
      %3290 = vmatprep.subr.bf16.mxu0 0
      %3291 = vmatpush1.bf16.msra.mxu0 0
      %3292 = vmatprep.subr.bf16.mxu0 0
      %3293 = vmatpush1.bf16.msra.mxu0 0
      %3294 = vmatprep.mubr.bf16.mxu0 0
      %3295 = vmatmul.mubr.bf16.gmra.mrb[0].mxu0 %v3210
      %v3296 = vpop.f32.mrb[0].mxu0
      %v3297 = vadd.f32 0.0, %v3296
      %v3298 = vpop.f32.mrb[0].mxu0
      %v3299 = vpop.f32.mrb[0].mxu0
      %v3300 = vpop.f32.mrb[0].mxu0
      %3301 = vdwg.mxu0
      %v3302 = vadd.f32 %v3196, %v3256
      %v3303 = vadd.f32 %v3197, %v3258
      %v3304 = vadd.f32 %v3198, %v3297
      %s3305 = scalar_lea.vmem %s3, 32
      %v3306 = vld [vmem:[%s3305] sm:$0xf]
      %3307 = vrot.lane.b32.xlu0 %v1725, 90
      %v3308 = vpop.permute.xlu0 %3307
      %3309 = vrot.lane.b32.xlu0 %v1726, 90
      %v3310 = vpop.permute.xlu0 %3309
      %3311 = vrot.lane.b32.xlu0 %v1727, 90
      %v3312 = vpop.permute.xlu0 %3311
      %v3313 = vsel %vm1330, %v3308, %v3310
      %v3314 = vsel %vm1330, %v3310, %v3312
      %v3316 = vsel %vm1625, %v3306, 0
      %v3319 = vsel %vm1629, %v3313, 0
      %v3322 = vsel %vm1629, %v3314, 0
      %v3325 = vsel %vm1629, %v3312, 0
      %3327 = vmatprep.subr.bf16.mxu0 %v3322
      %3328 = vmatpush1.bf16.msra.mxu0 %v3319
      %3329 = vmatprep.subr.bf16.mxu0 0
      %3330 = vmatpush1.bf16.msra.mxu0 0
      %3331 = vmatprep.subr.bf16.mxu0 0
      %3332 = vmatpush1.bf16.msra.mxu0 0
      %3333 = vmatprep.subr.bf16.mxu0 0
      %3334 = vmatpush1.bf16.msra.mxu0 0
      %3335 = vmatprep.subr.bf16.mxu0 0
      %3336 = vmatpush1.bf16.msra.mxu0 0
      %3337 = vmatprep.subr.bf16.mxu0 0
      %3338 = vmatpush1.bf16.msra.mxu0 0
      %3339 = vmatprep.subr.bf16.mxu0 0
      %3340 = vmatpush1.bf16.msra.mxu0 0
      %3341 = vmatprep.subr.bf16.mxu0 0
      %3342 = vmatpush1.bf16.msra.mxu0 0
      %3343 = vmatprep.subr.bf16.mxu0 0
      %3344 = vmatpush1.bf16.msra.mxu0 0
      %3345 = vmatprep.subr.bf16.mxu0 0
      %3346 = vmatpush1.bf16.msra.mxu0 0
      %3347 = vmatprep.subr.bf16.mxu0 0
      %3348 = vmatpush1.bf16.msra.mxu0 0
      %3349 = vmatprep.subr.bf16.mxu0 0
      %3350 = vmatpush1.bf16.msra.mxu0 0
      %3351 = vmatprep.subr.bf16.mxu0 0
      %3352 = vmatpush1.bf16.msra.mxu0 0
      %3353 = vmatprep.subr.bf16.mxu0 0
      %3354 = vmatpush1.bf16.msra.mxu0 0
      %3355 = vmatprep.subr.bf16.mxu0 0
      %3356 = vmatpush1.bf16.msra.mxu0 0
      %3357 = vmatprep.subr.bf16.mxu0 0
      %3358 = vmatpush1.bf16.msra.mxu0 0
      %3359 = vmatprep.mubr.bf16.mxu0 0
      %3360 = vmatmul.mubr.bf16.gmra.mrb[0].mxu0 %v3316
      %v3361 = vpop.f32.mrb[0].mxu0
      %v3362 = vadd.f32 0.0, %v3361
      %v3363 = vpop.f32.mrb[0].mxu0
      %v3364 = vadd.f32 0.0, %v3363
      %v3365 = vpop.f32.mrb[0].mxu0
      %v3366 = vpop.f32.mrb[0].mxu0
      %3367 = vdwg.mxu0
      %3368 = vmatprep.subr.bf16.mxu0 0
      %3369 = vmatpush1.bf16.msra.mxu0 %v3325
      %3370 = vmatprep.subr.bf16.mxu0 0
      %3371 = vmatpush1.bf16.msra.mxu0 0
      %3372 = vmatprep.subr.bf16.mxu0 0
      %3373 = vmatpush1.bf16.msra.mxu0 0
      %3374 = vmatprep.subr.bf16.mxu0 0
      %3375 = vmatpush1.bf16.msra.mxu0 0
      %3376 = vmatprep.subr.bf16.mxu0 0
      %3377 = vmatpush1.bf16.msra.mxu0 0
      %3378 = vmatprep.subr.bf16.mxu0 0
      %3379 = vmatpush1.bf16.msra.mxu0 0
      %3380 = vmatprep.subr.bf16.mxu0 0
      %3381 = vmatpush1.bf16.msra.mxu0 0
      %3382 = vmatprep.subr.bf16.mxu0 0
      %3383 = vmatpush1.bf16.msra.mxu0 0
      %3384 = vmatprep.subr.bf16.mxu0 0
      %3385 = vmatpush1.bf16.msra.mxu0 0
      %3386 = vmatprep.subr.bf16.mxu0 0
      %3387 = vmatpush1.bf16.msra.mxu0 0
      %3388 = vmatprep.subr.bf16.mxu0 0
      %3389 = vmatpush1.bf16.msra.mxu0 0
      %3390 = vmatprep.subr.bf16.mxu0 0
      %3391 = vmatpush1.bf16.msra.mxu0 0
      %3392 = vmatprep.subr.bf16.mxu0 0
      %3393 = vmatpush1.bf16.msra.mxu0 0
      %3394 = vmatprep.subr.bf16.mxu0 0
      %3395 = vmatpush1.bf16.msra.mxu0 0
      %3396 = vmatprep.subr.bf16.mxu0 0
      %3397 = vmatpush1.bf16.msra.mxu0 0
      %3398 = vmatprep.subr.bf16.mxu0 0
      %3399 = vmatpush1.bf16.msra.mxu0 0
      %3400 = vmatprep.mubr.bf16.mxu0 0
      %3401 = vmatmul.mubr.bf16.gmra.mrb[0].mxu0 %v3316
      %v3402 = vpop.f32.mrb[0].mxu0
      %v3403 = vadd.f32 0.0, %v3402
      %v3404 = vpop.f32.mrb[0].mxu0
      %v3405 = vpop.f32.mrb[0].mxu0
      %v3406 = vpop.f32.mrb[0].mxu0
      %3407 = vdwg.mxu0
      %v3408 = vadd.f32 %v3302, %v3362
      %v3409 = vadd.f32 %v3303, %v3364
      %v3410 = vadd.f32 %v3304, %v3403
      %s3411 = scalar_lea.vmem %s4, 32
      %v3412 = vld [vmem:[%s3411] sm:$0xf]
      %3413 = vrot.lane.b32.xlu0 %v1622, 90
      %v3414 = vpop.permute.xlu0 %3413
      %3415 = vrot.lane.b32.xlu0 %v1623, 90
      %v3416 = vpop.permute.xlu0 %3415
      %3417 = vrot.lane.b32.xlu0 %v1624, 90
      %v3418 = vpop.permute.xlu0 %3417
      %v3419 = vsel %vm1330, %v3414, %v3416
      %v3420 = vsel %vm1330, %v3416, %v3418
      %v3422 = vsel %vm1625, %v3412, 0
      %v3425 = vsel %vm1629, %v3419, 0
      %v3428 = vsel %vm1629, %v3420, 0
      %v3431 = vsel %vm1629, %v3418, 0
      %3433 = vmatprep.subr.bf16.mxu0 %v3428
      %3434 = vmatpush1.bf16.msra.mxu0 %v3425
      %3435 = vmatprep.subr.bf16.mxu0 0
      %3436 = vmatpush1.bf16.msra.mxu0 0
      %3437 = vmatprep.subr.bf16.mxu0 0
      %3438 = vmatpush1.bf16.msra.mxu0 0
      %3439 = vmatprep.subr.bf16.mxu0 0
      %3440 = vmatpush1.bf16.msra.mxu0 0
      %3441 = vmatprep.subr.bf16.mxu0 0
      %3442 = vmatpush1.bf16.msra.mxu0 0
      %3443 = vmatprep.subr.bf16.mxu0 0
      %3444 = vmatpush1.bf16.msra.mxu0 0
      %3445 = vmatprep.subr.bf16.mxu0 0
      %3446 = vmatpush1.bf16.msra.mxu0 0
      %3447 = vmatprep.subr.bf16.mxu0 0
      %3448 = vmatpush1.bf16.msra.mxu0 0
      %3449 = vmatprep.subr.bf16.mxu0 0
      %3450 = vmatpush1.bf16.msra.mxu0 0
      %3451 = vmatprep.subr.bf16.mxu0 0
      %3452 = vmatpush1.bf16.msra.mxu0 0
      %3453 = vmatprep.subr.bf16.mxu0 0
      %3454 = vmatpush1.bf16.msra.mxu0 0
      %3455 = vmatprep.subr.bf16.mxu0 0
      %3456 = vmatpush1.bf16.msra.mxu0 0
      %3457 = vmatprep.subr.bf16.mxu0 0
      %3458 = vmatpush1.bf16.msra.mxu0 0
      %3459 = vmatprep.subr.bf16.mxu0 0
      %3460 = vmatpush1.bf16.msra.mxu0 0
      %3461 = vmatprep.subr.bf16.mxu0 0
      %3462 = vmatpush1.bf16.msra.mxu0 0
      %3463 = vmatprep.subr.bf16.mxu0 0
      %3464 = vmatpush1.bf16.msra.mxu0 0
      %3465 = vmatprep.mubr.bf16.mxu0 0
      %3466 = vmatmul.mubr.bf16.gmra.mrb[0].mxu0 %v3422
      %v3467 = vpop.f32.mrb[0].mxu0
      %v3468 = vadd.f32 0.0, %v3467
      %v3469 = vpop.f32.mrb[0].mxu0
      %v3470 = vadd.f32 0.0, %v3469
      %v3471 = vpop.f32.mrb[0].mxu0
      %v3472 = vpop.f32.mrb[0].mxu0
      %3473 = vdwg.mxu0
      %3474 = vmatprep.subr.bf16.mxu0 0
      %3475 = vmatpush1.bf16.msra.mxu0 %v3431
      %3476 = vmatprep.subr.bf16.mxu0 0
      %3477 = vmatpush1.bf16.msra.mxu0 0
      %3478 = vmatprep.subr.bf16.mxu0 0
      %3479 = vmatpush1.bf16.msra.mxu0 0
      %3480 = vmatprep.subr.bf16.mxu0 0
      %3481 = vmatpush1.bf16.msra.mxu0 0
      %3482 = vmatprep.subr.bf16.mxu0 0
      %3483 = vmatpush1.bf16.msra.mxu0 0
      %3484 = vmatprep.subr.bf16.mxu0 0
      %3485 = vmatpush1.bf16.msra.mxu0 0
      %3486 = vmatprep.subr.bf16.mxu0 0
      %3487 = vmatpush1.bf16.msra.mxu0 0
      %3488 = vmatprep.subr.bf16.mxu0 0
      %3489 = vmatpush1.bf16.msra.mxu0 0
      %3490 = vmatprep.subr.bf16.mxu0 0
      %3491 = vmatpush1.bf16.msra.mxu0 0
      %3492 = vmatprep.subr.bf16.mxu0 0
      %3493 = vmatpush1.bf16.msra.mxu0 0
      %3494 = vmatprep.subr.bf16.mxu0 0
      %3495 = vmatpush1.bf16.msra.mxu0 0
      %3496 = vmatprep.subr.bf16.mxu0 0
      %3497 = vmatpush1.bf16.msra.mxu0 0
      %3498 = vmatprep.subr.bf16.mxu0 0
      %3499 = vmatpush1.bf16.msra.mxu0 0
      %3500 = vmatprep.subr.bf16.mxu0 0
      %3501 = vmatpush1.bf16.msra.mxu0 0
      %3502 = vmatprep.subr.bf16.mxu0 0
      %3503 = vmatpush1.bf16.msra.mxu0 0
      %3504 = vmatprep.subr.bf16.mxu0 0
      %3505 = vmatpush1.bf16.msra.mxu0 0
      %3506 = vmatprep.mubr.bf16.mxu0 0
      %3507 = vmatmul.mubr.bf16.gmra.mrb[0].mxu0 %v3422
      %v3508 = vpop.f32.mrb[0].mxu0
      %v3509 = vadd.f32 0.0, %v3508
      %v3510 = vpop.f32.mrb[0].mxu0
      %v3511 = vpop.f32.mrb[0].mxu0
      %v3512 = vpop.f32.mrb[0].mxu0
      %3513 = vdwg.mxu0
      %v3514 = vadd.f32 %v3408, %v3468
      %v3515 = vadd.f32 %v3409, %v3470
      %v3516 = vadd.f32 %v3410, %v3509
      %3518 = vset.pattern.permute.xlu0 2
      %3519 = vperm.xlu0 %3518, %v1610
      %v3520 = vpop.permute.xlu0 %3519
      %v3522 = vmul.f32 %v3514, %v3520
      %v3523 = vmul.f32 %v3515, %v3520
      %v3524 = vmul.f32 %v3516, %v3520
      %3525 = vset.pattern.permute.xlu0 3
      %3526 = vperm.xlu0 %3525, %v1610
      %v3527 = vpop.permute.xlu0 %3526
      %v3529 = vadd.f32 %v3522, %v3527
      %v3530 = vadd.f32 %v3523, %v3527
      %v3531 = vadd.f32 %v3524, %v3527
      %v3532 = vmax.f32 %v3529, 0.0
      %v3533 = vmax.f32 %v3530, 0.0
      %v3534 = vmax.f32 %v3531, 0.0
      %v3535 = vmul.f32 %v3532, %v1451
      %v3536 = vmul.f32 %v3533, %v1455
      %v3537 = vmul.f32 %v3534, %v1459
      %v3538 = vpack.c.bf16 %v3535, %v3535
      %v3539 = vpack.c.bf16 %v3536, %v3536
      %v3540 = vpack.c.bf16 %v3537, %v3537
      %v3544 = vunpack.c.l.b16 %v3538
      %v3545 = vunpack.c.l.b16 %v3539
      %v3546 = vunpack.c.l.b16 %v3540
      %v3547 = vpack.c.b16 %v3545, %v3544
      %v3548 = vpack.c.b16 %v3546, %v3546
      %3549 = vrot.lane.b32.xlu0 %v3547, 19
      %v3550 = vpop.permute.xlu0 %3549
      %3551 = vrot.lane.b32.xlu0 %v3548, 19
      %v3552 = vpop.permute.xlu0 %3551
      %v3553 = vrot.slane %v3550, 4
      %v3554 = vsel %vm1482, %v3553, %v3550
      %v3555 = vsel %vm1482, %v3553, %v3552
      %3558 = vst.msk [vmem:[#allocation4] sm:$0xff] %vm1489, %v3554
      %3559 = vst.msk [vmem:[#allocation4 + $0x8] sm:$0xf] %vm1491, %v3555
      %v3560 = vld [vmem:[%s6] sm:$0xff]
      %v3561 = vld [vmem:[#allocation4] sm:$0xff]
      %v3562 = vld [vmem:[#allocation4 + $0x8] sm:$0xf]
      %v3563 = vld [vmem:[%s5] sm:$0xf]
      %s3564 = scalar_lea.vmem %s5, 4
      %v3565 = vld [vmem:[%s3564] sm:$0xf]
      %v3568 = vunpack.c.l.b16 %v3561
      %v3569 = vunpack.c.h.b16 %v3561
      %v3570 = vunpack.c.l.b16 %v3562
      %v3571 = vpack.c.b16 %v3568, %v3568
      %v3572 = vpack.c.b16 %v3569, %v3569
      %v3573 = vpack.c.b16 %v3570, %v3570
      %3574 = vrot.lane.b32.xlu0 %v3571, 127
      %v3575 = vpop.permute.xlu0 %3574
      %3576 = vrot.lane.b32.xlu0 %v3572, 127
      %v3577 = vpop.permute.xlu0 %3576
      %3578 = vrot.lane.b32.xlu0 %v3573, 127
      %v3579 = vpop.permute.xlu0 %3578
      %v3580 = vsel %vm363, %v3575, %v3577
      %v3581 = vsel %vm363, %v3577, %v3579
      %v3583 = vsel %vm1625, %v3565, 0
      %v3586 = vsel %vm1629, %v3580, 0
      %v3589 = vsel %vm1629, %v3581, 0
      %v3592 = vsel %vm1629, %v3579, 0
      %3594 = vmatprep.subr.bf16.mxu0 %v3589
      %3595 = vmatpush1.bf16.msra.mxu0 %v3586
      %3596 = vmatprep.subr.bf16.mxu0 0
      %3597 = vmatpush1.bf16.msra.mxu0 0
      %3598 = vmatprep.subr.bf16.mxu0 0
      %3599 = vmatpush1.bf16.msra.mxu0 0
      %3600 = vmatprep.subr.bf16.mxu0 0
      %3601 = vmatpush1.bf16.msra.mxu0 0
      %3602 = vmatprep.subr.bf16.mxu0 0
      %3603 = vmatpush1.bf16.msra.mxu0 0
      %3604 = vmatprep.subr.bf16.mxu0 0
      %3605 = vmatpush1.bf16.msra.mxu0 0
      %3606 = vmatprep.subr.bf16.mxu0 0
      %3607 = vmatpush1.bf16.msra.mxu0 0
      %3608 = vmatprep.subr.bf16.mxu0 0
      %3609 = vmatpush1.bf16.msra.mxu0 0
      %3610 = vmatprep.subr.bf16.mxu0 0
      %3611 = vmatpush1.bf16.msra.mxu0 0
      %3612 = vmatprep.subr.bf16.mxu0 0
      %3613 = vmatpush1.bf16.msra.mxu0 0
      %3614 = vmatprep.subr.bf16.mxu0 0
      %3615 = vmatpush1.bf16.msra.mxu0 0
      %3616 = vmatprep.subr.bf16.mxu0 0
      %3617 = vmatpush1.bf16.msra.mxu0 0
      %3618 = vmatprep.subr.bf16.mxu0 0
      %3619 = vmatpush1.bf16.msra.mxu0 0
      %3620 = vmatprep.subr.bf16.mxu0 0
      %3621 = vmatpush1.bf16.msra.mxu0 0
      %3622 = vmatprep.subr.bf16.mxu0 0
      %3623 = vmatpush1.bf16.msra.mxu0 0
      %3624 = vmatprep.subr.bf16.mxu0 0
      %3625 = vmatpush1.bf16.msra.mxu0 0
      %3626 = vmatprep.mubr.bf16.mxu0 0
      %3627 = vmatmul.mubr.bf16.gmra.mrb[0].mxu0 %v3583
      %v3628 = vpop.f32.mrb[0].mxu0
      %v3629 = vadd.f32 0.0, %v3628
      %v3630 = vpop.f32.mrb[0].mxu0
      %v3631 = vadd.f32 0.0, %v3630
      %v3632 = vpop.f32.mrb[0].mxu0
      %v3633 = vpop.f32.mrb[0].mxu0
      %3634 = vdwg.mxu0
      %3635 = vmatprep.subr.bf16.mxu0 0
      %3636 = vmatpush1.bf16.msra.mxu0 %v3592
      %3637 = vmatprep.subr.bf16.mxu0 0
      %3638 = vmatpush1.bf16.msra.mxu0 0
      %3639 = vmatprep.subr.bf16.mxu0 0
      %3640 = vmatpush1.bf16.msra.mxu0 0
      %3641 = vmatprep.subr.bf16.mxu0 0
      %3642 = vmatpush1.bf16.msra.mxu0 0
      %3643 = vmatprep.subr.bf16.mxu0 0
      %3644 = vmatpush1.bf16.msra.mxu0 0
      %3645 = vmatprep.subr.bf16.mxu0 0
      %3646 = vmatpush1.bf16.msra.mxu0 0
      %3647 = vmatprep.subr.bf16.mxu0 0
      %3648 = vmatpush1.bf16.msra.mxu0 0
      %3649 = vmatprep.subr.bf16.mxu0 0
      %3650 = vmatpush1.bf16.msra.mxu0 0
      %3651 = vmatprep.subr.bf16.mxu0 0
      %3652 = vmatpush1.bf16.msra.mxu0 0
      %3653 = vmatprep.subr.bf16.mxu0 0
      %3654 = vmatpush1.bf16.msra.mxu0 0
      %3655 = vmatprep.subr.bf16.mxu0 0
      %3656 = vmatpush1.bf16.msra.mxu0 0
      %3657 = vmatprep.subr.bf16.mxu0 0
      %3658 = vmatpush1.bf16.msra.mxu0 0
      %3659 = vmatprep.subr.bf16.mxu0 0
      %3660 = vmatpush1.bf16.msra.mxu0 0
      %3661 = vmatprep.subr.bf16.mxu0 0
      %3662 = vmatpush1.bf16.msra.mxu0 0
      %3663 = vmatprep.subr.bf16.mxu0 0
      %3664 = vmatpush1.bf16.msra.mxu0 0
      %3665 = vmatprep.subr.bf16.mxu0 0
      %3666 = vmatpush1.bf16.msra.mxu0 0
      %3667 = vmatprep.mubr.bf16.mxu0 0
      %3668 = vmatmul.mubr.bf16.gmra.mrb[0].mxu0 %v3583
      %v3669 = vpop.f32.mrb[0].mxu0
      %v3670 = vadd.f32 0.0, %v3669
      %v3671 = vpop.f32.mrb[0].mxu0
      %v3672 = vpop.f32.mrb[0].mxu0
      %v3673 = vpop.f32.mrb[0].mxu0
      %3674 = vdwg.mxu0
      %v3676 = vsel %vm1625, %v3563, 0
      %v3679 = vsel %vm1629, %v3571, 0
      %v3682 = vsel %vm1629, %v3572, 0
      %v3685 = vsel %vm1629, %v3573, 0
      %3687 = vmatprep.subr.bf16.mxu0 %v3682
      %3688 = vmatpush1.bf16.msra.mxu0 %v3679
      %3689 = vmatprep.subr.bf16.mxu0 0
      %3690 = vmatpush1.bf16.msra.mxu0 0
      %3691 = vmatprep.subr.bf16.mxu0 0
      %3692 = vmatpush1.bf16.msra.mxu0 0
      %3693 = vmatprep.subr.bf16.mxu0 0
      %3694 = vmatpush1.bf16.msra.mxu0 0
      %3695 = vmatprep.subr.bf16.mxu0 0
      %3696 = vmatpush1.bf16.msra.mxu0 0
      %3697 = vmatprep.subr.bf16.mxu0 0
      %3698 = vmatpush1.bf16.msra.mxu0 0
      %3699 = vmatprep.subr.bf16.mxu0 0
      %3700 = vmatpush1.bf16.msra.mxu0 0
      %3701 = vmatprep.subr.bf16.mxu0 0
      %3702 = vmatpush1.bf16.msra.mxu0 0
      %3703 = vmatprep.subr.bf16.mxu0 0
      %3704 = vmatpush1.bf16.msra.mxu0 0
      %3705 = vmatprep.subr.bf16.mxu0 0
      %3706 = vmatpush1.bf16.msra.mxu0 0
      %3707 = vmatprep.subr.bf16.mxu0 0
      %3708 = vmatpush1.bf16.msra.mxu0 0
      %3709 = vmatprep.subr.bf16.mxu0 0
      %3710 = vmatpush1.bf16.msra.mxu0 0
      %3711 = vmatprep.subr.bf16.mxu0 0
      %3712 = vmatpush1.bf16.msra.mxu0 0
      %3713 = vmatprep.subr.bf16.mxu0 0
      %3714 = vmatpush1.bf16.msra.mxu0 0
      %3715 = vmatprep.subr.bf16.mxu0 0
      %3716 = vmatpush1.bf16.msra.mxu0 0
      %3717 = vmatprep.subr.bf16.mxu0 0
      %3718 = vmatpush1.bf16.msra.mxu0 0
      %3719 = vmatprep.mubr.bf16.mxu0 0
      %3720 = vmatmul.mubr.bf16.gmra.mrb[0].mxu0 %v3676
      %v3721 = vpop.f32.mrb[0].mxu0
      %v3722 = vadd.f32 %v3629, %v3721
      %v3723 = vpop.f32.mrb[0].mxu0
      %v3724 = vadd.f32 %v3631, %v3723
      %v3725 = vpop.f32.mrb[0].mxu0
      %v3726 = vpop.f32.mrb[0].mxu0
      %3727 = vdwg.mxu0
      %3728 = vmatprep.subr.bf16.mxu0 0
      %3729 = vmatpush1.bf16.msra.mxu0 %v3685
      %3730 = vmatprep.subr.bf16.mxu0 0
      %3731 = vmatpush1.bf16.msra.mxu0 0
      %3732 = vmatprep.subr.bf16.mxu0 0
      %3733 = vmatpush1.bf16.msra.mxu0 0
      %3734 = vmatprep.subr.bf16.mxu0 0
      %3735 = vmatpush1.bf16.msra.mxu0 0
      %3736 = vmatprep.subr.bf16.mxu0 0
      %3737 = vmatpush1.bf16.msra.mxu0 0
      %3738 = vmatprep.subr.bf16.mxu0 0
      %3739 = vmatpush1.bf16.msra.mxu0 0
      %3740 = vmatprep.subr.bf16.mxu0 0
      %3741 = vmatpush1.bf16.msra.mxu0 0
      %3742 = vmatprep.subr.bf16.mxu0 0
      %3743 = vmatpush1.bf16.msra.mxu0 0
      %3744 = vmatprep.subr.bf16.mxu0 0
      %3745 = vmatpush1.bf16.msra.mxu0 0
      %3746 = vmatprep.subr.bf16.mxu0 0
      %3747 = vmatpush1.bf16.msra.mxu0 0
      %3748 = vmatprep.subr.bf16.mxu0 0
      %3749 = vmatpush1.bf16.msra.mxu0 0
      %3750 = vmatprep.subr.bf16.mxu0 0
      %3751 = vmatpush1.bf16.msra.mxu0 0
      %3752 = vmatprep.subr.bf16.mxu0 0
      %3753 = vmatpush1.bf16.msra.mxu0 0
      %3754 = vmatprep.subr.bf16.mxu0 0
      %3755 = vmatpush1.bf16.msra.mxu0 0
      %3756 = vmatprep.subr.bf16.mxu0 0
      %3757 = vmatpush1.bf16.msra.mxu0 0
      %3758 = vmatprep.subr.bf16.mxu0 0
      %3759 = vmatpush1.bf16.msra.mxu0 0
      %3760 = vmatprep.mubr.bf16.mxu0 0
      %3761 = vmatmul.mubr.bf16.gmra.mrb[0].mxu0 %v3676
      %v3762 = vpop.f32.mrb[0].mxu0
      %v3763 = vadd.f32 %v3670, %v3762
      %v3764 = vpop.f32.mrb[0].mxu0
      %v3765 = vpop.f32.mrb[0].mxu0
      %v3766 = vpop.f32.mrb[0].mxu0
      %3767 = vdwg.mxu0
      %s3768 = scalar_lea.vmem %s5, 8
      %v3769 = vld [vmem:[%s3768] sm:$0xf]
      %3770 = vrot.lane.b32.xlu0 %v3571, 126
      %v3771 = vpop.permute.xlu0 %3770
      %3772 = vrot.lane.b32.xlu0 %v3572, 126
      %v3773 = vpop.permute.xlu0 %3772
      %3774 = vrot.lane.b32.xlu0 %v3573, 126
      %v3775 = vpop.permute.xlu0 %3774
      %v3776 = vsel %vm580, %v3771, %v3773
      %v3777 = vsel %vm580, %v3773, %v3775
      %v3779 = vsel %vm1625, %v3769, 0
      %v3782 = vsel %vm1629, %v3776, 0
      %v3785 = vsel %vm1629, %v3777, 0
      %v3788 = vsel %vm1629, %v3775, 0
      %3790 = vmatprep.subr.bf16.mxu0 %v3785
      %3791 = vmatpush1.bf16.msra.mxu0 %v3782
      %3792 = vmatprep.subr.bf16.mxu0 0
      %3793 = vmatpush1.bf16.msra.mxu0 0
      %3794 = vmatprep.subr.bf16.mxu0 0
      %3795 = vmatpush1.bf16.msra.mxu0 0
      %3796 = vmatprep.subr.bf16.mxu0 0
      %3797 = vmatpush1.bf16.msra.mxu0 0
      %3798 = vmatprep.subr.bf16.mxu0 0
      %3799 = vmatpush1.bf16.msra.mxu0 0
      %3800 = vmatprep.subr.bf16.mxu0 0
      %3801 = vmatpush1.bf16.msra.mxu0 0
      %3802 = vmatprep.subr.bf16.mxu0 0
      %3803 = vmatpush1.bf16.msra.mxu0 0
      %3804 = vmatprep.subr.bf16.mxu0 0
      %3805 = vmatpush1.bf16.msra.mxu0 0
      %3806 = vmatprep.subr.bf16.mxu0 0
      %3807 = vmatpush1.bf16.msra.mxu0 0
      %3808 = vmatprep.subr.bf16.mxu0 0
      %3809 = vmatpush1.bf16.msra.mxu0 0
      %3810 = vmatprep.subr.bf16.mxu0 0
      %3811 = vmatpush1.bf16.msra.mxu0 0
      %3812 = vmatprep.subr.bf16.mxu0 0
      %3813 = vmatpush1.bf16.msra.mxu0 0
      %3814 = vmatprep.subr.bf16.mxu0 0
      %3815 = vmatpush1.bf16.msra.mxu0 0
      %3816 = vmatprep.subr.bf16.mxu0 0
      %3817 = vmatpush1.bf16.msra.mxu0 0
      %3818 = vmatprep.subr.bf16.mxu0 0
      %3819 = vmatpush1.bf16.msra.mxu0 0
      %3820 = vmatprep.subr.bf16.mxu0 0
      %3821 = vmatpush1.bf16.msra.mxu0 0
      %3822 = vmatprep.mubr.bf16.mxu0 0
      %3823 = vmatmul.mubr.bf16.gmra.mrb[0].mxu0 %v3779
      %v3824 = vpop.f32.mrb[0].mxu0
      %v3825 = vadd.f32 0.0, %v3824
      %v3826 = vpop.f32.mrb[0].mxu0
      %v3827 = vadd.f32 0.0, %v3826
      %v3828 = vpop.f32.mrb[0].mxu0
      %v3829 = vpop.f32.mrb[0].mxu0
      %3830 = vdwg.mxu0
      %3831 = vmatprep.subr.bf16.mxu0 0
      %3832 = vmatpush1.bf16.msra.mxu0 %v3788
      %3833 = vmatprep.subr.bf16.mxu0 0
      %3834 = vmatpush1.bf16.msra.mxu0 0
      %3835 = vmatprep.subr.bf16.mxu0 0
      %3836 = vmatpush1.bf16.msra.mxu0 0
      %3837 = vmatprep.subr.bf16.mxu0 0
      %3838 = vmatpush1.bf16.msra.mxu0 0
      %3839 = vmatprep.subr.bf16.mxu0 0
      %3840 = vmatpush1.bf16.msra.mxu0 0
      %3841 = vmatprep.subr.bf16.mxu0 0
      %3842 = vmatpush1.bf16.msra.mxu0 0
      %3843 = vmatprep.subr.bf16.mxu0 0
      %3844 = vmatpush1.bf16.msra.mxu0 0
      %3845 = vmatprep.subr.bf16.mxu0 0
      %3846 = vmatpush1.bf16.msra.mxu0 0
      %3847 = vmatprep.subr.bf16.mxu0 0
      %3848 = vmatpush1.bf16.msra.mxu0 0
      %3849 = vmatprep.subr.bf16.mxu0 0
      %3850 = vmatpush1.bf16.msra.mxu0 0
      %3851 = vmatprep.subr.bf16.mxu0 0
      %3852 = vmatpush1.bf16.msra.mxu0 0
      %3853 = vmatprep.subr.bf16.mxu0 0
      %3854 = vmatpush1.bf16.msra.mxu0 0
      %3855 = vmatprep.subr.bf16.mxu0 0
      %3856 = vmatpush1.bf16.msra.mxu0 0
      %3857 = vmatprep.subr.bf16.mxu0 0
      %3858 = vmatpush1.bf16.msra.mxu0 0
      %3859 = vmatprep.subr.bf16.mxu0 0
      %3860 = vmatpush1.bf16.msra.mxu0 0
      %3861 = vmatprep.subr.bf16.mxu0 0
      %3862 = vmatpush1.bf16.msra.mxu0 0
      %3863 = vmatprep.mubr.bf16.mxu0 0
      %3864 = vmatmul.mubr.bf16.gmra.mrb[0].mxu0 %v3779
      %v3865 = vpop.f32.mrb[0].mxu0
      %v3866 = vadd.f32 0.0, %v3865
      %v3867 = vpop.f32.mrb[0].mxu0
      %v3868 = vpop.f32.mrb[0].mxu0
      %v3869 = vpop.f32.mrb[0].mxu0
      %3870 = vdwg.mxu0
      %v3871 = vadd.f32 %v3722, %v3825
      %v3872 = vadd.f32 %v3724, %v3827
      %v3873 = vadd.f32 %v3763, %v3866
      %s3874 = scalar_lea.vmem %s5, 12
      %v3875 = vld [vmem:[%s3874] sm:$0xf]
      %3876 = vrot.lane.b32.xlu0 %v3571, 110
      %v3877 = vpop.permute.xlu0 %3876
      %3878 = vrot.lane.b32.xlu0 %v3572, 110
      %v3879 = vpop.permute.xlu0 %3878
      %3880 = vrot.lane.b32.xlu0 %v3573, 110
      %v3881 = vpop.permute.xlu0 %3880
      %v3882 = vsel %vm705, %v3877, %v3879
      %v3883 = vsel %vm705, %v3879, %v3881
      %v3885 = vsel %vm1625, %v3875, 0
      %v3888 = vsel %vm1629, %v3882, 0
      %v3891 = vsel %vm1629, %v3883, 0
      %v3894 = vsel %vm1629, %v3881, 0
      %3896 = vmatprep.subr.bf16.mxu0 %v3891
      %3897 = vmatpush1.bf16.msra.mxu0 %v3888
      %3898 = vmatprep.subr.bf16.mxu0 0
      %3899 = vmatpush1.bf16.msra.mxu0 0
      %3900 = vmatprep.subr.bf16.mxu0 0
      %3901 = vmatpush1.bf16.msra.mxu0 0
      %3902 = vmatprep.subr.bf16.mxu0 0
      %3903 = vmatpush1.bf16.msra.mxu0 0
      %3904 = vmatprep.subr.bf16.mxu0 0
      %3905 = vmatpush1.bf16.msra.mxu0 0
      %3906 = vmatprep.subr.bf16.mxu0 0
      %3907 = vmatpush1.bf16.msra.mxu0 0
      %3908 = vmatprep.subr.bf16.mxu0 0
      %3909 = vmatpush1.bf16.msra.mxu0 0
      %3910 = vmatprep.subr.bf16.mxu0 0
      %3911 = vmatpush1.bf16.msra.mxu0 0
      %3912 = vmatprep.subr.bf16.mxu0 0
      %3913 = vmatpush1.bf16.msra.mxu0 0
      %3914 = vmatprep.subr.bf16.mxu0 0
      %3915 = vmatpush1.bf16.msra.mxu0 0
      %3916 = vmatprep.subr.bf16.mxu0 0
      %3917 = vmatpush1.bf16.msra.mxu0 0
      %3918 = vmatprep.subr.bf16.mxu0 0
      %3919 = vmatpush1.bf16.msra.mxu0 0
      %3920 = vmatprep.subr.bf16.mxu0 0
      %3921 = vmatpush1.bf16.msra.mxu0 0
      %3922 = vmatprep.subr.bf16.mxu0 0
      %3923 = vmatpush1.bf16.msra.mxu0 0
      %3924 = vmatprep.subr.bf16.mxu0 0
      %3925 = vmatpush1.bf16.msra.mxu0 0
      %3926 = vmatprep.subr.bf16.mxu0 0
      %3927 = vmatpush1.bf16.msra.mxu0 0
      %3928 = vmatprep.mubr.bf16.mxu0 0
      %3929 = vmatmul.mubr.bf16.gmra.mrb[0].mxu0 %v3885
      %v3930 = vpop.f32.mrb[0].mxu0
      %v3931 = vadd.f32 0.0, %v3930
      %v3932 = vpop.f32.mrb[0].mxu0
      %v3933 = vadd.f32 0.0, %v3932
      %v3934 = vpop.f32.mrb[0].mxu0
      %v3935 = vpop.f32.mrb[0].mxu0
      %3936 = vdwg.mxu0
      %3937 = vmatprep.subr.bf16.mxu0 0
      %3938 = vmatpush1.bf16.msra.mxu0 %v3894
      %3939 = vmatprep.subr.bf16.mxu0 0
      %3940 = vmatpush1.bf16.msra.mxu0 0
      %3941 = vmatprep.subr.bf16.mxu0 0
      %3942 = vmatpush1.bf16.msra.mxu0 0
      %3943 = vmatprep.subr.bf16.mxu0 0
      %3944 = vmatpush1.bf16.msra.mxu0 0
      %3945 = vmatprep.subr.bf16.mxu0 0
      %3946 = vmatpush1.bf16.msra.mxu0 0
      %3947 = vmatprep.subr.bf16.mxu0 0
      %3948 = vmatpush1.bf16.msra.mxu0 0
      %3949 = vmatprep.subr.bf16.mxu0 0
      %3950 = vmatpush1.bf16.msra.mxu0 0
      %3951 = vmatprep.subr.bf16.mxu0 0
      %3952 = vmatpush1.bf16.msra.mxu0 0
      %3953 = vmatprep.subr.bf16.mxu0 0
      %3954 = vmatpush1.bf16.msra.mxu0 0
      %3955 = vmatprep.subr.bf16.mxu0 0
      %3956 = vmatpush1.bf16.msra.mxu0 0
      %3957 = vmatprep.subr.bf16.mxu0 0
      %3958 = vmatpush1.bf16.msra.mxu0 0
      %3959 = vmatprep.subr.bf16.mxu0 0
      %3960 = vmatpush1.bf16.msra.mxu0 0
      %3961 = vmatprep.subr.bf16.mxu0 0
      %3962 = vmatpush1.bf16.msra.mxu0 0
      %3963 = vmatprep.subr.bf16.mxu0 0
      %3964 = vmatpush1.bf16.msra.mxu0 0
      %3965 = vmatprep.subr.bf16.mxu0 0
      %3966 = vmatpush1.bf16.msra.mxu0 0
      %3967 = vmatprep.subr.bf16.mxu0 0
      %3968 = vmatpush1.bf16.msra.mxu0 0
      %3969 = vmatprep.mubr.bf16.mxu0 0
      %3970 = vmatmul.mubr.bf16.gmra.mrb[0].mxu0 %v3885
      %v3971 = vpop.f32.mrb[0].mxu0
      %v3972 = vadd.f32 0.0, %v3971
      %v3973 = vpop.f32.mrb[0].mxu0
      %v3974 = vpop.f32.mrb[0].mxu0
      %v3975 = vpop.f32.mrb[0].mxu0
      %3976 = vdwg.mxu0
      %v3977 = vadd.f32 %v3871, %v3931
      %v3978 = vadd.f32 %v3872, %v3933
      %v3979 = vadd.f32 %v3873, %v3972
      %s3980 = scalar_lea.vmem %s5, 16
      %v3981 = vld [vmem:[%s3980] sm:$0xf]
      %3982 = vrot.lane.b32.xlu0 %v3571, 109
      %v3983 = vpop.permute.xlu0 %3982
      %3984 = vrot.lane.b32.xlu0 %v3572, 109
      %v3985 = vpop.permute.xlu0 %3984
      %3986 = vrot.lane.b32.xlu0 %v3573, 109
      %v3987 = vpop.permute.xlu0 %3986
      %v3988 = vsel %vm830, %v3983, %v3985
      %v3989 = vsel %vm830, %v3985, %v3987
      %v3991 = vsel %vm1625, %v3981, 0
      %v3994 = vsel %vm1629, %v3988, 0
      %v3997 = vsel %vm1629, %v3989, 0
      %v4000 = vsel %vm1629, %v3987, 0
      %4002 = vmatprep.subr.bf16.mxu0 %v3997
      %4003 = vmatpush1.bf16.msra.mxu0 %v3994
      %4004 = vmatprep.subr.bf16.mxu0 0
      %4005 = vmatpush1.bf16.msra.mxu0 0
      %4006 = vmatprep.subr.bf16.mxu0 0
      %4007 = vmatpush1.bf16.msra.mxu0 0
      %4008 = vmatprep.subr.bf16.mxu0 0
      %4009 = vmatpush1.bf16.msra.mxu0 0
      %4010 = vmatprep.subr.bf16.mxu0 0
      %4011 = vmatpush1.bf16.msra.mxu0 0
      %4012 = vmatprep.subr.bf16.mxu0 0
      %4013 = vmatpush1.bf16.msra.mxu0 0
      %4014 = vmatprep.subr.bf16.mxu0 0
      %4015 = vmatpush1.bf16.msra.mxu0 0
      %4016 = vmatprep.subr.bf16.mxu0 0
      %4017 = vmatpush1.bf16.msra.mxu0 0
      %4018 = vmatprep.subr.bf16.mxu0 0
      %4019 = vmatpush1.bf16.msra.mxu0 0
      %4020 = vmatprep.subr.bf16.mxu0 0
      %4021 = vmatpush1.bf16.msra.mxu0 0
      %4022 = vmatprep.subr.bf16.mxu0 0
      %4023 = vmatpush1.bf16.msra.mxu0 0
      %4024 = vmatprep.subr.bf16.mxu0 0
      %4025 = vmatpush1.bf16.msra.mxu0 0
      %4026 = vmatprep.subr.bf16.mxu0 0
      %4027 = vmatpush1.bf16.msra.mxu0 0
      %4028 = vmatprep.subr.bf16.mxu0 0
      %4029 = vmatpush1.bf16.msra.mxu0 0
      %4030 = vmatprep.subr.bf16.mxu0 0
      %4031 = vmatpush1.bf16.msra.mxu0 0
      %4032 = vmatprep.subr.bf16.mxu0 0
      %4033 = vmatpush1.bf16.msra.mxu0 0
      %4034 = vmatprep.mubr.bf16.mxu0 0
      %4035 = vmatmul.mubr.bf16.gmra.mrb[0].mxu0 %v3991
      %v4036 = vpop.f32.mrb[0].mxu0
      %v4037 = vadd.f32 0.0, %v4036
      %v4038 = vpop.f32.mrb[0].mxu0
      %v4039 = vadd.f32 0.0, %v4038
      %v4040 = vpop.f32.mrb[0].mxu0
      %v4041 = vpop.f32.mrb[0].mxu0
      %4042 = vdwg.mxu0
      %4043 = vmatprep.subr.bf16.mxu0 0
      %4044 = vmatpush1.bf16.msra.mxu0 %v4000
      %4045 = vmatprep.subr.bf16.mxu0 0
      %4046 = vmatpush1.bf16.msra.mxu0 0
      %4047 = vmatprep.subr.bf16.mxu0 0
      %4048 = vmatpush1.bf16.msra.mxu0 0
      %4049 = vmatprep.subr.bf16.mxu0 0
      %4050 = vmatpush1.bf16.msra.mxu0 0
      %4051 = vmatprep.subr.bf16.mxu0 0
      %4052 = vmatpush1.bf16.msra.mxu0 0
      %4053 = vmatprep.subr.bf16.mxu0 0
      %4054 = vmatpush1.bf16.msra.mxu0 0
      %4055 = vmatprep.subr.bf16.mxu0 0
      %4056 = vmatpush1.bf16.msra.mxu0 0
      %4057 = vmatprep.subr.bf16.mxu0 0
      %4058 = vmatpush1.bf16.msra.mxu0 0
      %4059 = vmatprep.subr.bf16.mxu0 0
      %4060 = vmatpush1.bf16.msra.mxu0 0
      %4061 = vmatprep.subr.bf16.mxu0 0
      %4062 = vmatpush1.bf16.msra.mxu0 0
      %4063 = vmatprep.subr.bf16.mxu0 0
      %4064 = vmatpush1.bf16.msra.mxu0 0
      %4065 = vmatprep.subr.bf16.mxu0 0
      %4066 = vmatpush1.bf16.msra.mxu0 0
      %4067 = vmatprep.subr.bf16.mxu0 0
      %4068 = vmatpush1.bf16.msra.mxu0 0
      %4069 = vmatprep.subr.bf16.mxu0 0
      %4070 = vmatpush1.bf16.msra.mxu0 0
      %4071 = vmatprep.subr.bf16.mxu0 0
      %4072 = vmatpush1.bf16.msra.mxu0 0
      %4073 = vmatprep.subr.bf16.mxu0 0
      %4074 = vmatpush1.bf16.msra.mxu0 0
      %4075 = vmatprep.mubr.bf16.mxu0 0
      %4076 = vmatmul.mubr.bf16.gmra.mrb[0].mxu0 %v3991
      %v4077 = vpop.f32.mrb[0].mxu0
      %v4078 = vadd.f32 0.0, %v4077
      %v4079 = vpop.f32.mrb[0].mxu0
      %v4080 = vpop.f32.mrb[0].mxu0
      %v4081 = vpop.f32.mrb[0].mxu0
      %4082 = vdwg.mxu0
      %v4083 = vadd.f32 %v3977, %v4037
      %v4084 = vadd.f32 %v3978, %v4039
      %v4085 = vadd.f32 %v3979, %v4078
      %s4086 = scalar_lea.vmem %s5, 20
      %v4087 = vld [vmem:[%s4086] sm:$0xf]
      %4088 = vrot.lane.b32.xlu0 %v3571, 108
      %v4089 = vpop.permute.xlu0 %4088
      %4090 = vrot.lane.b32.xlu0 %v3572, 108
      %v4091 = vpop.permute.xlu0 %4090
      %4092 = vrot.lane.b32.xlu0 %v3573, 108
      %v4093 = vpop.permute.xlu0 %4092
      %v4094 = vsel %vm955, %v4089, %v4091
      %v4095 = vsel %vm955, %v4091, %v4093
      %v4097 = vsel %vm1625, %v4087, 0
      %v4100 = vsel %vm1629, %v4094, 0
      %v4103 = vsel %vm1629, %v4095, 0
      %v4106 = vsel %vm1629, %v4093, 0
      %4108 = vmatprep.subr.bf16.mxu0 %v4103
      %4109 = vmatpush1.bf16.msra.mxu0 %v4100
      %4110 = vmatprep.subr.bf16.mxu0 0
      %4111 = vmatpush1.bf16.msra.mxu0 0
      %4112 = vmatprep.subr.bf16.mxu0 0
      %4113 = vmatpush1.bf16.msra.mxu0 0
      %4114 = vmatprep.subr.bf16.mxu0 0
      %4115 = vmatpush1.bf16.msra.mxu0 0
      %4116 = vmatprep.subr.bf16.mxu0 0
      %4117 = vmatpush1.bf16.msra.mxu0 0
      %4118 = vmatprep.subr.bf16.mxu0 0
      %4119 = vmatpush1.bf16.msra.mxu0 0
      %4120 = vmatprep.subr.bf16.mxu0 0
      %4121 = vmatpush1.bf16.msra.mxu0 0
      %4122 = vmatprep.subr.bf16.mxu0 0
      %4123 = vmatpush1.bf16.msra.mxu0 0
      %4124 = vmatprep.subr.bf16.mxu0 0
      %4125 = vmatpush1.bf16.msra.mxu0 0
      %4126 = vmatprep.subr.bf16.mxu0 0
      %4127 = vmatpush1.bf16.msra.mxu0 0
      %4128 = vmatprep.subr.bf16.mxu0 0
      %4129 = vmatpush1.bf16.msra.mxu0 0
      %4130 = vmatprep.subr.bf16.mxu0 0
      %4131 = vmatpush1.bf16.msra.mxu0 0
      %4132 = vmatprep.subr.bf16.mxu0 0
      %4133 = vmatpush1.bf16.msra.mxu0 0
      %4134 = vmatprep.subr.bf16.mxu0 0
      %4135 = vmatpush1.bf16.msra.mxu0 0
      %4136 = vmatprep.subr.bf16.mxu0 0
      %4137 = vmatpush1.bf16.msra.mxu0 0
      %4138 = vmatprep.subr.bf16.mxu0 0
      %4139 = vmatpush1.bf16.msra.mxu0 0
      %4140 = vmatprep.mubr.bf16.mxu0 0
      %4141 = vmatmul.mubr.bf16.gmra.mrb[0].mxu0 %v4097
      %v4142 = vpop.f32.mrb[0].mxu0
      %v4143 = vadd.f32 0.0, %v4142
      %v4144 = vpop.f32.mrb[0].mxu0
      %v4145 = vadd.f32 0.0, %v4144
      %v4146 = vpop.f32.mrb[0].mxu0
      %v4147 = vpop.f32.mrb[0].mxu0
      %4148 = vdwg.mxu0
      %4149 = vmatprep.subr.bf16.mxu0 0
      %4150 = vmatpush1.bf16.msra.mxu0 %v4106
      %4151 = vmatprep.subr.bf16.mxu0 0
      %4152 = vmatpush1.bf16.msra.mxu0 0
      %4153 = vmatprep.subr.bf16.mxu0 0
      %4154 = vmatpush1.bf16.msra.mxu0 0
      %4155 = vmatprep.subr.bf16.mxu0 0
      %4156 = vmatpush1.bf16.msra.mxu0 0
      %4157 = vmatprep.subr.bf16.mxu0 0
      %4158 = vmatpush1.bf16.msra.mxu0 0
      %4159 = vmatprep.subr.bf16.mxu0 0
      %4160 = vmatpush1.bf16.msra.mxu0 0
      %4161 = vmatprep.subr.bf16.mxu0 0
      %4162 = vmatpush1.bf16.msra.mxu0 0
      %4163 = vmatprep.subr.bf16.mxu0 0
      %4164 = vmatpush1.bf16.msra.mxu0 0
      %4165 = vmatprep.subr.bf16.mxu0 0
      %4166 = vmatpush1.bf16.msra.mxu0 0
      %4167 = vmatprep.subr.bf16.mxu0 0
      %4168 = vmatpush1.bf16.msra.mxu0 0
      %4169 = vmatprep.subr.bf16.mxu0 0
      %4170 = vmatpush1.bf16.msra.mxu0 0
      %4171 = vmatprep.subr.bf16.mxu0 0
      %4172 = vmatpush1.bf16.msra.mxu0 0
      %4173 = vmatprep.subr.bf16.mxu0 0
      %4174 = vmatpush1.bf16.msra.mxu0 0
      %4175 = vmatprep.subr.bf16.mxu0 0
      %4176 = vmatpush1.bf16.msra.mxu0 0
      %4177 = vmatprep.subr.bf16.mxu0 0
      %4178 = vmatpush1.bf16.msra.mxu0 0
      %4179 = vmatprep.subr.bf16.mxu0 0
      %4180 = vmatpush1.bf16.msra.mxu0 0
      %4181 = vmatprep.mubr.bf16.mxu0 0
      %4182 = vmatmul.mubr.bf16.gmra.mrb[0].mxu0 %v4097
      %v4183 = vpop.f32.mrb[0].mxu0
      %v4184 = vadd.f32 0.0, %v4183
      %v4185 = vpop.f32.mrb[0].mxu0
      %v4186 = vpop.f32.mrb[0].mxu0
      %v4187 = vpop.f32.mrb[0].mxu0
      %4188 = vdwg.mxu0
      %v4189 = vadd.f32 %v4083, %v4143
      %v4190 = vadd.f32 %v4084, %v4145
      %v4191 = vadd.f32 %v4085, %v4184
      %s4192 = scalar_lea.vmem %s5, 24
      %v4193 = vld [vmem:[%s4192] sm:$0xf]
      %4194 = vrot.lane.b32.xlu0 %v3571, 92
      %v4195 = vpop.permute.xlu0 %4194
      %4196 = vrot.lane.b32.xlu0 %v3572, 92
      %v4197 = vpop.permute.xlu0 %4196
      %4198 = vrot.lane.b32.xlu0 %v3573, 92
      %v4199 = vpop.permute.xlu0 %4198
      %v4200 = vsel %vm1080, %v4195, %v4197
      %v4201 = vsel %vm1080, %v4197, %v4199
      %v4203 = vsel %vm1625, %v4193, 0
      %v4206 = vsel %vm1629, %v4200, 0
      %v4209 = vsel %vm1629, %v4201, 0
      %v4212 = vsel %vm1629, %v4199, 0
      %4214 = vmatprep.subr.bf16.mxu0 %v4209
      %4215 = vmatpush1.bf16.msra.mxu0 %v4206
      %4216 = vmatprep.subr.bf16.mxu0 0
      %4217 = vmatpush1.bf16.msra.mxu0 0
      %4218 = vmatprep.subr.bf16.mxu0 0
      %4219 = vmatpush1.bf16.msra.mxu0 0
      %4220 = vmatprep.subr.bf16.mxu0 0
      %4221 = vmatpush1.bf16.msra.mxu0 0
      %4222 = vmatprep.subr.bf16.mxu0 0
      %4223 = vmatpush1.bf16.msra.mxu0 0
      %4224 = vmatprep.subr.bf16.mxu0 0
      %4225 = vmatpush1.bf16.msra.mxu0 0
      %4226 = vmatprep.subr.bf16.mxu0 0
      %4227 = vmatpush1.bf16.msra.mxu0 0
      %4228 = vmatprep.subr.bf16.mxu0 0
      %4229 = vmatpush1.bf16.msra.mxu0 0
      %4230 = vmatprep.subr.bf16.mxu0 0
      %4231 = vmatpush1.bf16.msra.mxu0 0
      %4232 = vmatprep.subr.bf16.mxu0 0
      %4233 = vmatpush1.bf16.msra.mxu0 0
      %4234 = vmatprep.subr.bf16.mxu0 0
      %4235 = vmatpush1.bf16.msra.mxu0 0
      %4236 = vmatprep.subr.bf16.mxu0 0
      %4237 = vmatpush1.bf16.msra.mxu0 0
      %4238 = vmatprep.subr.bf16.mxu0 0
      %4239 = vmatpush1.bf16.msra.mxu0 0
      %4240 = vmatprep.subr.bf16.mxu0 0
      %4241 = vmatpush1.bf16.msra.mxu0 0
      %4242 = vmatprep.subr.bf16.mxu0 0
      %4243 = vmatpush1.bf16.msra.mxu0 0
      %4244 = vmatprep.subr.bf16.mxu0 0
      %4245 = vmatpush1.bf16.msra.mxu0 0
      %4246 = vmatprep.mubr.bf16.mxu0 0
      %4247 = vmatmul.mubr.bf16.gmra.mrb[0].mxu0 %v4203
      %v4248 = vpop.f32.mrb[0].mxu0
      %v4249 = vadd.f32 0.0, %v4248
      %v4250 = vpop.f32.mrb[0].mxu0
      %v4251 = vadd.f32 0.0, %v4250
      %v4252 = vpop.f32.mrb[0].mxu0
      %v4253 = vpop.f32.mrb[0].mxu0
      %4254 = vdwg.mxu0
      %4255 = vmatprep.subr.bf16.mxu0 0
      %4256 = vmatpush1.bf16.msra.mxu0 %v4212
      %4257 = vmatprep.subr.bf16.mxu0 0
      %4258 = vmatpush1.bf16.msra.mxu0 0
      %4259 = vmatprep.subr.bf16.mxu0 0
      %4260 = vmatpush1.bf16.msra.mxu0 0
      %4261 = vmatprep.subr.bf16.mxu0 0
      %4262 = vmatpush1.bf16.msra.mxu0 0
      %4263 = vmatprep.subr.bf16.mxu0 0
      %4264 = vmatpush1.bf16.msra.mxu0 0
      %4265 = vmatprep.subr.bf16.mxu0 0
      %4266 = vmatpush1.bf16.msra.mxu0 0
      %4267 = vmatprep.subr.bf16.mxu0 0
      %4268 = vmatpush1.bf16.msra.mxu0 0
      %4269 = vmatprep.subr.bf16.mxu0 0
      %4270 = vmatpush1.bf16.msra.mxu0 0
      %4271 = vmatprep.subr.bf16.mxu0 0
      %4272 = vmatpush1.bf16.msra.mxu0 0
      %4273 = vmatprep.subr.bf16.mxu0 0
      %4274 = vmatpush1.bf16.msra.mxu0 0
      %4275 = vmatprep.subr.bf16.mxu0 0
      %4276 = vmatpush1.bf16.msra.mxu0 0
      %4277 = vmatprep.subr.bf16.mxu0 0
      %4278 = vmatpush1.bf16.msra.mxu0 0
      %4279 = vmatprep.subr.bf16.mxu0 0
      %4280 = vmatpush1.bf16.msra.mxu0 0
      %4281 = vmatprep.subr.bf16.mxu0 0
      %4282 = vmatpush1.bf16.msra.mxu0 0
      %4283 = vmatprep.subr.bf16.mxu0 0
      %4284 = vmatpush1.bf16.msra.mxu0 0
      %4285 = vmatprep.subr.bf16.mxu0 0
      %4286 = vmatpush1.bf16.msra.mxu0 0
      %4287 = vmatprep.mubr.bf16.mxu0 0
      %4288 = vmatmul.mubr.bf16.gmra.mrb[0].mxu0 %v4203
      %v4289 = vpop.f32.mrb[0].mxu0
      %v4290 = vadd.f32 0.0, %v4289
      %v4291 = vpop.f32.mrb[0].mxu0
      %v4292 = vpop.f32.mrb[0].mxu0
      %v4293 = vpop.f32.mrb[0].mxu0
      %4294 = vdwg.mxu0
      %v4295 = vadd.f32 %v4189, %v4249
      %v4296 = vadd.f32 %v4190, %v4251
      %v4297 = vadd.f32 %v4191, %v4290
      %s4298 = scalar_lea.vmem %s5, 28
      %v4299 = vld [vmem:[%s4298] sm:$0xf]
      %4300 = vrot.lane.b32.xlu0 %v3571, 91
      %v4301 = vpop.permute.xlu0 %4300
      %4302 = vrot.lane.b32.xlu0 %v3572, 91
      %v4303 = vpop.permute.xlu0 %4302
      %4304 = vrot.lane.b32.xlu0 %v3573, 91
      %v4305 = vpop.permute.xlu0 %4304
      %v4306 = vsel %vm1205, %v4301, %v4303
      %v4307 = vsel %vm1205, %v4303, %v4305
      %v4309 = vsel %vm1625, %v4299, 0
      %v4312 = vsel %vm1629, %v4306, 0
      %v4315 = vsel %vm1629, %v4307, 0
      %v4318 = vsel %vm1629, %v4305, 0
      %4320 = vmatprep.subr.bf16.mxu0 %v4315
      %4321 = vmatpush1.bf16.msra.mxu0 %v4312
      %4322 = vmatprep.subr.bf16.mxu0 0
      %4323 = vmatpush1.bf16.msra.mxu0 0
      %4324 = vmatprep.subr.bf16.mxu0 0
      %4325 = vmatpush1.bf16.msra.mxu0 0
      %4326 = vmatprep.subr.bf16.mxu0 0
      %4327 = vmatpush1.bf16.msra.mxu0 0
      %4328 = vmatprep.subr.bf16.mxu0 0
      %4329 = vmatpush1.bf16.msra.mxu0 0
      %4330 = vmatprep.subr.bf16.mxu0 0
      %4331 = vmatpush1.bf16.msra.mxu0 0
      %4332 = vmatprep.subr.bf16.mxu0 0
      %4333 = vmatpush1.bf16.msra.mxu0 0
      %4334 = vmatprep.subr.bf16.mxu0 0
      %4335 = vmatpush1.bf16.msra.mxu0 0
      %4336 = vmatprep.subr.bf16.mxu0 0
      %4337 = vmatpush1.bf16.msra.mxu0 0
      %4338 = vmatprep.subr.bf16.mxu0 0
      %4339 = vmatpush1.bf16.msra.mxu0 0
      %4340 = vmatprep.subr.bf16.mxu0 0
      %4341 = vmatpush1.bf16.msra.mxu0 0
      %4342 = vmatprep.subr.bf16.mxu0 0
      %4343 = vmatpush1.bf16.msra.mxu0 0
      %4344 = vmatprep.subr.bf16.mxu0 0
      %4345 = vmatpush1.bf16.msra.mxu0 0
      %4346 = vmatprep.subr.bf16.mxu0 0
      %4347 = vmatpush1.bf16.msra.mxu0 0
      %4348 = vmatprep.subr.bf16.mxu0 0
      %4349 = vmatpush1.bf16.msra.mxu0 0
      %4350 = vmatprep.subr.bf16.mxu0 0
      %4351 = vmatpush1.bf16.msra.mxu0 0
      %4352 = vmatprep.mubr.bf16.mxu0 0
      %4353 = vmatmul.mubr.bf16.gmra.mrb[0].mxu0 %v4309
      %v4354 = vpop.f32.mrb[0].mxu0
      %v4355 = vadd.f32 0.0, %v4354
      %v4356 = vpop.f32.mrb[0].mxu0
      %v4357 = vadd.f32 0.0, %v4356
      %v4358 = vpop.f32.mrb[0].mxu0
      %v4359 = vpop.f32.mrb[0].mxu0
      %4360 = vdwg.mxu0
      %4361 = vmatprep.subr.bf16.mxu0 0
      %4362 = vmatpush1.bf16.msra.mxu0 %v4318
      %4363 = vmatprep.subr.bf16.mxu0 0
      %4364 = vmatpush1.bf16.msra.mxu0 0
      %4365 = vmatprep.subr.bf16.mxu0 0
      %4366 = vmatpush1.bf16.msra.mxu0 0
      %4367 = vmatprep.subr.bf16.mxu0 0
      %4368 = vmatpush1.bf16.msra.mxu0 0
      %4369 = vmatprep.subr.bf16.mxu0 0
      %4370 = vmatpush1.bf16.msra.mxu0 0
      %4371 = vmatprep.subr.bf16.mxu0 0
      %4372 = vmatpush1.bf16.msra.mxu0 0
      %4373 = vmatprep.subr.bf16.mxu0 0
      %4374 = vmatpush1.bf16.msra.mxu0 0
      %4375 = vmatprep.subr.bf16.mxu0 0
      %4376 = vmatpush1.bf16.msra.mxu0 0
      %4377 = vmatprep.subr.bf16.mxu0 0
      %4378 = vmatpush1.bf16.msra.mxu0 0
      %4379 = vmatprep.subr.bf16.mxu0 0
      %4380 = vmatpush1.bf16.msra.mxu0 0
      %4381 = vmatprep.subr.bf16.mxu0 0
      %4382 = vmatpush1.bf16.msra.mxu0 0
      %4383 = vmatprep.subr.bf16.mxu0 0
      %4384 = vmatpush1.bf16.msra.mxu0 0
      %4385 = vmatprep.subr.bf16.mxu0 0
      %4386 = vmatpush1.bf16.msra.mxu0 0
      %4387 = vmatprep.subr.bf16.mxu0 0
      %4388 = vmatpush1.bf16.msra.mxu0 0
      %4389 = vmatprep.subr.bf16.mxu0 0
      %4390 = vmatpush1.bf16.msra.mxu0 0
      %4391 = vmatprep.subr.bf16.mxu0 0
      %4392 = vmatpush1.bf16.msra.mxu0 0
      %4393 = vmatprep.mubr.bf16.mxu0 0
      %4394 = vmatmul.mubr.bf16.gmra.mrb[0].mxu0 %v4309
      %v4395 = vpop.f32.mrb[0].mxu0
      %v4396 = vadd.f32 0.0, %v4395
      %v4397 = vpop.f32.mrb[0].mxu0
      %v4398 = vpop.f32.mrb[0].mxu0
      %v4399 = vpop.f32.mrb[0].mxu0
      %4400 = vdwg.mxu0
      %v4401 = vadd.f32 %v4295, %v4355
      %v4402 = vadd.f32 %v4296, %v4357
      %v4403 = vadd.f32 %v4297, %v4396
      %s4404 = scalar_lea.vmem %s5, 32
      %v4405 = vld [vmem:[%s4404] sm:$0xf]
      %4406 = vrot.lane.b32.xlu0 %v3571, 90
      %v4407 = vpop.permute.xlu0 %4406
      %4408 = vrot.lane.b32.xlu0 %v3572, 90
      %v4409 = vpop.permute.xlu0 %4408
      %4410 = vrot.lane.b32.xlu0 %v3573, 90
      %v4411 = vpop.permute.xlu0 %4410
      %v4412 = vsel %vm1330, %v4407, %v4409
      %v4413 = vsel %vm1330, %v4409, %v4411
      %v4415 = vsel %vm1625, %v4405, 0
      %v4418 = vsel %vm1629, %v4412, 0
      %v4421 = vsel %vm1629, %v4413, 0
      %v4424 = vsel %vm1629, %v4411, 0
      %4426 = vmatprep.subr.bf16.mxu0 %v4421
      %4427 = vmatpush1.bf16.msra.mxu0 %v4418
      %4428 = vmatprep.subr.bf16.mxu0 0
      %4429 = vmatpush1.bf16.msra.mxu0 0
      %4430 = vmatprep.subr.bf16.mxu0 0
      %4431 = vmatpush1.bf16.msra.mxu0 0
      %4432 = vmatprep.subr.bf16.mxu0 0
      %4433 = vmatpush1.bf16.msra.mxu0 0
      %4434 = vmatprep.subr.bf16.mxu0 0
      %4435 = vmatpush1.bf16.msra.mxu0 0
      %4436 = vmatprep.subr.bf16.mxu0 0
      %4437 = vmatpush1.bf16.msra.mxu0 0
      %4438 = vmatprep.subr.bf16.mxu0 0
      %4439 = vmatpush1.bf16.msra.mxu0 0
      %4440 = vmatprep.subr.bf16.mxu0 0
      %4441 = vmatpush1.bf16.msra.mxu0 0
      %4442 = vmatprep.subr.bf16.mxu0 0
      %4443 = vmatpush1.bf16.msra.mxu0 0
      %4444 = vmatprep.subr.bf16.mxu0 0
      %4445 = vmatpush1.bf16.msra.mxu0 0
      %4446 = vmatprep.subr.bf16.mxu0 0
      %4447 = vmatpush1.bf16.msra.mxu0 0
      %4448 = vmatprep.subr.bf16.mxu0 0
      %4449 = vmatpush1.bf16.msra.mxu0 0
      %4450 = vmatprep.subr.bf16.mxu0 0
      %4451 = vmatpush1.bf16.msra.mxu0 0
      %4452 = vmatprep.subr.bf16.mxu0 0
      %4453 = vmatpush1.bf16.msra.mxu0 0
      %4454 = vmatprep.subr.bf16.mxu0 0
      %4455 = vmatpush1.bf16.msra.mxu0 0
      %4456 = vmatprep.subr.bf16.mxu0 0
      %4457 = vmatpush1.bf16.msra.mxu0 0
      %4458 = vmatprep.mubr.bf16.mxu0 0
      %4459 = vmatmul.mubr.bf16.gmra.mrb[0].mxu0 %v4415
      %v4460 = vpop.f32.mrb[0].mxu0
      %v4461 = vadd.f32 0.0, %v4460
      %v4462 = vpop.f32.mrb[0].mxu0
      %v4463 = vadd.f32 0.0, %v4462
      %v4464 = vpop.f32.mrb[0].mxu0
      %v4465 = vpop.f32.mrb[0].mxu0
      %4466 = vdwg.mxu0
      %4467 = vmatprep.subr.bf16.mxu0 0
      %4468 = vmatpush1.bf16.msra.mxu0 %v4424
      %4469 = vmatprep.subr.bf16.mxu0 0
      %4470 = vmatpush1.bf16.msra.mxu0 0
      %4471 = vmatprep.subr.bf16.mxu0 0
      %4472 = vmatpush1.bf16.msra.mxu0 0
      %4473 = vmatprep.subr.bf16.mxu0 0
      %4474 = vmatpush1.bf16.msra.mxu0 0
      %4475 = vmatprep.subr.bf16.mxu0 0
      %4476 = vmatpush1.bf16.msra.mxu0 0
      %4477 = vmatprep.subr.bf16.mxu0 0
      %4478 = vmatpush1.bf16.msra.mxu0 0
      %4479 = vmatprep.subr.bf16.mxu0 0
      %4480 = vmatpush1.bf16.msra.mxu0 0
      %4481 = vmatprep.subr.bf16.mxu0 0
      %4482 = vmatpush1.bf16.msra.mxu0 0
      %4483 = vmatprep.subr.bf16.mxu0 0
      %4484 = vmatpush1.bf16.msra.mxu0 0
      %4485 = vmatprep.subr.bf16.mxu0 0
      %4486 = vmatpush1.bf16.msra.mxu0 0
      %4487 = vmatprep.subr.bf16.mxu0 0
      %4488 = vmatpush1.bf16.msra.mxu0 0
      %4489 = vmatprep.subr.bf16.mxu0 0
      %4490 = vmatpush1.bf16.msra.mxu0 0
      %4491 = vmatprep.subr.bf16.mxu0 0
      %4492 = vmatpush1.bf16.msra.mxu0 0
      %4493 = vmatprep.subr.bf16.mxu0 0
      %4494 = vmatpush1.bf16.msra.mxu0 0
      %4495 = vmatprep.subr.bf16.mxu0 0
      %4496 = vmatpush1.bf16.msra.mxu0 0
      %4497 = vmatprep.subr.bf16.mxu0 0
      %4498 = vmatpush1.bf16.msra.mxu0 0
      %4499 = vmatprep.mubr.bf16.mxu0 0
      %4500 = vmatmul.mubr.bf16.gmra.mrb[0].mxu0 %v4415
      %v4501 = vpop.f32.mrb[0].mxu0
      %v4502 = vadd.f32 0.0, %v4501
      %v4503 = vpop.f32.mrb[0].mxu0
      %v4504 = vpop.f32.mrb[0].mxu0
      %v4505 = vpop.f32.mrb[0].mxu0
      %4506 = vdwg.mxu0
      %v4507 = vadd.f32 %v4401, %v4461
      %v4508 = vadd.f32 %v4402, %v4463
      %v4509 = vadd.f32 %v4403, %v4502
      %4511 = vset.pattern.permute.xlu0 4
      %4512 = vperm.xlu0 %4511, %v3560
      %v4513 = vpop.permute.xlu0 %4512
      %v4515 = vmul.f32 %v4507, %v4513
      %v4516 = vmul.f32 %v4508, %v4513
      %v4517 = vmul.f32 %v4509, %v4513
      %4518 = vset.pattern.permute.xlu0 5
      %4519 = vperm.xlu0 %4518, %v3560
      %v4520 = vpop.permute.xlu0 %4519
      %v4522 = vadd.f32 %v4515, %v4520
      %v4523 = vadd.f32 %v4516, %v4520
      %v4524 = vadd.f32 %v4517, %v4520
      %v4525 = vmax.f32 %v4522, 0.0
      %v4526 = vmax.f32 %v4523, 0.0
      %v4527 = vmax.f32 %v4524, 0.0
      %v4528 = vmul.f32 %v4525, %v1451
      %v4529 = vmul.f32 %v4526, %v1455
      %v4530 = vmul.f32 %v4527, %v1459
      %4532 = vrot.lane.b32.xlu0 %v4528, 109
      %v4533 = vpop.permute.xlu0 %4532
      %vm4535 = vcmask 130048
      %4536 = vst.msk [vmem:[%s325] sm:$0xff] %vm4535, %v4533
      %4537 = vrot.lane.b32.xlu0 %v4528, 107
      %v4538 = vpop.permute.xlu0 %4537
      %vm4540 = vcmask 261248
      %4541 = vst.msk [vmem:[%s325] sm:$0xff] %vm4540, %v4538
      %4542 = vrot.lane.b32.xlu0 %v4528, 105
      %v4543 = vpop.permute.xlu0 %4542
      %vm4545 = vcmask 392448
      %4546 = vst.msk [vmem:[%s325] sm:$0xff] %vm4545, %v4543
      %4547 = vrot.lane.b32.xlu0 %v4528, 103
      %v4548 = vpop.permute.xlu0 %4547
      %vm4550 = vcmask 523648
      %4551 = vst.msk [vmem:[%s325] sm:$0xff] %vm4550, %v4548
      %4552 = vrot.lane.b32.xlu0 %v4528, 101
      %v4553 = vpop.permute.xlu0 %4552
      %vm4555 = vcmask 654848
      %4556 = vst.msk [vmem:[%s325] sm:$0xff] %vm4555, %v4553
      %4557 = vrot.lane.b32.xlu0 %v4528, 99
      %v4558 = vpop.permute.xlu0 %4557
      %vm4560 = vcmask 786048
      %4561 = vst.msk [vmem:[%s325] sm:$0xff] %vm4560, %v4558
      %4563 = vrot.lane.b32.xlu0 %v4528, 97
      %v4564 = vpop.permute.xlu0 %4563
      %4565 = vrot.lane.b32.xlu0 %v4529, 97
      %v4566 = vpop.permute.xlu0 %4565
      %vm4567 = vcmask 793600
      %v4568 = vsel %vm4567, %v4564, %v4566
      %vm4570 = vcmask 917248
      %4571 = vst.msk [vmem:[%s325] sm:$0xff] %vm4570, %v4568
      %4572 = vrot.lane.b32.xlu0 %v4529, 95
      %v4573 = vpop.permute.xlu0 %4572
      %vm4575 = vcmask 1048448
      %4576 = vst.msk [vmem:[%s325] sm:$0xff] %vm4575, %v4573
      %4577 = vrot.lane.b32.xlu0 %v4529, 93
      %v4578 = vpop.permute.xlu0 %4577
      %4580 = vst.msk [vmem:[%s325 + $0x8] sm:$0xff] %vm4535, %v4578
      %4581 = vrot.lane.b32.xlu0 %v4529, 91
      %v4582 = vpop.permute.xlu0 %4581
      %4584 = vst.msk [vmem:[%s325 + $0x8] sm:$0xff] %vm4540, %v4582
      %4585 = vrot.lane.b32.xlu0 %v4529, 89
      %v4586 = vpop.permute.xlu0 %4585
      %4588 = vst.msk [vmem:[%s325 + $0x8] sm:$0xff] %vm4545, %v4586
      %4589 = vrot.lane.b32.xlu0 %v4529, 87
      %v4590 = vpop.permute.xlu0 %4589
      %4592 = vst.msk [vmem:[%s325 + $0x8] sm:$0xff] %vm4550, %v4590
      %4593 = vrot.lane.b32.xlu0 %v4529, 85
      %v4594 = vpop.permute.xlu0 %4593
      %4596 = vst.msk [vmem:[%s325 + $0x8] sm:$0xff] %vm4555, %v4594
      %4598 = vrot.lane.b32.xlu0 %v4529, 83
      %v4599 = vpop.permute.xlu0 %4598
      %4600 = vrot.lane.b32.xlu0 %v4530, 83
      %v4601 = vpop.permute.xlu0 %4600
      %vm4602 = vcmask 678912
      %v4603 = vsel %vm4602, %v4599, %v4601
      %4605 = vst.msk [vmem:[%s325 + $0x8] sm:$0xff] %vm4560, %v4603
      %4606 = vrot.lane.b32.xlu0 %v4530, 81
      %v4607 = vpop.permute.xlu0 %4606
      %4609 = vst.msk [vmem:[%s325 + $0x8] sm:$0xff] %vm4570, %v4607
      %4610 = vrot.lane.b32.xlu0 %v4530, 79
      %v4611 = vpop.permute.xlu0 %4610
      %4613 = vst.msk [vmem:[%s325 + $0x8] sm:$0xff] %vm4575, %v4611
      %p4614 = scmp.lt.s32.totalorder %s19, 1
      %s4615 = scalar_select %p4614, %s19, 1
      %s4616 = smul.addr %s4615, 2
      %s4617 = smul.addr %s4616, 8
      %s4618 = scalar_lea.vmem %s8, %s4617
      // Predicated region
      $region53: #{upblock2d_forward.1} parent=51 // pred_check
        %p4619 = pneg %p215
      $region54: #{upblock2d_forward.1} parent=51 // pred_check_branch
        %4621 = sbr.rel (%p4619) target = $region56
      $region55: #{upblock2d_forward.1} parent=51 // pred_region
        _
      $region56: #{upblock2d_forward.1} parent=51 // pred_fallthru
        _
    $region52: #{upblock2d_forward.1} parent=5 // pred_fallthru
      _
    %p4622 = scmp.le.s32.totalorder 2, %s14
    // Predicated region
    $region57: #{upblock2d_forward.1} parent=5 // pred_check
      %p4623 = pneg %p4622
    $region58: #{upblock2d_forward.1} parent=5 // pred_check_branch
      %4625 = sbr.rel (%p4623) target = $region60
    $region59: #{upblock2d_forward.1} parent=5 // pred_region
      %s4626 = ssub.s32 %s14, 2
      // Predicated region
      $region61: #{upblock2d_forward.1} parent=59 // pred_check
        %p4627 = pneg %p221
      $region62: #{upblock2d_forward.1} parent=59 // pred_check_branch
        %4629 = sbr.rel (%p4627) target = $region64
      $region63: #{upblock2d_forward.1} parent=59 // pred_region
        %p4630 = scmp.lt.s32.totalorder %s20, 1
        %s4631 = scalar_select %p4630, %s20, 1
        %s4632 = smul.addr %s4631, 2
        %s4633 = smul.addr %s4632, 8
        %s4634 = scalar_lea.vmem %s8, %s4633
      $region64: #{upblock2d_forward.1} parent=59 // pred_fallthru
        _
    $region60: #{upblock2d_forward.1} parent=5 // pred_fallthru
      _
  $region6: #{upblock2d_forward.1} parent=0 // loop_footer
    %s18 = sadd.s32 1, %s14
  $region7: #{upblock2d_forward.1} parent=0 // loop_footer_branch
    %13 = sbr.rel target = $region3
  $region8: #{upblock2d_forward.1} parent=0 // loop_exit
    _

</llo_original>
